<compile_context>
chip_gen: v5e
topology: v5e:2x2
jax: 0.10.0
libtpu: 0.0.40
codegen_flags: <defaults>
</compile_context>

<pallas_src>
import numpy as np
import jax
import jax.numpy as jnp
from jax import lax
from jax.experimental import pallas as pl
from jax.experimental.pallas import tpu as pltpu

ALPHA = 0.25      # focal hyperparameter
GAMMA = 0.5       # focal hyperparameter
BLANK = 0         # blank symbol index
NEG = -1.0e30     # finite stand-in for -inf (avoids inf-inf NaNs in log-space DP)
S_PAD = 128       # extended-target axis padded to a full lane width (max target len 63)
B_TILE = 8        # batch tile = sublane width
T_TILE = 8        # time tile streamed per grid step


def _focal_ctc_kernel(lp_ref, oh_ref, skip_ref, fin_ref, inlen_ref,
                      out_ref, alpha_ref, emit_ref):
    """One (batch-tile, time-tile) step of the CTC forward (alpha) DP.

    lp_ref:    [T_TILE, B, C]   log-softmax probabilities for this time tile
    oh_ref:    [B, S_PAD, C]    bf16 one-hot of blank-interleaved extended targets
    skip_ref:  [B, S_PAD]       1.0 where the s-2 transition is allowed
    fin_ref:   [B, S_PAD]       1.0 at the two valid terminal positions (2L, 2L-1)
    inlen_ref: [B, 1] int32     input lengths
    out_ref:   [B, 1] f32       per-sample -log p(target)  (written on last time tile)
    alpha_ref: [B, S_PAD] f32   resident DP state (scratch)
    emit_ref:  [T_TILE, B, S_PAD] f32 emission scores for this tile (scratch)
    """
    t_prog = pl.program_id(1)
    n_t = pl.num_programs(1)
    t_tile = lp_ref.shape[0]
    B, S = alpha_ref.shape

    # ---- Emission gather on the MXU (once per time tile, off the serial path) ----
    #   emit[t, b, s] = log_probs[t, b, ext_target[b, s]]
    oh = oh_ref[...].astype(jnp.float32)                       # bf16 0/1 -> f32
    emit_ref[...] = jnp.einsum("tbc,bsc->tbs", lp_ref[...], oh,
                               preferred_element_type=jnp.float32)

    # ---- Masks hoisted out of the recurrence (additive, computed once per tile) ----
    pos = lax.broadcasted_iota(jnp.int32, (B, S), 1)           # lane index along S
    mask1 = jnp.where(pos >= 1, 0.0, NEG)                      # s-1 transition valid
    # host guarantees skip[:, :2] == 0, so skip alone encodes the s-2 rule
    mask2 = jnp.where(skip_ref[...] > 0.5, 0.0, NEG)
    inlen_b = jnp.broadcast_to(inlen_ref[...], (B, S))         # int32 [B, S]

    # ---- t == 0: only extended positions 0 (blank) and 1 (first label) reachable ----
    @pl.when(t_prog == 0)
    def _():
        alpha_ref[...] = jnp.where(pos <= 1, emit_ref[0], NEG)

    t0 = t_prog * t_tile

    def step(t, alpha):
        a1 = pltpu.roll(alpha, shift=1, axis=1) + mask1        # from s-1
        a2 = pltpu.roll(alpha, shift=2, axis=1) + mask2        # from s-2 (skip)
        m = jnp.maximum(jnp.maximum(alpha, a1), a2)
        lse = m + jnp.log(jnp.exp(alpha - m) + jnp.exp(a1 - m) + jnp.exp(a2 - m))
        new_alpha = lse + emit_ref[t]
        gt = t0 + t
        # skip the (already initialized) global t == 0 step and freeze samples whose
        # input sequence has ended (t >= input_length)
        ok = jnp.logical_and(gt >= 1, gt < inlen_b)
        return jnp.where(ok, new_alpha, alpha)

    alpha_ref[...] = lax.fori_loop(0, t_tile, step, alpha_ref[...], unroll=True)

    # ---- Last time tile: reduce the two terminal DP cells to -log p(target) ----
    @pl.when(t_prog == n_t - 1)
    def _():
        fin = jnp.where(fin_ref[...] > 0.5, alpha_ref[...], NEG)       # [B, S]
        m = jnp.max(fin, axis=1, keepdims=True)                        # [B, 1]
        logp = m + jnp.log(jnp.sum(jnp.exp(fin - m), axis=1, keepdims=True))
        out_ref[...] = -logp


def _ctc_neg_logp_pallas(log_probs, oh, skip, fin, inlen, *, t_tile=T_TILE):
    """Per-sample -log p(target) for a batch already padded to a multiple of B_TILE."""
    T, B, C = log_probs.shape
    S = oh.shape[1]
    grid = (B // B_TILE, pl.cdiv(T, t_tile))
    out = pl.pallas_call(
        _focal_ctc_kernel,
        out_shape=jax.ShapeDtypeStruct((B, 1), jnp.float32),
        grid_spec=pltpu.PrefetchScalarGridSpec(
            num_scalar_prefetch=0,
            grid=grid,
            in_specs=[
                # log_probs stream through VMEM, one [t_tile, B_TILE, C] block per step
                pl.BlockSpec((t_tile, B_TILE, C), lambda b, t: (t, b, 0)),
                # per-batch-tile constants: resident across the whole time axis
                pl.BlockSpec((B_TILE, S, C), lambda b, t: (b, 0, 0)),
                pl.BlockSpec((B_TILE, S), lambda b, t: (b, 0)),
                pl.BlockSpec((B_TILE, S), lambda b, t: (b, 0)),
                pl.BlockSpec((B_TILE, 1), lambda b, t: (b, 0)),
            ],
            out_specs=pl.BlockSpec((B_TILE, 1), lambda b, t: (b, 0)),
            scratch_shapes=[
                pltpu.VMEM((B_TILE, S), jnp.float32),          # alpha DP state
                pltpu.VMEM((t_tile, B_TILE, S), jnp.float32),  # per-tile emissions
            ]),
        compiler_params=pltpu.CompilerParams(
            dimension_semantics=("parallel", "arbitrary"),
            vmem_limit_bytes=64 * 1024 * 1024),
    )(log_probs, oh, skip, fin, inlen)
    return out[:, 0]


def build_ctc_aux(targets, target_lengths, num_classes, blank, b_pad):
    """Host-side index prep: extended (blank-interleaved) targets as a bf16 one-hot,
    skip-transition mask and terminal-position mask, padded to S_PAD lanes and b_pad
    batch rows (padded rows get a trivial, finite problem that is discarded later)."""
    targets = np.asarray(targets)
    B = len(target_lengths)
    oh = np.zeros((b_pad, S_PAD, num_classes), np.float32)
    skip = np.zeros((b_pad, S_PAD), np.float32)
    fin = np.zeros((b_pad, S_PAD), np.float32)
    off = 0
    for b in range(B):
        L = int(target_lengths[b])
        assert L >= 1, "empty targets are not supported"
        assert 2 * L + 1 <= S_PAD, f"target length {L} exceeds S_PAD={S_PAD} capacity"
        tgt = targets[off:off + L]
        off += L
        ext = np.full((S_PAD,), blank, np.int64)
        ext[1:2 * L:2] = tgt
        oh[b, np.arange(S_PAD), ext] = 1.0
        for s in range(2, 2 * L + 1):
            if ext[s] != blank and ext[s] != ext[s - 2]:
                skip[b, s] = 1.0
        fin[b, 2 * L] = 1.0
        fin[b, 2 * L - 1] = 1.0
    # padded (dead) batch rows: all-blank targets, terminal at positions 0/1
    for b in range(B, b_pad):
        oh[b, :, blank] = 1.0
        fin[b, 0] = 1.0
        fin[b, 1] = 1.0
    return (jnp.asarray(oh, jnp.bfloat16), jnp.asarray(skip), jnp.asarray(fin))


def focal_ctc_loss(log_probs, targets, input_lengths, target_lengths,
                   alpha=ALPHA, gamma=GAMMA, blank=BLANK, t_tile=T_TILE):
    """Focal CTC loss matching torch FocalCTCLoss.forward (reduction='mean')."""
    log_probs = jnp.asarray(log_probs, jnp.float32)
    T, B, C = log_probs.shape
    b_pad = ((B + B_TILE - 1) // B_TILE) * B_TILE

    oh, skip, fin = build_ctc_aux(np.asarray(targets), target_lengths, C, blank, b_pad)

    inlen_np = np.ones((b_pad, 1), np.int32)
    inlen_np[:B, 0] = np.asarray(input_lengths, np.int32)
    inlen = jnp.asarray(inlen_np)

    lp = jnp.zeros((T, b_pad, C), jnp.float32).at[:, :B, :].set(log_probs)

    neg_logp = _ctc_neg_logp_pallas(lp, oh, skip, fin, inlen, t_tile=t_tile)

    tgt_len = jnp.asarray(np.asarray(target_lengths, np.float32))
    per_sample = neg_logp[:B] / tgt_len                 # CTC 'mean': /target_len
    ctc = jnp.mean(per_sample)                          # then mean over batch
    # clamp: 1-exp(-ctc) can round slightly negative for tiny ctc
    focal = alpha * jnp.maximum(1.0 - jnp.exp(-ctc), 0.0) ** gamma * ctc
    return focal


def reference_focal_ctc(log_probs, targets, input_lengths, target_lengths,
                        alpha=ALPHA, gamma=GAMMA, blank=BLANK):
    """Pure-numpy reference (same math as torch FocalCTCLoss forward)."""
    log_probs = np.asarray(log_probs, np.float64)
    targets = np.asarray(targets)
    T, B, C = log_probs.shape
    losses = []
    off = 0
    for b in range(B):
        L = int(target_lengths[b])
        tgt = targets[off:off + L]
        off += L
        S = 2 * L + 1
        ext = np.full(S, blank, np.int64)
        ext[1::2] = tgt
        a = np.full(S, -np.inf)
        a[0] = log_probs[0, b, blank]
        a[1] = log_probs[0, b, ext[1]]
        for t in range(1, int(input_lengths[b])):
            new = np.full(S, -np.inf)
            for s in range(S):
                cands = [a[s]]
                if s >= 1:
                    cands.append(a[s - 1])
                if s >= 2 and ext[s] != blank and ext[s] != ext[s - 2]:
                    cands.append(a[s - 2])
                m = max(cands)
                if np.isfinite(m):
                    new[s] = m + np.log(sum(np.exp(c - m) for c in cands)) \
                             + log_probs[t, b, ext[s]]
            a = new
        m = max(a[S - 1], a[S - 2])
        lse = m + np.log(np.exp(a[S - 1] - m) + np.exp(a[S - 2] - m))
        losses.append(-lse / L)
    ctc = float(np.mean(losses))
    return alpha * max(1.0 - np.exp(-ctc), 0.0) ** gamma * ctc


if __name__ == "__main__":
    # Small deterministic example: seq=16, batch=2, classes=8, blank=0.
    T, B, C = 16, 2, 8
    input_lengths = (16, 12)
    target_lengths = (4, 3)

    key = jax.random.PRNGKey(0)
    k1, k2 = jax.random.split(key)
    logits = jax.random.normal(k1, (T, B, C), jnp.float32)
    log_probs = jax.nn.log_softmax(logits, axis=-1)
    targets = jax.random.randint(k2, (sum(target_lengths),), 1, C, jnp.int32)

    loss = focal_ctc_loss(log_probs, np.array(targets), input_lengths, target_lengths)
    loss = jax.block_until_ready(loss)

    ref = reference_focal_ctc(np.array(log_probs), np.array(targets),
                              input_lengths, target_lengths)
    assert np.isfinite(float(loss))
    np.testing.assert_allclose(float(loss), ref, rtol=1e-3, atol=1e-4)
    print("KERNEL_OK")
</pallas_src>

<mosaic_0001>
module attributes {stable_mosaic.version = 11 : i64} {
  func.func @_focal_ctc_kernel(%arg0: i32, %arg1: i32, %arg2: memref<8x8x8xf32, #tpu.memory_space<vmem>>, %arg3: memref<8x128x8xbf16, #tpu.memory_space<vmem>>, %arg4: memref<8x128xf32, #tpu.memory_space<vmem>>, %arg5: memref<8x128xf32, #tpu.memory_space<vmem>>, %arg6: memref<8x1xi32, #tpu.memory_space<vmem>>, %arg7: memref<8x1xf32, #tpu.memory_space<vmem>>, %arg8: memref<8x128xf32, #tpu.memory_space<vmem>>, %arg9: memref<8x8x128xf32, #tpu.memory_space<vmem>>) attributes {dimension_semantics = [#tpu.dimension_semantics<parallel>, #tpu.dimension_semantics<arbitrary>], iteration_bounds = array<i64: 1, 2>, scalar_prefetch = 0 : i64, scratch_operands = 2 : i64, tpu.core_type = #tpu.core_type<tc>, window_params = [{transform_indices = @transform_0, window_bounds = array<i64: 8, 8, 8>}, {transform_indices = @transform_1, window_bounds = array<i64: 8, 128, 8>}, {transform_indices = @transform_2, window_bounds = array<i64: 8, 128>}, {transform_indices = @transform_3, window_bounds = array<i64: 8, 128>}, {transform_indices = @transform_4, window_bounds = array<i64: 8, 1>}, {transform_indices = @transform_5, window_bounds = array<i64: 8, 1>}]} {
    %c0 = arith.constant 0 : index
    %c0_0 = arith.constant 0 : index
    %c0_1 = arith.constant 0 : index
    %0 = vector.load %arg3[%c0, %c0_0, %c0_1] : memref<8x128x8xbf16, #tpu.memory_space<vmem>>, vector<8x128x8xbf16>
    %1 = arith.extf %0 : vector<8x128x8xbf16> to vector<8x128x8xf32>
    %c0_2 = arith.constant 0 : index
    %c0_3 = arith.constant 0 : index
    %c0_4 = arith.constant 0 : index
    %2 = vector.load %arg2[%c0_2, %c0_3, %c0_4] : memref<8x8x8xf32, #tpu.memory_space<vmem>>, vector<8x8x8xf32>
    "tpu.trace_start"() <{level = 10 : i32, message = "tbc,bsc->tbs"}> : () -> ()
    %cst = arith.constant dense<0.000000e+00> : vector<8x128x8xf32>
    %3 = tpu.matmul %1, %2, %cst {dimension_numbers = #tpu.dot_dimension_numbers<[2], [2], [1], [0], [0, 0, 0, 1, 1, 0], [0], [1]>} : vector<8x128x8xf32>, vector<8x8x8xf32>, vector<8x128x8xf32> -> vector<8x128x8xf32>
    %4 = tpu.transpose %3, [2, 0, 1] : vector<8x128x8xf32> -> vector<8x8x128xf32>
    "tpu.trace_stop"() : () -> ()
    %c0_5 = arith.constant 0 : index
    %c0_6 = arith.constant 0 : index
    %c0_7 = arith.constant 0 : index
    %5 = vector.load %arg9[%c0_5, %c0_6, %c0_7] : memref<8x8x128xf32, #tpu.memory_space<vmem>>, vector<8x8x128xf32>
    tpu.vector_store %arg9[%c0_5, %c0_6, %c0_7], %4 {strides = array<i32>} : memref<8x8x128xf32, #tpu.memory_space<vmem>>, vector<8x8x128xf32>,
    %6 = tpu.iota {dimensions = array<i32: 1>} : vector<8x128xi32>
    %c1_i32 = arith.constant 1 : i32
    %7 = vector.broadcast %c1_i32 : i32 to vector<8x128xi32>
    %8 = arith.cmpi sge, %6, %7 : vector<8x128xi32>
    %cst_8 = arith.constant 0.000000e+00 : f32
    %cst_9 = arith.constant -1.000000e+30 : f32
    %9 = vector.broadcast %cst_8 : f32 to vector<8x128xf32>
    %10 = vector.broadcast %cst_9 : f32 to vector<8x128xf32>
    %11 = arith.select %8, %9, %10 : vector<8x128xi1>, vector<8x128xf32>
    %c0_10 = arith.constant 0 : index
    %c0_11 = arith.constant 0 : index
    %12 = vector.load %arg4[%c0_10, %c0_11] : memref<8x128xf32, #tpu.memory_space<vmem>>, vector<8x128xf32>
    %cst_12 = arith.constant 5.000000e-01 : f32
    %13 = vector.broadcast %cst_12 : f32 to vector<8x128xf32>
    %14 = arith.cmpf ogt, %12, %13 : vector<8x128xf32>
    %cst_13 = arith.constant 0.000000e+00 : f32
    %cst_14 = arith.constant -1.000000e+30 : f32
    %15 = vector.broadcast %cst_13 : f32 to vector<8x128xf32>
    %16 = vector.broadcast %cst_14 : f32 to vector<8x128xf32>
    %17 = arith.select %14, %15, %16 : vector<8x128xi1>, vector<8x128xf32>
    %c0_15 = arith.constant 0 : index
    %c0_16 = arith.constant 0 : index
    %18 = vector.load %arg6[%c0_15, %c0_16] : memref<8x1xi32, #tpu.memory_space<vmem>>, vector<8x1xi32>
    %19 = vector.shape_cast %18 : vector<8x1xi32> to vector<8x1xi32>
    %20 = vector.broadcast %19 : vector<8x1xi32> to vector<8x128xi32>
    %c0_i32 = arith.constant 0 : i32
    %21 = arith.cmpi eq, %arg1, %c0_i32 : i32
    %22 = arith.extui %21 : i1 to i32
    %c0_i32_17 = arith.constant 0 : i32
    %23 = arith.cmpi ne, %22, %c0_i32_17 : i32
    scf.if %23 {
      %c1_i32_67 = arith.constant 1 : i32
      %246 = vector.broadcast %c1_i32_67 : i32 to vector<8x128xi32>
      %247 = arith.cmpi sle, %6, %246 : vector<8x128xi32>
      %c0_68 = arith.constant 0 : index
      %c0_69 = arith.constant 0 : index
      %c0_70 = arith.constant 0 : index
      %248 = vector.load %arg9[%c0_68, %c0_69, %c0_70] : memref<8x8x128xf32, #tpu.memory_space<vmem>>, vector<1x8x128xf32>
      %249 = vector.shape_cast %248 : vector<1x8x128xf32> to vector<8x128xf32>
      %cst_71 = arith.constant -1.000000e+30 : f32
      %250 = vector.broadcast %cst_71 : f32 to vector<8x128xf32>
      %251 = arith.select %247, %249, %250 : vector<8x128xi1>, vector<8x128xf32>
      %c0_72 = arith.constant 0 : index
      %c0_73 = arith.constant 0 : index
      %252 = vector.load %arg8[%c0_72, %c0_73] : memref<8x128xf32, #tpu.memory_space<vmem>>, vector<8x128xf32>
      tpu.vector_store %arg8[%c0_72, %c0_73], %251 {strides = array<i32>} : memref<8x128xf32, #tpu.memory_space<vmem>>, vector<8x128xf32>,
    } else {
    }
    %c8_i32 = arith.constant 8 : i32
    %24 = arith.muli %arg1, %c8_i32 : i32
    %c0_18 = arith.constant 0 : index
    %c0_19 = arith.constant 0 : index
    %25 = vector.load %arg8[%c0_18, %c0_19] : memref<8x128xf32, #tpu.memory_space<vmem>>, vector<8x128xf32>
    %c0_i32_20 = arith.constant 0 : i32
    %c1_i32_21 = arith.constant 1 : i32
    %26 = tpu.dynamic_rotate %25 by %c1_i32_21 dim 1 : vector<8x128xf32>, i32 -> vector<8x128xf32>
    %27 = arith.addf %26, %11 : vector<8x128xf32>
    %c2_i32 = arith.constant 2 : i32
    %28 = tpu.dynamic_rotate %25 by %c2_i32 dim 1 : vector<8x128xf32>, i32 -> vector<8x128xf32>
    %29 = arith.addf %28, %17 : vector<8x128xf32>
    %30 = arith.maximumf %25, %27 : vector<8x128xf32>
    %31 = arith.maximumf %30, %29 : vector<8x128xf32>
    %32 = arith.subf %25, %31 : vector<8x128xf32>
    %33 = math.exp %32 : vector<8x128xf32>
    %34 = arith.subf %27, %31 : vector<8x128xf32>
    %35 = math.exp %34 : vector<8x128xf32>
    %36 = arith.addf %33, %35 : vector<8x128xf32>
    %37 = arith.subf %29, %31 : vector<8x128xf32>
    %38 = math.exp %37 : vector<8x128xf32>
    %39 = arith.addf %36, %38 : vector<8x128xf32>
    %40 = math.log %39 : vector<8x128xf32>
    %41 = arith.addf %31, %40 : vector<8x128xf32>
    %42 = arith.index_cast %c0_i32_20 : i32 to index
    %c0_22 = arith.constant 0 : index
    %c0_23 = arith.constant 0 : index
    %43 = vector.load %arg9[%42, %c0_22, %c0_23] : memref<8x8x128xf32, #tpu.memory_space<vmem>>, vector<1x8x128xf32>
    %44 = vector.shape_cast %43 : vector<1x8x128xf32> to vector<8x128xf32>
    %45 = arith.addf %41, %44 : vector<8x128xf32>
    %46 = arith.addi %24, %c0_i32_20 : i32
    %c1_i32_24 = arith.constant 1 : i32
    %47 = arith.cmpi sge, %46, %c1_i32_24 : i32
    %48 = vector.broadcast %46 : i32 to vector<8x128xi32>
    %49 = arith.cmpi slt, %48, %20 : vector<8x128xi32>
    %50 = vector.broadcast %47 : i1 to vector<8x128xi1>
    %51 = arith.andi %50, %49 : vector<8x128xi1>
    %52 = arith.select %51, %45, %25 : vector<8x128xi1>, vector<8x128xf32>
    %c1_i32_25 = arith.constant 1 : i32
    %c1_i32_26 = arith.constant 1 : i32
    %53 = tpu.dynamic_rotate %52 by %c1_i32_26 dim 1 : vector<8x128xf32>, i32 -> vector<8x128xf32>
    %54 = arith.addf %53, %11 : vector<8x128xf32>
    %c2_i32_27 = arith.constant 2 : i32
    %55 = tpu.dynamic_rotate %52 by %c2_i32_27 dim 1 : vector<8x128xf32>, i32 -> vector<8x128xf32>
    %56 = arith.addf %55, %17 : vector<8x128xf32>
    %57 = arith.maximumf %52, %54 : vector<8x128xf32>
    %58 = arith.maximumf %57, %56 : vector<8x128xf32>
    %59 = arith.subf %52, %58 : vector<8x128xf32>
    %60 = math.exp %59 : vector<8x128xf32>
    %61 = arith.subf %54, %58 : vector<8x128xf32>
    %62 = math.exp %61 : vector<8x128xf32>
    %63 = arith.addf %60, %62 : vector<8x128xf32>
    %64 = arith.subf %56, %58 : vector<8x128xf32>
    %65 = math.exp %64 : vector<8x128xf32>
    %66 = arith.addf %63, %65 : vector<8x128xf32>
    %67 = math.log %66 : vector<8x128xf32>
    %68 = arith.addf %58, %67 : vector<8x128xf32>
    %69 = arith.index_cast %c1_i32_25 : i32 to index
    %c0_28 = arith.constant 0 : index
    %c0_29 = arith.constant 0 : index
    %70 = vector.load %arg9[%69, %c0_28, %c0_29] : memref<8x8x128xf32, #tpu.memory_space<vmem>>, vector<1x8x128xf32>
    %71 = vector.shape_cast %70 : vector<1x8x128xf32> to vector<8x128xf32>
    %72 = arith.addf %68, %71 : vector<8x128xf32>
    %73 = arith.addi %24, %c1_i32_25 : i32
    %c1_i32_30 = arith.constant 1 : i32
    %74 = arith.cmpi sge, %73, %c1_i32_30 : i32
    %75 = vector.broadcast %73 : i32 to vector<8x128xi32>
    %76 = arith.cmpi slt, %75, %20 : vector<8x128xi32>
    %77 = vector.broadcast %74 : i1 to vector<8x128xi1>
    %78 = arith.andi %77, %76 : vector<8x128xi1>
    %79 = arith.select %78, %72, %52 : vector<8x128xi1>, vector<8x128xf32>
    %c2_i32_31 = arith.constant 2 : i32
    %c1_i32_32 = arith.constant 1 : i32
    %80 = tpu.dynamic_rotate %79 by %c1_i32_32 dim 1 : vector<8x128xf32>, i32 -> vector<8x128xf32>
    %81 = arith.addf %80, %11 : vector<8x128xf32>
    %c2_i32_33 = arith.constant 2 : i32
    %82 = tpu.dynamic_rotate %79 by %c2_i32_33 dim 1 : vector<8x128xf32>, i32 -> vector<8x128xf32>
    %83 = arith.addf %82, %17 : vector<8x128xf32>
    %84 = arith.maximumf %79, %81 : vector<8x128xf32>
    %85 = arith.maximumf %84, %83 : vector<8x128xf32>
    %86 = arith.subf %79, %85 : vector<8x128xf32>
    %87 = math.exp %86 : vector<8x128xf32>
    %88 = arith.subf %81, %85 : vector<8x128xf32>
    %89 = math.exp %88 : vector<8x128xf32>
    %90 = arith.addf %87, %89 : vector<8x128xf32>
    %91 = arith.subf %83, %85 : vector<8x128xf32>
    %92 = math.exp %91 : vector<8x128xf32>
    %93 = arith.addf %90, %92 : vector<8x128xf32>
    %94 = math.log %93 : vector<8x128xf32>
    %95 = arith.addf %85, %94 : vector<8x128xf32>
    %96 = arith.index_cast %c2_i32_31 : i32 to index
    %c0_34 = arith.constant 0 : index
    %c0_35 = arith.constant 0 : index
    %97 = vector.load %arg9[%96, %c0_34, %c0_35] : memref<8x8x128xf32, #tpu.memory_space<vmem>>, vector<1x8x128xf32>
    %98 = vector.shape_cast %97 : vector<1x8x128xf32> to vector<8x128xf32>
    %99 = arith.addf %95, %98 : vector<8x128xf32>
    %100 = arith.addi %24, %c2_i32_31 : i32
    %c1_i32_36 = arith.constant 1 : i32
    %101 = arith.cmpi sge, %100, %c1_i32_36 : i32
    %102 = vector.broadcast %100 : i32 to vector<8x128xi32>
    %103 = arith.cmpi slt, %102, %20 : vector<8x128xi32>
    %104 = vector.broadcast %101 : i1 to vector<8x128xi1>
    %105 = arith.andi %104, %103 : vector<8x128xi1>
    %106 = arith.select %105, %99, %79 : vector<8x128xi1>, vector<8x128xf32>
    %c3_i32 = arith.constant 3 : i32
    %c1_i32_37 = arith.constant 1 : i32
    %107 = tpu.dynamic_rotate %106 by %c1_i32_37 dim 1 : vector<8x128xf32>, i32 -> vector<8x128xf32>
    %108 = arith.addf %107, %11 : vector<8x128xf32>
    %c2_i32_38 = arith.constant 2 : i32
    %109 = tpu.dynamic_rotate %106 by %c2_i32_38 dim 1 : vector<8x128xf32>, i32 -> vector<8x128xf32>
    %110 = arith.addf %109, %17 : vector<8x128xf32>
    %111 = arith.maximumf %106, %108 : vector<8x128xf32>
    %112 = arith.maximumf %111, %110 : vector<8x128xf32>
    %113 = arith.subf %106, %112 : vector<8x128xf32>
    %114 = math.exp %113 : vector<8x128xf32>
    %115 = arith.subf %108, %112 : vector<8x128xf32>
    %116 = math.exp %115 : vector<8x128xf32>
    %117 = arith.addf %114, %116 : vector<8x128xf32>
    %118 = arith.subf %110, %112 : vector<8x128xf32>
    %119 = math.exp %118 : vector<8x128xf32>
    %120 = arith.addf %117, %119 : vector<8x128xf32>
    %121 = math.log %120 : vector<8x128xf32>
    %122 = arith.addf %112, %121 : vector<8x128xf32>
    %123 = arith.index_cast %c3_i32 : i32 to index
    %c0_39 = arith.constant 0 : index
    %c0_40 = arith.constant 0 : index
    %124 = vector.load %arg9[%123, %c0_39, %c0_40] : memref<8x8x128xf32, #tpu.memory_space<vmem>>, vector<1x8x128xf32>
    %125 = vector.shape_cast %124 : vector<1x8x128xf32> to vector<8x128xf32>
    %126 = arith.addf %122, %125 : vector<8x128xf32>
    %127 = arith.addi %24, %c3_i32 : i32
    %c1_i32_41 = arith.constant 1 : i32
    %128 = arith.cmpi sge, %127, %c1_i32_41 : i32
    %129 = vector.broadcast %127 : i32 to vector<8x128xi32>
    %130 = arith.cmpi slt, %129, %20 : vector<8x128xi32>
    %131 = vector.broadcast %128 : i1 to vector<8x128xi1>
    %132 = arith.andi %131, %130 : vector<8x128xi1>
    %133 = arith.select %132, %126, %106 : vector<8x128xi1>, vector<8x128xf32>
    %c4_i32 = arith.constant 4 : i32
    %c1_i32_42 = arith.constant 1 : i32
    %134 = tpu.dynamic_rotate %133 by %c1_i32_42 dim 1 : vector<8x128xf32>, i32 -> vector<8x128xf32>
    %135 = arith.addf %134, %11 : vector<8x128xf32>
    %c2_i32_43 = arith.constant 2 : i32
    %136 = tpu.dynamic_rotate %133 by %c2_i32_43 dim 1 : vector<8x128xf32>, i32 -> vector<8x128xf32>
    %137 = arith.addf %136, %17 : vector<8x128xf32>
    %138 = arith.maximumf %133, %135 : vector<8x128xf32>
    %139 = arith.maximumf %138, %137 : vector<8x128xf32>
    %140 = arith.subf %133, %139 : vector<8x128xf32>
    %141 = math.exp %140 : vector<8x128xf32>
    %142 = arith.subf %135, %139 : vector<8x128xf32>
    %143 = math.exp %142 : vector<8x128xf32>
    %144 = arith.addf %141, %143 : vector<8x128xf32>
    %145 = arith.subf %137, %139 : vector<8x128xf32>
    %146 = math.exp %145 : vector<8x128xf32>
    %147 = arith.addf %144, %146 : vector<8x128xf32>
    %148 = math.log %147 : vector<8x128xf32>
    %149 = arith.addf %139, %148 : vector<8x128xf32>
    %150 = arith.index_cast %c4_i32 : i32 to index
    %c0_44 = arith.constant 0 : index
    %c0_45 = arith.constant 0 : index
    %151 = vector.load %arg9[%150, %c0_44, %c0_45] : memref<8x8x128xf32, #tpu.memory_space<vmem>>, vector<1x8x128xf32>
    %152 = vector.shape_cast %151 : vector<1x8x128xf32> to vector<8x128xf32>
    %153 = arith.addf %149, %152 : vector<8x128xf32>
    %154 = arith.addi %24, %c4_i32 : i32
    %c1_i32_46 = arith.constant 1 : i32
    %155 = arith.cmpi sge, %154, %c1_i32_46 : i32
    %156 = vector.broadcast %154 : i32 to vector<8x128xi32>
    %157 = arith.cmpi slt, %156, %20 : vector<8x128xi32>
    %158 = vector.broadcast %155 : i1 to vector<8x128xi1>
    %159 = arith.andi %158, %157 : vector<8x128xi1>
    %160 = arith.select %159, %153, %133 : vector<8x128xi1>, vector<8x128xf32>
    %c5_i32 = arith.constant 5 : i32
    %c1_i32_47 = arith.constant 1 : i32
    %161 = tpu.dynamic_rotate %160 by %c1_i32_47 dim 1 : vector<8x128xf32>, i32 -> vector<8x128xf32>
    %162 = arith.addf %161, %11 : vector<8x128xf32>
    %c2_i32_48 = arith.constant 2 : i32
    %163 = tpu.dynamic_rotate %160 by %c2_i32_48 dim 1 : vector<8x128xf32>, i32 -> vector<8x128xf32>
    %164 = arith.addf %163, %17 : vector<8x128xf32>
    %165 = arith.maximumf %160, %162 : vector<8x128xf32>
    %166 = arith.maximumf %165, %164 : vector<8x128xf32>
    %167 = arith.subf %160, %166 : vector<8x128xf32>
    %168 = math.exp %167 : vector<8x128xf32>
    %169 = arith.subf %162, %166 : vector<8x128xf32>
    %170 = math.exp %169 : vector<8x128xf32>
    %171 = arith.addf %168, %170 : vector<8x128xf32>
    %172 = arith.subf %164, %166 : vector<8x128xf32>
    %173 = math.exp %172 : vector<8x128xf32>
    %174 = arith.addf %171, %173 : vector<8x128xf32>
    %175 = math.log %174 : vector<8x128xf32>
    %176 = arith.addf %166, %175 : vector<8x128xf32>
    %177 = arith.index_cast %c5_i32 : i32 to index
    %c0_49 = arith.constant 0 : index
    %c0_50 = arith.constant 0 : index
    %178 = vector.load %arg9[%177, %c0_49, %c0_50] : memref<8x8x128xf32, #tpu.memory_space<vmem>>, vector<1x8x128xf32>
    %179 = vector.shape_cast %178 : vector<1x8x128xf32> to vector<8x128xf32>
    %180 = arith.addf %176, %179 : vector<8x128xf32>
    %181 = arith.addi %24, %c5_i32 : i32
    %c1_i32_51 = arith.constant 1 : i32
    %182 = arith.cmpi sge, %181, %c1_i32_51 : i32
    %183 = vector.broadcast %181 : i32 to vector<8x128xi32>
    %184 = arith.cmpi slt, %183, %20 : vector<8x128xi32>
    %185 = vector.broadcast %182 : i1 to vector<8x128xi1>
    %186 = arith.andi %185, %184 : vector<8x128xi1>
    %187 = arith.select %186, %180, %160 : vector<8x128xi1>, vector<8x128xf32>
    %c6_i32 = arith.constant 6 : i32
    %c1_i32_52 = arith.constant 1 : i32
    %188 = tpu.dynamic_rotate %187 by %c1_i32_52 dim 1 : vector<8x128xf32>, i32 -> vector<8x128xf32>
    %189 = arith.addf %188, %11 : vector<8x128xf32>
    %c2_i32_53 = arith.constant 2 : i32
    %190 = tpu.dynamic_rotate %187 by %c2_i32_53 dim 1 : vector<8x128xf32>, i32 -> vector<8x128xf32>
    %191 = arith.addf %190, %17 : vector<8x128xf32>
    %192 = arith.maximumf %187, %189 : vector<8x128xf32>
    %193 = arith.maximumf %192, %191 : vector<8x128xf32>
    %194 = arith.subf %187, %193 : vector<8x128xf32>
    %195 = math.exp %194 : vector<8x128xf32>
    %196 = arith.subf %189, %193 : vector<8x128xf32>
    %197 = math.exp %196 : vector<8x128xf32>
    %198 = arith.addf %195, %197 : vector<8x128xf32>
    %199 = arith.subf %191, %193 : vector<8x128xf32>
    %200 = math.exp %199 : vector<8x128xf32>
    %201 = arith.addf %198, %200 : vector<8x128xf32>
    %202 = math.log %201 : vector<8x128xf32>
    %203 = arith.addf %193, %202 : vector<8x128xf32>
    %204 = arith.index_cast %c6_i32 : i32 to index
    %c0_54 = arith.constant 0 : index
    %c0_55 = arith.constant 0 : index
    %205 = vector.load %arg9[%204, %c0_54, %c0_55] : memref<8x8x128xf32, #tpu.memory_space<vmem>>, vector<1x8x128xf32>
    %206 = vector.shape_cast %205 : vector<1x8x128xf32> to vector<8x128xf32>
    %207 = arith.addf %203, %206 : vector<8x128xf32>
    %208 = arith.addi %24, %c6_i32 : i32
    %c1_i32_56 = arith.constant 1 : i32
    %209 = arith.cmpi sge, %208, %c1_i32_56 : i32
    %210 = vector.broadcast %208 : i32 to vector<8x128xi32>
    %211 = arith.cmpi slt, %210, %20 : vector<8x128xi32>
    %212 = vector.broadcast %209 : i1 to vector<8x128xi1>
    %213 = arith.andi %212, %211 : vector<8x128xi1>
    %214 = arith.select %213, %207, %187 : vector<8x128xi1>, vector<8x128xf32>
    %c7_i32 = arith.constant 7 : i32
    %c1_i32_57 = arith.constant 1 : i32
    %215 = tpu.dynamic_rotate %214 by %c1_i32_57 dim 1 : vector<8x128xf32>, i32 -> vector<8x128xf32>
    %216 = arith.addf %215, %11 : vector<8x128xf32>
    %c2_i32_58 = arith.constant 2 : i32
    %217 = tpu.dynamic_rotate %214 by %c2_i32_58 dim 1 : vector<8x128xf32>, i32 -> vector<8x128xf32>
    %218 = arith.addf %217, %17 : vector<8x128xf32>
    %219 = arith.maximumf %214, %216 : vector<8x128xf32>
    %220 = arith.maximumf %219, %218 : vector<8x128xf32>
    %221 = arith.subf %214, %220 : vector<8x128xf32>
    %222 = math.exp %221 : vector<8x128xf32>
    %223 = arith.subf %216, %220 : vector<8x128xf32>
    %224 = math.exp %223 : vector<8x128xf32>
    %225 = arith.addf %222, %224 : vector<8x128xf32>
    %226 = arith.subf %218, %220 : vector<8x128xf32>
    %227 = math.exp %226 : vector<8x128xf32>
    %228 = arith.addf %225, %227 : vector<8x128xf32>
    %229 = math.log %228 : vector<8x128xf32>
    %230 = arith.addf %220, %229 : vector<8x128xf32>
    %231 = arith.index_cast %c7_i32 : i32 to index
    %c0_59 = arith.constant 0 : index
    %c0_60 = arith.constant 0 : index
    %232 = vector.load %arg9[%231, %c0_59, %c0_60] : memref<8x8x128xf32, #tpu.memory_space<vmem>>, vector<1x8x128xf32>
    %233 = vector.shape_cast %232 : vector<1x8x128xf32> to vector<8x128xf32>
    %234 = arith.addf %230, %233 : vector<8x128xf32>
    %235 = arith.addi %24, %c7_i32 : i32
    %c1_i32_61 = arith.constant 1 : i32
    %236 = arith.cmpi sge, %235, %c1_i32_61 : i32
    %237 = vector.broadcast %235 : i32 to vector<8x128xi32>
    %238 = arith.cmpi slt, %237, %20 : vector<8x128xi32>
    %239 = vector.broadcast %236 : i1 to vector<8x128xi1>
    %240 = arith.andi %239, %238 : vector<8x128xi1>
    %241 = arith.select %240, %234, %214 : vector<8x128xi1>, vector<8x128xf32>
    %c8_i32_62 = arith.constant 8 : i32
    %c0_63 = arith.constant 0 : index
    %c0_64 = arith.constant 0 : index
    %242 = vector.load %arg8[%c0_63, %c0_64] : memref<8x128xf32, #tpu.memory_space<vmem>>, vector<8x128xf32>
    tpu.vector_store %arg8[%c0_63, %c0_64], %241 {strides = array<i32>} : memref<8x128xf32, #tpu.memory_space<vmem>>, vector<8x128xf32>,
    %c1_i32_65 = arith.constant 1 : i32
    %243 = arith.cmpi eq, %arg1, %c1_i32_65 : i32
    %244 = arith.extui %243 : i1 to i32
    %c0_i32_66 = arith.constant 0 : i32
    %245 = arith.cmpi ne, %244, %c0_i32_66 : i32
    scf.if %245 {
      %c0_67 = arith.constant 0 : index
      %c0_68 = arith.constant 0 : index
      %246 = vector.load %arg5[%c0_67, %c0_68] : memref<8x128xf32, #tpu.memory_space<vmem>>, vector<8x128xf32>
      %cst_69 = arith.constant 5.000000e-01 : f32
      %247 = vector.broadcast %cst_69 : f32 to vector<8x128xf32>
      %248 = arith.cmpf ogt, %246, %247 : vector<8x128xf32>
      %c0_70 = arith.constant 0 : index
      %c0_71 = arith.constant 0 : index
      %249 = vector.load %arg8[%c0_70, %c0_71] : memref<8x128xf32, #tpu.memory_space<vmem>>, vector<8x128xf32>
      %cst_72 = arith.constant -1.000000e+30 : f32
      %250 = vector.broadcast %cst_72 : f32 to vector<8x128xf32>
      %251 = arith.select %248, %249, %250 : vector<8x128xi1>, vector<8x128xf32>
      %cst_73 = arith.constant dense<0xFF800000> : vector<8xf32>
      %252 = vector.multi_reduction <maximumf>, %251, %cst_73 [1] : vector<8x128xf32> to vector<8xf32>
      %253 = vector.shape_cast %252 : vector<8xf32> to vector<8x1xf32>
      %254 = vector.broadcast %253 : vector<8x1xf32> to vector<8x128xf32>
      %255 = arith.subf %251, %254 : vector<8x128xf32>
      %256 = math.exp %255 : vector<8x128xf32>
      %cst_74 = arith.constant dense<0.000000e+00> : vector<8xf32>
      %257 = vector.multi_reduction <add>, %256, %cst_74 [1] : vector<8x128xf32> to vector<8xf32>
      %258 = vector.shape_cast %257 : vector<8xf32> to vector<8x1xf32>
      %259 = math.log %258 : vector<8x1xf32>
      %260 = arith.addf %253, %259 : vector<8x1xf32>
      %cst_75 = arith.constant 0.000000e+00 : f32
      %261 = vector.broadcast %cst_75 : f32 to vector<8x1xf32>
      %262 = arith.subf %261, %260 : vector<8x1xf32>
      %c0_76 = arith.constant 0 : index
      %c0_77 = arith.constant 0 : index
      %263 = vector.load %arg7[%c0_76, %c0_77] : memref<8x1xf32, #tpu.memory_space<vmem>>, vector<8x1xf32>
      tpu.vector_store %arg7[%c0_76, %c0_77], %262 {strides = array<i32>} : memref<8x1xf32, #tpu.memory_space<vmem>>, vector<8x1xf32>,
    } else {
    }
    return
  }
  func.func @transform_0(%arg0: i32, %arg1: i32) -> (i32, i32, i32) {
    %c0_i32 = arith.constant 0 : i32
    %c0_i32_0 = arith.constant 0 : i32
    return %arg1, %arg0, %c0_i32 : i32, i32, i32
  }
  func.func @transform_1(%arg0: i32, %arg1: i32) -> (i32, i32, i32) {
    %c0_i32 = arith.constant 0 : i32
    %c0_i32_0 = arith.constant 0 : i32
    %c0_i32_1 = arith.constant 0 : i32
    return %arg0, %c0_i32, %c0_i32_0 : i32, i32, i32
  }
  func.func @transform_2(%arg0: i32, %arg1: i32) -> (i32, i32) {
    %c0_i32 = arith.constant 0 : i32
    %c0_i32_0 = arith.constant 0 : i32
    return %arg0, %c0_i32 : i32, i32
  }
  func.func @transform_3(%arg0: i32, %arg1: i32) -> (i32, i32) {
    %c0_i32 = arith.constant 0 : i32
    %c0_i32_0 = arith.constant 0 : i32
    return %arg0, %c0_i32 : i32, i32
  }
  func.func @transform_4(%arg0: i32, %arg1: i32) -> (i32, i32) {
    %c0_i32 = arith.constant 0 : i32
    %c0_i32_0 = arith.constant 0 : i32
    return %arg0, %c0_i32 : i32, i32
  }
  func.func @transform_5(%arg0: i32, %arg1: i32) -> (i32, i32) {
    %c0_i32 = arith.constant 0 : i32
    %c0_i32_0 = arith.constant 0 : i32
    return %arg0, %c0_i32 : i32, i32
  }
}

</mosaic_0001>

<llo_original>
// kernel: tpu_custom_call.1
$region0: #{tpu_custom_call.1}
  #allocation0 [shape = 'u32[]', space=smem, size = 0x4, offset = 0x4, fixed_abs, tag = 'smem constant byte address 0x4 - core index']
  #allocation1 [shape = 'u32[72,128]{1,0:T(1,128)}', space=vmem, size = 0x9000, scoped, tag = 'internal scratch']
  #allocation2 [shape = 'f32[8,128]{1,0:T(8,128)}', space=vmem, size = 0x1000, scoped, tag = 'scratch operand']
  #allocation3 [shape = 'f32[8,8,128]{2,1,0:T(8,128)}', space=vmem, size = 0x8000, scoped, tag = 'scratch operand']
  %s0 = inlined_call_operand.vmem [shape: f32[16,8,8], index: 0, kind: input, shape index: {}]
  %s1 = inlined_call_operand.vmem [shape: bf16[8,128,8], index: 1, kind: input, shape index: {}]
  %s2 = inlined_call_operand.vmem [shape: f32[8,128], index: 2, kind: input, shape index: {}]
  %s3 = inlined_call_operand.vmem [shape: f32[8,128], index: 3, kind: input, shape index: {}]
  %s4 = inlined_call_operand.vmem [shape: s32[8,1], index: 4, kind: input, shape index: {}]
  %s5 = inlined_call_operand.vmem [shape: f32[8,1], index: 5, kind: output, shape index: {}]
  %s6 = sld [smem:[#allocation0]]
  $region61: #{tpu_custom_call.1} parent=0
    _
  %s8 = ssub.s32 1, %s6
  %s9 = scalar_select 0, %s8, %s6
  loop: start=0, step=1, limit=4
  $region2: #{tpu_custom_call.1} parent=0 // loop_pre_header
    _
  $region3: #{tpu_custom_call.1} parent=0 // loop_header
    %s11 = sphi 0, %s15
    %p12 = scmp.ge.s32.totalorder %s11, 4
    %s18 = sphi 0, %s30
    %s19 = sphi 0, %s26
    %s20 = sphi 0, %s18
    %s21 = sphi 0, %s19
    %s22 = sphi 0, %s20
    %s23 = sphi 0, %s21
    %s35 = sphi 0, %s37
    %s38 = sphi 0, %s35
    %s39 = sphi 0, %s38
    %s55 = sphi 0, %s39
    %s61 = sphi 0, %s63
    %s64 = sphi 0, %s61
    %s65 = sphi 0, %s64
    %s81 = sphi 0, %s65
    %s87 = sphi 0, %s89
    %s90 = sphi 0, %s87
    %s91 = sphi 0, %s90
    %s107 = sphi 0, %s91
    %s113 = sphi 0, %s115
    %s116 = sphi 0, %s113
    %s117 = sphi 0, %s116
    %s133 = sphi 0, %s117
    %s139 = sphi 0, %s141
    %s142 = sphi 0, %s139
    %s143 = sphi 0, %s142
    %s159 = sphi 0, %s143
    %s165 = sphi 0, %s167
    %s168 = sphi 0, %s165
    %s169 = sphi 0, %s168
    %s185 = sphi 0, %s169
  $region4: #{tpu_custom_call.1} parent=0 // loop_header_branch
    %14 = sbr.rel (%p12) target = $region8
  $region5: #{tpu_custom_call.1} parent=0 // loop_body
    %s16 = ssub.s32 %s11, 1
    %s17 = ssub.s32 %s11, 2
    %s24 = sadd.s32 1, %s19
    %p25 = scmp.ge.s32.totalorder %s24, 2
    %s26 = scalar_select %p25, 0, %s24
    %s27 = sadd.s32 1, %s18
    %s28 = scalar_select %p25, %s27, %s18
    %p29 = scmp.ge.s32.totalorder %s28, 1
    %s30 = scalar_select %p29, 0, %s28
    %s31 = ssub.s32 %s19, %s26
    %s32 = ssub.s32 %s18, %s30
    %s33 = sor.u32 %s31, %s32
    %p34 = scmp.eq.s32.totalorder %s33, 0
    %s36 = sadd.s32 %s35, 1
    %s37 = scalar_select %p34, %s35, %s36
    %p40 = pneg %p34
    %p41 = scmp.eq.s32.totalorder %s11, 1
    %p42 = por %p40, %p41
    %p43 = scmp.ne.s32.totalorder %s35, %s38
    %p44 = scmp.eq.s32.totalorder %s11, 0
    %p45 = por %p43, %p44
    %p46 = scmp.ne.s32.totalorder %s35, %s38
    %p47 = scmp.eq.s32.totalorder %s16, 1
    %p48 = por %p46, %p47
    %p49 = scmp.ne.s32.totalorder %s38, %s39
    %p50 = scmp.eq.s32.totalorder %s16, 0
    %p51 = por %p49, %p50
    %p52 = scmp.ne.s32.totalorder %s38, %s39
    %p53 = scmp.eq.s32.totalorder %s17, 1
    %p54 = por %p52, %p53
    %p56 = scmp.ne.s32.totalorder %s39, %s55
    %p57 = scmp.eq.s32.totalorder %s17, 0
    %p58 = por %p56, %p57
    %s59 = ssub.s32 %s18, %s30
    %p60 = scmp.eq.s32.totalorder %s59, 0
    %s62 = sadd.s32 %s61, 1
    %s63 = scalar_select %p60, %s61, %s62
    %p66 = pneg %p60
    %p67 = scmp.eq.s32.totalorder %s11, 1
    %p68 = por %p66, %p67
    %p69 = scmp.ne.s32.totalorder %s61, %s64
    %p70 = scmp.eq.s32.totalorder %s11, 0
    %p71 = por %p69, %p70
    %p72 = scmp.ne.s32.totalorder %s61, %s64
    %p73 = scmp.eq.s32.totalorder %s16, 1
    %p74 = por %p72, %p73
    %p75 = scmp.ne.s32.totalorder %s64, %s65
    %p76 = scmp.eq.s32.totalorder %s16, 0
    %p77 = por %p75, %p76
    %p78 = scmp.ne.s32.totalorder %s64, %s65
    %p79 = scmp.eq.s32.totalorder %s17, 1
    %p80 = por %p78, %p79
    %p82 = scmp.ne.s32.totalorder %s65, %s81
    %p83 = scmp.eq.s32.totalorder %s17, 0
    %p84 = por %p82, %p83
    %s85 = ssub.s32 %s18, %s30
    %p86 = scmp.eq.s32.totalorder %s85, 0
    %s88 = sadd.s32 %s87, 1
    %s89 = scalar_select %p86, %s87, %s88
    %p92 = pneg %p86
    %p93 = scmp.eq.s32.totalorder %s11, 1
    %p94 = por %p92, %p93
    %p95 = scmp.ne.s32.totalorder %s87, %s90
    %p96 = scmp.eq.s32.totalorder %s11, 0
    %p97 = por %p95, %p96
    %p98 = scmp.ne.s32.totalorder %s87, %s90
    %p99 = scmp.eq.s32.totalorder %s16, 1
    %p100 = por %p98, %p99
    %p101 = scmp.ne.s32.totalorder %s90, %s91
    %p102 = scmp.eq.s32.totalorder %s16, 0
    %p103 = por %p101, %p102
    %p104 = scmp.ne.s32.totalorder %s90, %s91
    %p105 = scmp.eq.s32.totalorder %s17, 1
    %p106 = por %p104, %p105
    %p108 = scmp.ne.s32.totalorder %s91, %s107
    %p109 = scmp.eq.s32.totalorder %s17, 0
    %p110 = por %p108, %p109
    %s111 = ssub.s32 %s18, %s30
    %p112 = scmp.eq.s32.totalorder %s111, 0
    %s114 = sadd.s32 %s113, 1
    %s115 = scalar_select %p112, %s113, %s114
    %p118 = pneg %p112
    %p119 = scmp.eq.s32.totalorder %s11, 1
    %p120 = por %p118, %p119
    %p121 = scmp.ne.s32.totalorder %s113, %s116
    %p122 = scmp.eq.s32.totalorder %s11, 0
    %p123 = por %p121, %p122
    %p124 = scmp.ne.s32.totalorder %s113, %s116
    %p125 = scmp.eq.s32.totalorder %s16, 1
    %p126 = por %p124, %p125
    %p127 = scmp.ne.s32.totalorder %s116, %s117
    %p128 = scmp.eq.s32.totalorder %s16, 0
    %p129 = por %p127, %p128
    %p130 = scmp.ne.s32.totalorder %s116, %s117
    %p131 = scmp.eq.s32.totalorder %s17, 1
    %p132 = por %p130, %p131
    %p134 = scmp.ne.s32.totalorder %s117, %s133
    %p135 = scmp.eq.s32.totalorder %s17, 0
    %p136 = por %p134, %p135
    %s137 = ssub.s32 %s18, %s30
    %p138 = scmp.eq.s32.totalorder %s137, 0
    %s140 = sadd.s32 %s139, 1
    %s141 = scalar_select %p138, %s139, %s140
    %p144 = pneg %p138
    %p145 = scmp.eq.s32.totalorder %s11, 1
    %p146 = por %p144, %p145
    %p147 = scmp.ne.s32.totalorder %s139, %s142
    %p148 = scmp.eq.s32.totalorder %s11, 0
    %p149 = por %p147, %p148
    %p150 = scmp.ne.s32.totalorder %s139, %s142
    %p151 = scmp.eq.s32.totalorder %s16, 1
    %p152 = por %p150, %p151
    %p153 = scmp.ne.s32.totalorder %s142, %s143
    %p154 = scmp.eq.s32.totalorder %s16, 0
    %p155 = por %p153, %p154
    %p156 = scmp.ne.s32.totalorder %s142, %s143
    %p157 = scmp.eq.s32.totalorder %s17, 1
    %p158 = por %p156, %p157
    %p160 = scmp.ne.s32.totalorder %s143, %s159
    %p161 = scmp.eq.s32.totalorder %s17, 0
    %p162 = por %p160, %p161
    %s163 = ssub.s32 %s18, %s30
    %p164 = scmp.eq.s32.totalorder %s163, 0
    %s166 = sadd.s32 %s165, 1
    %s167 = scalar_select %p164, %s165, %s166
    %p170 = pneg %p164
    %p171 = scmp.eq.s32.totalorder %s11, 1
    %p172 = por %p170, %p171
    %p173 = scmp.ne.s32.totalorder %s165, %s168
    %p174 = scmp.eq.s32.totalorder %s11, 0
    %p175 = por %p173, %p174
    %p176 = scmp.ne.s32.totalorder %s165, %s168
    %p177 = scmp.eq.s32.totalorder %s16, 1
    %p178 = por %p176, %p177
    %p179 = scmp.ne.s32.totalorder %s168, %s169
    %p180 = scmp.eq.s32.totalorder %s16, 0
    %p181 = por %p179, %p180
    %p182 = scmp.ne.s32.totalorder %s168, %s169
    %p183 = scmp.eq.s32.totalorder %s17, 1
    %p184 = por %p182, %p183
    %p186 = scmp.ne.s32.totalorder %s169, %s185
    %p187 = scmp.eq.s32.totalorder %s17, 0
    %p188 = por %p186, %p187
    %p189 = scmp.le.s32.totalorder 1, %s11
    %p190 = scmp.lt.s32.totalorder %s11, 3
    %p191 = pnand %p189, %p190
    %p192 = pneg %p191
    // Predicated region
    $region9: #{tpu_custom_call.1} parent=5 // pred_check
      _
    $region10: #{tpu_custom_call.1} parent=5 // pred_check_branch
      %194 = sbr.rel (%p191) target = $region12
    $region11: #{tpu_custom_call.1} parent=5 // pred_region
      %s195 = ssub.s32 %s11, 1
      // Predicated region
      $region13: #{tpu_custom_call.1} parent=11 // pred_check
        %p196 = pneg %p77
      $region14: #{tpu_custom_call.1} parent=11 // pred_check_branch
        %198 = sbr.rel (%p196) target = $region16
      $region15: #{tpu_custom_call.1} parent=11 // pred_region
        %s199 = smul.u32 8, %s20
        %p200 = scmp.lt.s32.totalorder %s199, 7
        %s201 = scalar_select %p200, %s199, 7
        %s202 = smul.addr %s201, 16
        %s203 = smul.addr %s202, 4
        %s204 = scalar_lea.vmem %s1, %s203
        %s205 = smul.u32 8, %s20
      $region16: #{tpu_custom_call.1} parent=11 // pred_fallthru
        _
      // Predicated region
      $region17: #{tpu_custom_call.1} parent=11 // pred_check
        %p206 = pneg %p103
      $region18: #{tpu_custom_call.1} parent=11 // pred_check_branch
        %208 = sbr.rel (%p206) target = $region20
      $region19: #{tpu_custom_call.1} parent=11 // pred_region
        %p209 = scmp.lt.s32.totalorder %s20, 0
        %s210 = scalar_select %p209, %s20, 0
        %s211 = smul.addr %s210, 8
        %s212 = scalar_lea.vmem %s2, %s211
      $region20: #{tpu_custom_call.1} parent=11 // pred_fallthru
        _
      // Predicated region
      $region21: #{tpu_custom_call.1} parent=11 // pred_check
        %p213 = pneg %p129
      $region22: #{tpu_custom_call.1} parent=11 // pred_check_branch
        %215 = sbr.rel (%p213) target = $region24
      $region23: #{tpu_custom_call.1} parent=11 // pred_region
        %p216 = scmp.lt.s32.totalorder %s20, 0
        %s217 = scalar_select %p216, %s20, 0
        %s218 = smul.addr %s217, 8
        %s219 = scalar_lea.vmem %s3, %s218
      $region24: #{tpu_custom_call.1} parent=11 // pred_fallthru
        _
      // Predicated region
      $region25: #{tpu_custom_call.1} parent=11 // pred_check
        %p220 = pneg %p155
      $region26: #{tpu_custom_call.1} parent=11 // pred_check_branch
        %222 = sbr.rel (%p220) target = $region28
      $region27: #{tpu_custom_call.1} parent=11 // pred_region
        %p223 = scmp.lt.s32.totalorder %s20, 0
        %s224 = scalar_select %p223, %s20, 0
        %s225 = smul.addr %s224, 8
        %s226 = scalar_lea.vmem %s4, %s225
      $region28: #{tpu_custom_call.1} parent=11 // pred_fallthru
        _
    $region12: #{tpu_custom_call.1} parent=5 // pred_fallthru
      _
    %p227 = scmp.lt.s32.totalorder %s11, 2
    // Predicated region
    $region29: #{tpu_custom_call.1} parent=5 // pred_check
      %p228 = pneg %p227
    $region30: #{tpu_custom_call.1} parent=5 // pred_check_branch
      %230 = sbr.rel (%p228) target = $region32
    $region31: #{tpu_custom_call.1} parent=5 // pred_region
      // Predicated region
      $region33: #{tpu_custom_call.1} parent=31 // pred_check
        %p231 = pneg %p45
      $region34: #{tpu_custom_call.1} parent=31 // pred_check_branch
        %233 = sbr.rel (%p231) target = $region36
      $region35: #{tpu_custom_call.1} parent=31 // pred_region
        %s234 = smul.u32 8, %s19
        %p235 = scmp.lt.s32.totalorder %s234, 15
        %s236 = scalar_select %p235, %s234, 15
        %p237 = scmp.lt.s32.totalorder %s18, 0
        %s238 = scalar_select %p237, %s18, 0
        %s239 = sadd.s32 %s238, %s236
        %s240 = smul.addr %s239, 8
        %s241 = scalar_lea.vmem %s0, %s240
        %s242 = smul.u32 8, %s19
      $region36: #{tpu_custom_call.1} parent=31 // pred_fallthru
        _
    $region32: #{tpu_custom_call.1} parent=5 // pred_fallthru
      _
    %p243 = scmp.le.s32.totalorder 1, %s11
    %p244 = scmp.lt.s32.totalorder %s11, 3
    %p245 = pnand %p243, %p244
    %p246 = pneg %p245
    // Predicated region
    $region37: #{tpu_custom_call.1} parent=5 // pred_check
      _
    $region38: #{tpu_custom_call.1} parent=5 // pred_check_branch
      %248 = sbr.rel (%p245) target = $region40
    $region39: #{tpu_custom_call.1} parent=5 // pred_region
      %s249 = ssub.s32 %s11, 1
      %s250 = smul.u32 8, %s21
      %p251 = scmp.lt.s32.totalorder %s250, 15
      %s252 = scalar_select %p251, %s250, 15
      %p253 = scmp.lt.s32.totalorder %s20, 0
      %s254 = scalar_select %p253, %s20, 0
      %s255 = sadd.s32 %s254, %s252
      %s256 = smul.addr %s255, 8
      %s257 = scalar_lea.vmem %s0, %s256
      %p258 = pneg %p51
      %p259 = pneg %p48
      %s260 = smul.u32 8, %s20
      %p261 = scmp.lt.s32.totalorder %s260, 7
      %s262 = scalar_select %p261, %s260, 7
      %s263 = smul.addr %s262, 16
      %s264 = smul.addr %s263, 4
      %s265 = scalar_lea.vmem %s1, %s264
      %p266 = pneg %p77
      %p267 = pneg %p74
      %p268 = scmp.lt.s32.totalorder %s20, 0
      %s269 = scalar_select %p268, %s20, 0
      %s270 = smul.addr %s269, 8
      %s271 = scalar_lea.vmem %s2, %s270
      %p272 = pneg %p103
      %p273 = pneg %p100
      %p274 = scmp.lt.s32.totalorder %s20, 0
      %s275 = scalar_select %p274, %s20, 0
      %s276 = smul.addr %s275, 8
      %s277 = scalar_lea.vmem %s3, %s276
      %p278 = pneg %p129
      %p279 = pneg %p126
      %p280 = scmp.lt.s32.totalorder %s20, 0
      %s281 = scalar_select %p280, %s20, 0
      %s282 = smul.addr %s281, 8
      %s283 = scalar_lea.vmem %s4, %s282
      %p284 = pneg %p155
      %p285 = pneg %p152
      %p286 = pneg %p181
      %p287 = pneg %p178
      %p288 = scmp.lt.s32.totalorder %s20, 0
      %s289 = scalar_select %p288, %s20, 0
      %s290 = smul.addr %s289, 8
      %s291 = scalar_lea.vmem %s5, %s290
      %s292 = smul.u32 8, %s21
      %p293 = scmp.lt.s32.totalorder %s292, 15
      %s294 = scalar_select %p293, %s292, 15
      %p295 = scmp.lt.s32.totalorder %s20, 0
      %s296 = scalar_select %p295, %s20, 0
      %s297 = sadd.s32 %s296, %s294
      %s298 = smul.addr %s297, 8
      %s299 = scalar_lea.vmem %s0, %s298
      %s300 = smul.u32 8, %s21
      %s301 = smul.u32 8, %s20
      %p302 = scmp.lt.s32.totalorder %s301, 7
      %s303 = scalar_select %p302, %s301, 7
      %s304 = smul.addr %s303, 16
      %s305 = smul.addr %s304, 4
      %s306 = scalar_lea.vmem %s1, %s305
      %s307 = smul.u32 8, %s20
      %p308 = scmp.lt.s32.totalorder %s20, 0
      %s309 = scalar_select %p308, %s20, 0
      %s310 = smul.addr %s309, 8
      %s311 = scalar_lea.vmem %s2, %s310
      %p312 = scmp.lt.s32.totalorder %s20, 0
      %s313 = scalar_select %p312, %s20, 0
      %s314 = smul.addr %s313, 8
      %s315 = scalar_lea.vmem %s3, %s314
      %p316 = scmp.lt.s32.totalorder %s20, 0
      %s317 = scalar_select %p316, %s20, 0
      %s318 = smul.addr %s317, 8
      %s319 = scalar_lea.vmem %s4, %s318
      %p320 = scmp.lt.s32.totalorder %s20, 0
      %s321 = scalar_select %p320, %s20, 0
      %s322 = smul.addr %s321, 8
      %s323 = scalar_lea.vmem %s5, %s322
      %v324 = vld [vmem:[%s306] sm:$0xf]
      %v325 = vld [vmem:[%s306 + $0x4] sm:$0xf]
      %v326 = vld [vmem:[%s306 + $0x8] sm:$0xf]
      %v327 = vld [vmem:[%s306 + $0xc] sm:$0xf]
      %v328 = vld [vmem:[%s306 + $0x10] sm:$0xf]
      %v329 = vld [vmem:[%s306 + $0x14] sm:$0xf]
      %v330 = vld [vmem:[%s306 + $0x18] sm:$0xf]
      %v331 = vld [vmem:[%s306 + $0x1c] sm:$0xf]
      %v332 = vld [vmem:[%s306 + $0x20] sm:$0xf]
      %v333 = vld [vmem:[%s306 + $0x24] sm:$0xf]
      %v334 = vld [vmem:[%s306 + $0x28] sm:$0xf]
      %v335 = vld [vmem:[%s306 + $0x2c] sm:$0xf]
      %v336 = vld [vmem:[%s306 + $0x30] sm:$0xf]
      %v337 = vld [vmem:[%s306 + $0x34] sm:$0xf]
      %v338 = vld [vmem:[%s306 + $0x38] sm:$0xf]
      %v339 = vld [vmem:[%s306 + $0x3c] sm:$0xf]
      %v340 = vld [vmem:[%s306 + $0x40] sm:$0xf]
      %v341 = vld [vmem:[%s306 + $0x44] sm:$0xf]
      %v342 = vld [vmem:[%s306 + $0x48] sm:$0xf]
      %v343 = vld [vmem:[%s306 + $0x4c] sm:$0xf]
      %v344 = vld [vmem:[%s306 + $0x50] sm:$0xf]
      %v345 = vld [vmem:[%s306 + $0x54] sm:$0xf]
      %v346 = vld [vmem:[%s306 + $0x58] sm:$0xf]
      %v347 = vld [vmem:[%s306 + $0x5c] sm:$0xf]
      %v348 = vld [vmem:[%s306 + $0x60] sm:$0xf]
      %v349 = vld [vmem:[%s306 + $0x64] sm:$0xf]
      %v350 = vld [vmem:[%s306 + $0x68] sm:$0xf]
      %v351 = vld [vmem:[%s306 + $0x6c] sm:$0xf]
      %v352 = vld [vmem:[%s306 + $0x70] sm:$0xf]
      %v353 = vld [vmem:[%s306 + $0x74] sm:$0xf]
      %v354 = vld [vmem:[%s306 + $0x78] sm:$0xf]
      %v355 = vld [vmem:[%s306 + $0x7c] sm:$0xf]
      %v356 = vld [vmem:[%s306 + $0x80] sm:$0xf]
      %v357 = vld [vmem:[%s306 + $0x84] sm:$0xf]
      %v358 = vld [vmem:[%s306 + $0x88] sm:$0xf]
      %v359 = vld [vmem:[%s306 + $0x8c] sm:$0xf]
      %v360 = vld [vmem:[%s306 + $0x90] sm:$0xf]
      %v361 = vld [vmem:[%s306 + $0x94] sm:$0xf]
      %v362 = vld [vmem:[%s306 + $0x98] sm:$0xf]
      %v363 = vld [vmem:[%s306 + $0x9c] sm:$0xf]
      %v364 = vld [vmem:[%s306 + $0xa0] sm:$0xf]
      %v365 = vld [vmem:[%s306 + $0xa4] sm:$0xf]
      %v366 = vld [vmem:[%s306 + $0xa8] sm:$0xf]
      %v367 = vld [vmem:[%s306 + $0xac] sm:$0xf]
      %v368 = vld [vmem:[%s306 + $0xb0] sm:$0xf]
      %v369 = vld [vmem:[%s306 + $0xb4] sm:$0xf]
      %v370 = vld [vmem:[%s306 + $0xb8] sm:$0xf]
      %v371 = vld [vmem:[%s306 + $0xbc] sm:$0xf]
      %v372 = vld [vmem:[%s306 + $0xc0] sm:$0xf]
      %v373 = vld [vmem:[%s306 + $0xc4] sm:$0xf]
      %v374 = vld [vmem:[%s306 + $0xc8] sm:$0xf]
      %v375 = vld [vmem:[%s306 + $0xcc] sm:$0xf]
      %v376 = vld [vmem:[%s306 + $0xd0] sm:$0xf]
      %v377 = vld [vmem:[%s306 + $0xd4] sm:$0xf]
      %v378 = vld [vmem:[%s306 + $0xd8] sm:$0xf]
      %v379 = vld [vmem:[%s306 + $0xdc] sm:$0xf]
      %v380 = vld [vmem:[%s306 + $0xe0] sm:$0xf]
      %v381 = vld [vmem:[%s306 + $0xe4] sm:$0xf]
      %v382 = vld [vmem:[%s306 + $0xe8] sm:$0xf]
      %v383 = vld [vmem:[%s306 + $0xec] sm:$0xf]
      %v384 = vld [vmem:[%s306 + $0xf0] sm:$0xf]
      %v385 = vld [vmem:[%s306 + $0xf4] sm:$0xf]
      %v386 = vld [vmem:[%s306 + $0xf8] sm:$0xf]
      %v387 = vld [vmem:[%s306 + $0xfc] sm:$0xf]
      %v388 = vld [vmem:[%s306 + $0x100] sm:$0xf]
      %v389 = vld [vmem:[%s306 + $0x104] sm:$0xf]
      %v390 = vld [vmem:[%s306 + $0x108] sm:$0xf]
      %v391 = vld [vmem:[%s306 + $0x10c] sm:$0xf]
      %v392 = vld [vmem:[%s306 + $0x110] sm:$0xf]
      %v393 = vld [vmem:[%s306 + $0x114] sm:$0xf]
      %v394 = vld [vmem:[%s306 + $0x118] sm:$0xf]
      %v395 = vld [vmem:[%s306 + $0x11c] sm:$0xf]
      %v396 = vld [vmem:[%s306 + $0x120] sm:$0xf]
      %v397 = vld [vmem:[%s306 + $0x124] sm:$0xf]
      %v398 = vld [vmem:[%s306 + $0x128] sm:$0xf]
      %v399 = vld [vmem:[%s306 + $0x12c] sm:$0xf]
      %v400 = vld [vmem:[%s306 + $0x130] sm:$0xf]
      %v401 = vld [vmem:[%s306 + $0x134] sm:$0xf]
      %v402 = vld [vmem:[%s306 + $0x138] sm:$0xf]
      %v403 = vld [vmem:[%s306 + $0x13c] sm:$0xf]
      %v404 = vld [vmem:[%s306 + $0x140] sm:$0xf]
      %v405 = vld [vmem:[%s306 + $0x144] sm:$0xf]
      %v406 = vld [vmem:[%s306 + $0x148] sm:$0xf]
      %v407 = vld [vmem:[%s306 + $0x14c] sm:$0xf]
      %v408 = vld [vmem:[%s306 + $0x150] sm:$0xf]
      %v409 = vld [vmem:[%s306 + $0x154] sm:$0xf]
      %v410 = vld [vmem:[%s306 + $0x158] sm:$0xf]
      %v411 = vld [vmem:[%s306 + $0x15c] sm:$0xf]
      %v412 = vld [vmem:[%s306 + $0x160] sm:$0xf]
      %v413 = vld [vmem:[%s306 + $0x164] sm:$0xf]
      %v414 = vld [vmem:[%s306 + $0x168] sm:$0xf]
      %v415 = vld [vmem:[%s306 + $0x16c] sm:$0xf]
      %v416 = vld [vmem:[%s306 + $0x170] sm:$0xf]
      %v417 = vld [vmem:[%s306 + $0x174] sm:$0xf]
      %v418 = vld [vmem:[%s306 + $0x178] sm:$0xf]
      %v419 = vld [vmem:[%s306 + $0x17c] sm:$0xf]
      %v420 = vld [vmem:[%s306 + $0x180] sm:$0xf]
      %v421 = vld [vmem:[%s306 + $0x184] sm:$0xf]
      %v422 = vld [vmem:[%s306 + $0x188] sm:$0xf]
      %v423 = vld [vmem:[%s306 + $0x18c] sm:$0xf]
      %v424 = vld [vmem:[%s306 + $0x190] sm:$0xf]
      %v425 = vld [vmem:[%s306 + $0x194] sm:$0xf]
      %v426 = vld [vmem:[%s306 + $0x198] sm:$0xf]
      %v427 = vld [vmem:[%s306 + $0x19c] sm:$0xf]
      %v428 = vld [vmem:[%s306 + $0x1a0] sm:$0xf]
      %v429 = vld [vmem:[%s306 + $0x1a4] sm:$0xf]
      %v430 = vld [vmem:[%s306 + $0x1a8] sm:$0xf]
      %v431 = vld [vmem:[%s306 + $0x1ac] sm:$0xf]
      %v432 = vld [vmem:[%s306 + $0x1b0] sm:$0xf]
      %v433 = vld [vmem:[%s306 + $0x1b4] sm:$0xf]
      %v434 = vld [vmem:[%s306 + $0x1b8] sm:$0xf]
      %v435 = vld [vmem:[%s306 + $0x1bc] sm:$0xf]
      %v436 = vld [vmem:[%s306 + $0x1c0] sm:$0xf]
      %v437 = vld [vmem:[%s306 + $0x1c4] sm:$0xf]
      %v438 = vld [vmem:[%s306 + $0x1c8] sm:$0xf]
      %v439 = vld [vmem:[%s306 + $0x1cc] sm:$0xf]
      %v440 = vld [vmem:[%s306 + $0x1d0] sm:$0xf]
      %v441 = vld [vmem:[%s306 + $0x1d4] sm:$0xf]
      %v442 = vld [vmem:[%s306 + $0x1d8] sm:$0xf]
      %v443 = vld [vmem:[%s306 + $0x1dc] sm:$0xf]
      %v444 = vld [vmem:[%s306 + $0x1e0] sm:$0xf]
      %v445 = vld [vmem:[%s306 + $0x1e4] sm:$0xf]
      %v446 = vld [vmem:[%s306 + $0x1e8] sm:$0xf]
      %v447 = vld [vmem:[%s306 + $0x1ec] sm:$0xf]
      %v448 = vld [vmem:[%s306 + $0x1f0] sm:$0xf]
      %v449 = vld [vmem:[%s306 + $0x1f4] sm:$0xf]
      %v450 = vld [vmem:[%s306 + $0x1f8] sm:$0xf]
      %v451 = vld [vmem:[%s306 + $0x1fc] sm:$0xf]
      %v452 = vunpack.c.l.bf16 %v324
      %v453 = vunpack.c.l.bf16 %v325
      %v454 = vunpack.c.l.bf16 %v326
      %v455 = vunpack.c.l.bf16 %v327
      %v456 = vunpack.c.l.bf16 %v328
      %v457 = vunpack.c.l.bf16 %v329
      %v458 = vunpack.c.l.bf16 %v330
      %v459 = vunpack.c.l.bf16 %v331
      %v460 = vunpack.c.l.bf16 %v332
      %v461 = vunpack.c.l.bf16 %v333
      %v462 = vunpack.c.l.bf16 %v334
      %v463 = vunpack.c.l.bf16 %v335
      %v464 = vunpack.c.l.bf16 %v336
      %v465 = vunpack.c.l.bf16 %v337
      %v466 = vunpack.c.l.bf16 %v338
      %v467 = vunpack.c.l.bf16 %v339
      %v468 = vunpack.c.l.bf16 %v340
      %v469 = vunpack.c.l.bf16 %v341
      %v470 = vunpack.c.l.bf16 %v342
      %v471 = vunpack.c.l.bf16 %v343
      %v472 = vunpack.c.l.bf16 %v344
      %v473 = vunpack.c.l.bf16 %v345
      %v474 = vunpack.c.l.bf16 %v346
      %v475 = vunpack.c.l.bf16 %v347
      %v476 = vunpack.c.l.bf16 %v348
      %v477 = vunpack.c.l.bf16 %v349
      %v478 = vunpack.c.l.bf16 %v350
      %v479 = vunpack.c.l.bf16 %v351
      %v480 = vunpack.c.l.bf16 %v352
      %v481 = vunpack.c.l.bf16 %v353
      %v482 = vunpack.c.l.bf16 %v354
      %v483 = vunpack.c.l.bf16 %v355
      %v484 = vunpack.c.l.bf16 %v356
      %v485 = vunpack.c.l.bf16 %v357
      %v486 = vunpack.c.l.bf16 %v358
      %v487 = vunpack.c.l.bf16 %v359
      %v488 = vunpack.c.l.bf16 %v360
      %v489 = vunpack.c.l.bf16 %v361
      %v490 = vunpack.c.l.bf16 %v362
      %v491 = vunpack.c.l.bf16 %v363
      %v492 = vunpack.c.l.bf16 %v364
      %v493 = vunpack.c.l.bf16 %v365
      %v494 = vunpack.c.l.bf16 %v366
      %v495 = vunpack.c.l.bf16 %v367
      %v496 = vunpack.c.l.bf16 %v368
      %v497 = vunpack.c.l.bf16 %v369
      %v498 = vunpack.c.l.bf16 %v370
      %v499 = vunpack.c.l.bf16 %v371
      %v500 = vunpack.c.l.bf16 %v372
      %v501 = vunpack.c.l.bf16 %v373
      %v502 = vunpack.c.l.bf16 %v374
      %v503 = vunpack.c.l.bf16 %v375
      %v504 = vunpack.c.l.bf16 %v376
      %v505 = vunpack.c.l.bf16 %v377
      %v506 = vunpack.c.l.bf16 %v378
      %v507 = vunpack.c.l.bf16 %v379
      %v508 = vunpack.c.l.bf16 %v380
      %v509 = vunpack.c.l.bf16 %v381
      %v510 = vunpack.c.l.bf16 %v382
      %v511 = vunpack.c.l.bf16 %v383
      %v512 = vunpack.c.l.bf16 %v384
      %v513 = vunpack.c.l.bf16 %v385
      %v514 = vunpack.c.l.bf16 %v386
      %v515 = vunpack.c.l.bf16 %v387
      %v516 = vunpack.c.l.bf16 %v388
      %v517 = vunpack.c.l.bf16 %v389
      %v518 = vunpack.c.l.bf16 %v390
      %v519 = vunpack.c.l.bf16 %v391
      %v520 = vunpack.c.l.bf16 %v392
      %v521 = vunpack.c.l.bf16 %v393
      %v522 = vunpack.c.l.bf16 %v394
      %v523 = vunpack.c.l.bf16 %v395
      %v524 = vunpack.c.l.bf16 %v396
      %v525 = vunpack.c.l.bf16 %v397
      %v526 = vunpack.c.l.bf16 %v398
      %v527 = vunpack.c.l.bf16 %v399
      %v528 = vunpack.c.l.bf16 %v400
      %v529 = vunpack.c.l.bf16 %v401
      %v530 = vunpack.c.l.bf16 %v402
      %v531 = vunpack.c.l.bf16 %v403
      %v532 = vunpack.c.l.bf16 %v404
      %v533 = vunpack.c.l.bf16 %v405
      %v534 = vunpack.c.l.bf16 %v406
      %v535 = vunpack.c.l.bf16 %v407
      %v536 = vunpack.c.l.bf16 %v408
      %v537 = vunpack.c.l.bf16 %v409
      %v538 = vunpack.c.l.bf16 %v410
      %v539 = vunpack.c.l.bf16 %v411
      %v540 = vunpack.c.l.bf16 %v412
      %v541 = vunpack.c.l.bf16 %v413
      %v542 = vunpack.c.l.bf16 %v414
      %v543 = vunpack.c.l.bf16 %v415
      %v544 = vunpack.c.l.bf16 %v416
      %v545 = vunpack.c.l.bf16 %v417
      %v546 = vunpack.c.l.bf16 %v418
      %v547 = vunpack.c.l.bf16 %v419
      %v548 = vunpack.c.l.bf16 %v420
      %v549 = vunpack.c.l.bf16 %v421
      %v550 = vunpack.c.l.bf16 %v422
      %v551 = vunpack.c.l.bf16 %v423
      %v552 = vunpack.c.l.bf16 %v424
      %v553 = vunpack.c.l.bf16 %v425
      %v554 = vunpack.c.l.bf16 %v426
      %v555 = vunpack.c.l.bf16 %v427
      %v556 = vunpack.c.l.bf16 %v428
      %v557 = vunpack.c.l.bf16 %v429
      %v558 = vunpack.c.l.bf16 %v430
      %v559 = vunpack.c.l.bf16 %v431
      %v560 = vunpack.c.l.bf16 %v432
      %v561 = vunpack.c.l.bf16 %v433
      %v562 = vunpack.c.l.bf16 %v434
      %v563 = vunpack.c.l.bf16 %v435
      %v564 = vunpack.c.l.bf16 %v436
      %v565 = vunpack.c.l.bf16 %v437
      %v566 = vunpack.c.l.bf16 %v438
      %v567 = vunpack.c.l.bf16 %v439
      %v568 = vunpack.c.l.bf16 %v440
      %v569 = vunpack.c.l.bf16 %v441
      %v570 = vunpack.c.l.bf16 %v442
      %v571 = vunpack.c.l.bf16 %v443
      %v572 = vunpack.c.l.bf16 %v444
      %v573 = vunpack.c.l.bf16 %v445
      %v574 = vunpack.c.l.bf16 %v446
      %v575 = vunpack.c.l.bf16 %v447
      %v576 = vunpack.c.l.bf16 %v448
      %v577 = vunpack.c.l.bf16 %v449
      %v578 = vunpack.c.l.bf16 %v450
      %v579 = vunpack.c.l.bf16 %v451
      %v580 = vld [vmem:[%s299] sm:$0xff]
      %v581 = vld [vmem:[%s299 + $0x8] sm:$0xff]
      %v582 = vld [vmem:[%s299 + $0x10] sm:$0xff]
      %v583 = vld [vmem:[%s299 + $0x18] sm:$0xff]
      %v584 = vld [vmem:[%s299 + $0x20] sm:$0xff]
      %v585 = vld [vmem:[%s299 + $0x28] sm:$0xff]
      %v586 = vld [vmem:[%s299 + $0x30] sm:$0xff]
      %v587 = vld [vmem:[%s299 + $0x38] sm:$0xff]
      %588 = vxpose.xlu0.b32.start [1/16] %v580, 128
      %589 = vxpose.xlu0.b32.cont [2/16] 0.0, 128
      %590 = vxpose.xlu0.b32.cont [3/16] 0.0, 128
      %591 = vxpose.xlu0.b32.cont [4/16] 0.0, 128
      %592 = vxpose.xlu0.b32.cont [5/16] 0.0, 128
      %593 = vxpose.xlu0.b32.cont [6/16] 0.0, 128
      %594 = vxpose.xlu0.b32.cont [7/16] 0.0, 128
      %595 = vxpose.xlu0.b32.cont [8/16] 0.0, 128
      %596 = vxpose.xlu0.b32.cont [9/16] 0.0, 128
      %597 = vxpose.xlu0.b32.cont [10/16] 0.0, 128
      %598 = vxpose.xlu0.b32.cont [11/16] 0.0, 128
      %599 = vxpose.xlu0.b32.cont [12/16] 0.0, 128
      %600 = vxpose.xlu0.b32.cont [13/16] 0.0, 128
      %601 = vxpose.xlu0.b32.cont [14/16] 0.0, 128
      %602 = vxpose.xlu0.b32.cont [15/16] 0.0, 128
      %603 = vxpose.xlu0.b32.end [16/16] 0.0, 128
      %v604 = vpop.trf.xlu0
      %v605 = vpop.trf.xlu0
      %v606 = vpop.trf.xlu0
      %v607 = vpop.trf.xlu0
      %v608 = vpop.trf.xlu0
      %v609 = vpop.trf.xlu0
      %v610 = vpop.trf.xlu0
      %v611 = vpop.trf.xlu0
      %v612 = vpop.trf.xlu0
      %v613 = vpop.trf.xlu0
      %v614 = vpop.trf.xlu0
      %v615 = vpop.trf.xlu0
      %v616 = vpop.trf.xlu0
      %v617 = vpop.trf.xlu0
      %v618 = vpop.trf.xlu0
      %v619 = vpop.trf.xlu0
      %620 = vxpose.xlu0.b32.start [1/16] %v581, 128
      %621 = vxpose.xlu0.b32.cont [2/16] 0.0, 128
      %622 = vxpose.xlu0.b32.cont [3/16] 0.0, 128
      %623 = vxpose.xlu0.b32.cont [4/16] 0.0, 128
      %624 = vxpose.xlu0.b32.cont [5/16] 0.0, 128
      %625 = vxpose.xlu0.b32.cont [6/16] 0.0, 128
      %626 = vxpose.xlu0.b32.cont [7/16] 0.0, 128
      %627 = vxpose.xlu0.b32.cont [8/16] 0.0, 128
      %628 = vxpose.xlu0.b32.cont [9/16] 0.0, 128
      %629 = vxpose.xlu0.b32.cont [10/16] 0.0, 128
      %630 = vxpose.xlu0.b32.cont [11/16] 0.0, 128
      %631 = vxpose.xlu0.b32.cont [12/16] 0.0, 128
      %632 = vxpose.xlu0.b32.cont [13/16] 0.0, 128
      %633 = vxpose.xlu0.b32.cont [14/16] 0.0, 128
      %634 = vxpose.xlu0.b32.cont [15/16] 0.0, 128
      %635 = vxpose.xlu0.b32.end [16/16] 0.0, 128
      %v636 = vpop.trf.xlu0
      %v637 = vpop.trf.xlu0
      %v638 = vpop.trf.xlu0
      %v639 = vpop.trf.xlu0
      %v640 = vpop.trf.xlu0
      %v641 = vpop.trf.xlu0
      %v642 = vpop.trf.xlu0
      %v643 = vpop.trf.xlu0
      %v644 = vpop.trf.xlu0
      %v645 = vpop.trf.xlu0
      %v646 = vpop.trf.xlu0
      %v647 = vpop.trf.xlu0
      %v648 = vpop.trf.xlu0
      %v649 = vpop.trf.xlu0
      %v650 = vpop.trf.xlu0
      %v651 = vpop.trf.xlu0
      %652 = vxpose.xlu0.b32.start [1/16] %v582, 128
      %653 = vxpose.xlu0.b32.cont [2/16] 0.0, 128
      %654 = vxpose.xlu0.b32.cont [3/16] 0.0, 128
      %655 = vxpose.xlu0.b32.cont [4/16] 0.0, 128
      %656 = vxpose.xlu0.b32.cont [5/16] 0.0, 128
      %657 = vxpose.xlu0.b32.cont [6/16] 0.0, 128
      %658 = vxpose.xlu0.b32.cont [7/16] 0.0, 128
      %659 = vxpose.xlu0.b32.cont [8/16] 0.0, 128
      %660 = vxpose.xlu0.b32.cont [9/16] 0.0, 128
      %661 = vxpose.xlu0.b32.cont [10/16] 0.0, 128
      %662 = vxpose.xlu0.b32.cont [11/16] 0.0, 128
      %663 = vxpose.xlu0.b32.cont [12/16] 0.0, 128
      %664 = vxpose.xlu0.b32.cont [13/16] 0.0, 128
      %665 = vxpose.xlu0.b32.cont [14/16] 0.0, 128
      %666 = vxpose.xlu0.b32.cont [15/16] 0.0, 128
      %667 = vxpose.xlu0.b32.end [16/16] 0.0, 128
      %v668 = vpop.trf.xlu0
      %v669 = vpop.trf.xlu0
      %v670 = vpop.trf.xlu0
      %v671 = vpop.trf.xlu0
      %v672 = vpop.trf.xlu0
      %v673 = vpop.trf.xlu0
      %v674 = vpop.trf.xlu0
      %v675 = vpop.trf.xlu0
      %v676 = vpop.trf.xlu0
      %v677 = vpop.trf.xlu0
      %v678 = vpop.trf.xlu0
      %v679 = vpop.trf.xlu0
      %v680 = vpop.trf.xlu0
      %v681 = vpop.trf.xlu0
      %v682 = vpop.trf.xlu0
      %v683 = vpop.trf.xlu0
      %684 = vxpose.xlu0.b32.start [1/16] %v583, 128
      %685 = vxpose.xlu0.b32.cont [2/16] 0.0, 128
      %686 = vxpose.xlu0.b32.cont [3/16] 0.0, 128
      %687 = vxpose.xlu0.b32.cont [4/16] 0.0, 128
      %688 = vxpose.xlu0.b32.cont [5/16] 0.0, 128
      %689 = vxpose.xlu0.b32.cont [6/16] 0.0, 128
      %690 = vxpose.xlu0.b32.cont [7/16] 0.0, 128
      %691 = vxpose.xlu0.b32.cont [8/16] 0.0, 128
      %692 = vxpose.xlu0.b32.cont [9/16] 0.0, 128
      %693 = vxpose.xlu0.b32.cont [10/16] 0.0, 128
      %694 = vxpose.xlu0.b32.cont [11/16] 0.0, 128
      %695 = vxpose.xlu0.b32.cont [12/16] 0.0, 128
      %696 = vxpose.xlu0.b32.cont [13/16] 0.0, 128
      %697 = vxpose.xlu0.b32.cont [14/16] 0.0, 128
      %698 = vxpose.xlu0.b32.cont [15/16] 0.0, 128
      %699 = vxpose.xlu0.b32.end [16/16] 0.0, 128
      %v700 = vpop.trf.xlu0
      %v701 = vpop.trf.xlu0
      %v702 = vpop.trf.xlu0
      %v703 = vpop.trf.xlu0
      %v704 = vpop.trf.xlu0
      %v705 = vpop.trf.xlu0
      %v706 = vpop.trf.xlu0
      %v707 = vpop.trf.xlu0
      %v708 = vpop.trf.xlu0
      %v709 = vpop.trf.xlu0
      %v710 = vpop.trf.xlu0
      %v711 = vpop.trf.xlu0
      %v712 = vpop.trf.xlu0
      %v713 = vpop.trf.xlu0
      %v714 = vpop.trf.xlu0
      %v715 = vpop.trf.xlu0
      %716 = vxpose.xlu0.b32.start [1/16] %v584, 128
      %717 = vxpose.xlu0.b32.cont [2/16] 0.0, 128
      %718 = vxpose.xlu0.b32.cont [3/16] 0.0, 128
      %719 = vxpose.xlu0.b32.cont [4/16] 0.0, 128
      %720 = vxpose.xlu0.b32.cont [5/16] 0.0, 128
      %721 = vxpose.xlu0.b32.cont [6/16] 0.0, 128
      %722 = vxpose.xlu0.b32.cont [7/16] 0.0, 128
      %723 = vxpose.xlu0.b32.cont [8/16] 0.0, 128
      %724 = vxpose.xlu0.b32.cont [9/16] 0.0, 128
      %725 = vxpose.xlu0.b32.cont [10/16] 0.0, 128
      %726 = vxpose.xlu0.b32.cont [11/16] 0.0, 128
      %727 = vxpose.xlu0.b32.cont [12/16] 0.0, 128
      %728 = vxpose.xlu0.b32.cont [13/16] 0.0, 128
      %729 = vxpose.xlu0.b32.cont [14/16] 0.0, 128
      %730 = vxpose.xlu0.b32.cont [15/16] 0.0, 128
      %731 = vxpose.xlu0.b32.end [16/16] 0.0, 128
      %v732 = vpop.trf.xlu0
      %v733 = vpop.trf.xlu0
      %v734 = vpop.trf.xlu0
      %v735 = vpop.trf.xlu0
      %v736 = vpop.trf.xlu0
      %v737 = vpop.trf.xlu0
      %v738 = vpop.trf.xlu0
      %v739 = vpop.trf.xlu0
      %v740 = vpop.trf.xlu0
      %v741 = vpop.trf.xlu0
      %v742 = vpop.trf.xlu0
      %v743 = vpop.trf.xlu0
      %v744 = vpop.trf.xlu0
      %v745 = vpop.trf.xlu0
      %v746 = vpop.trf.xlu0
      %v747 = vpop.trf.xlu0
      %748 = vxpose.xlu0.b32.start [1/16] %v585, 128
      %749 = vxpose.xlu0.b32.cont [2/16] 0.0, 128
      %750 = vxpose.xlu0.b32.cont [3/16] 0.0, 128
      %751 = vxpose.xlu0.b32.cont [4/16] 0.0, 128
      %752 = vxpose.xlu0.b32.cont [5/16] 0.0, 128
      %753 = vxpose.xlu0.b32.cont [6/16] 0.0, 128
      %754 = vxpose.xlu0.b32.cont [7/16] 0.0, 128
      %755 = vxpose.xlu0.b32.cont [8/16] 0.0, 128
      %756 = vxpose.xlu0.b32.cont [9/16] 0.0, 128
      %757 = vxpose.xlu0.b32.cont [10/16] 0.0, 128
      %758 = vxpose.xlu0.b32.cont [11/16] 0.0, 128
      %759 = vxpose.xlu0.b32.cont [12/16] 0.0, 128
      %760 = vxpose.xlu0.b32.cont [13/16] 0.0, 128
      %761 = vxpose.xlu0.b32.cont [14/16] 0.0, 128
      %762 = vxpose.xlu0.b32.cont [15/16] 0.0, 128
      %763 = vxpose.xlu0.b32.end [16/16] 0.0, 128
      %v764 = vpop.trf.xlu0
      %v765 = vpop.trf.xlu0
      %v766 = vpop.trf.xlu0
      %v767 = vpop.trf.xlu0
      %v768 = vpop.trf.xlu0
      %v769 = vpop.trf.xlu0
      %v770 = vpop.trf.xlu0
      %v771 = vpop.trf.xlu0
      %v772 = vpop.trf.xlu0
      %v773 = vpop.trf.xlu0
      %v774 = vpop.trf.xlu0
      %v775 = vpop.trf.xlu0
      %v776 = vpop.trf.xlu0
      %v777 = vpop.trf.xlu0
      %v778 = vpop.trf.xlu0
      %v779 = vpop.trf.xlu0
      %780 = vxpose.xlu0.b32.start [1/16] %v586, 128
      %781 = vxpose.xlu0.b32.cont [2/16] 0.0, 128
      %782 = vxpose.xlu0.b32.cont [3/16] 0.0, 128
      %783 = vxpose.xlu0.b32.cont [4/16] 0.0, 128
      %784 = vxpose.xlu0.b32.cont [5/16] 0.0, 128
      %785 = vxpose.xlu0.b32.cont [6/16] 0.0, 128
      %786 = vxpose.xlu0.b32.cont [7/16] 0.0, 128
      %787 = vxpose.xlu0.b32.cont [8/16] 0.0, 128
      %788 = vxpose.xlu0.b32.cont [9/16] 0.0, 128
      %789 = vxpose.xlu0.b32.cont [10/16] 0.0, 128
      %790 = vxpose.xlu0.b32.cont [11/16] 0.0, 128
      %791 = vxpose.xlu0.b32.cont [12/16] 0.0, 128
      %792 = vxpose.xlu0.b32.cont [13/16] 0.0, 128
      %793 = vxpose.xlu0.b32.cont [14/16] 0.0, 128
      %794 = vxpose.xlu0.b32.cont [15/16] 0.0, 128
      %795 = vxpose.xlu0.b32.end [16/16] 0.0, 128
      %v796 = vpop.trf.xlu0
      %v797 = vpop.trf.xlu0
      %v798 = vpop.trf.xlu0
      %v799 = vpop.trf.xlu0
      %v800 = vpop.trf.xlu0
      %v801 = vpop.trf.xlu0
      %v802 = vpop.trf.xlu0
      %v803 = vpop.trf.xlu0
      %v804 = vpop.trf.xlu0
      %v805 = vpop.trf.xlu0
      %v806 = vpop.trf.xlu0
      %v807 = vpop.trf.xlu0
      %v808 = vpop.trf.xlu0
      %v809 = vpop.trf.xlu0
      %v810 = vpop.trf.xlu0
      %v811 = vpop.trf.xlu0
      %812 = vxpose.xlu0.b32.start [1/16] %v587, 128
      %813 = vxpose.xlu0.b32.cont [2/16] 0.0, 128
      %814 = vxpose.xlu0.b32.cont [3/16] 0.0, 128
      %815 = vxpose.xlu0.b32.cont [4/16] 0.0, 128
      %816 = vxpose.xlu0.b32.cont [5/16] 0.0, 128
      %817 = vxpose.xlu0.b32.cont [6/16] 0.0, 128
      %818 = vxpose.xlu0.b32.cont [7/16] 0.0, 128
      %819 = vxpose.xlu0.b32.cont [8/16] 0.0, 128
      %820 = vxpose.xlu0.b32.cont [9/16] 0.0, 128
      %821 = vxpose.xlu0.b32.cont [10/16] 0.0, 128
      %822 = vxpose.xlu0.b32.cont [11/16] 0.0, 128
      %823 = vxpose.xlu0.b32.cont [12/16] 0.0, 128
      %824 = vxpose.xlu0.b32.cont [13/16] 0.0, 128
      %825 = vxpose.xlu0.b32.cont [14/16] 0.0, 128
      %826 = vxpose.xlu0.b32.cont [15/16] 0.0, 128
      %827 = vxpose.xlu0.b32.end [16/16] 0.0, 128
      %v828 = vpop.trf.xlu0
      %v829 = vpop.trf.xlu0
      %v830 = vpop.trf.xlu0
      %v831 = vpop.trf.xlu0
      %v832 = vpop.trf.xlu0
      %v833 = vpop.trf.xlu0
      %v834 = vpop.trf.xlu0
      %v835 = vpop.trf.xlu0
      %v836 = vpop.trf.xlu0
      %v837 = vpop.trf.xlu0
      %v838 = vpop.trf.xlu0
      %v839 = vpop.trf.xlu0
      %v840 = vpop.trf.xlu0
      %v841 = vpop.trf.xlu0
      %v842 = vpop.trf.xlu0
      %v843 = vpop.trf.xlu0
      %v844 = vrot.slane %v668, 4
      %vm845 = vcmask 1047556
      %v846 = vsel %vm845, %v844, %v604
      %v847 = vrot.slane %v604, 4
      %v848 = vsel %vm845, %v668, %v847
      %v850 = vunpack.c.l.s4 1983009808
      %v851 = vunpack.c.0.s8 %v850
      %v852 = vperm.slane %v846, %v851
      %v854 = vunpack.c.l.s4 1983009808
      %v855 = vunpack.c.0.s8 %v854
      %v856 = vperm.slane %v848, %v855
      %v857 = vrot.slane %v700, 4
      %v858 = vsel %vm845, %v857, %v636
      %v859 = vrot.slane %v636, 4
      %v860 = vsel %vm845, %v700, %v859
      %v862 = vunpack.c.l.s4 1983009808
      %v863 = vunpack.c.0.s8 %v862
      %v864 = vperm.slane %v858, %v863
      %v866 = vunpack.c.l.s4 1983009808
      %v867 = vunpack.c.0.s8 %v866
      %v868 = vperm.slane %v860, %v867
      %v869 = vrot.slane %v796, 4
      %v870 = vsel %vm845, %v869, %v732
      %v871 = vrot.slane %v732, 4
      %v872 = vsel %vm845, %v796, %v871
      %v874 = vunpack.c.l.s4 1983009808
      %v875 = vunpack.c.0.s8 %v874
      %v876 = vperm.slane %v870, %v875
      %v878 = vunpack.c.l.s4 1983009808
      %v879 = vunpack.c.0.s8 %v878
      %v880 = vperm.slane %v872, %v879
      %v881 = vrot.slane %v828, 4
      %v882 = vsel %vm845, %v881, %v764
      %v883 = vrot.slane %v764, 4
      %v884 = vsel %vm845, %v828, %v883
      %v886 = vunpack.c.l.s4 1983009808
      %v887 = vunpack.c.0.s8 %v886
      %v888 = vperm.slane %v882, %v887
      %v890 = vunpack.c.l.s4 1983009808
      %v891 = vunpack.c.0.s8 %v890
      %v892 = vperm.slane %v884, %v891
      %v893 = vrot.slane %v864, 4
      %v894 = vsel %vm845, %v893, %v852
      %v895 = vrot.slane %v852, 4
      %v896 = vsel %vm845, %v864, %v895
      %v898 = vunpack.c.l.s4 1934713408
      %v899 = vunpack.c.0.s8 %v898
      %v900 = vperm.slane %v894, %v899
      %v902 = vunpack.c.l.s4 1934713408
      %v903 = vunpack.c.0.s8 %v902
      %v904 = vperm.slane %v896, %v903
      %v905 = vrot.slane %v868, 4
      %v906 = vsel %vm845, %v905, %v856
      %v907 = vrot.slane %v856, 4
      %v908 = vsel %vm845, %v868, %v907
      %v910 = vunpack.c.l.s4 1934713408
      %v911 = vunpack.c.0.s8 %v910
      %v912 = vperm.slane %v906, %v911
      %v914 = vunpack.c.l.s4 1934713408
      %v915 = vunpack.c.0.s8 %v914
      %v916 = vperm.slane %v908, %v915
      %v917 = vrot.slane %v888, 4
      %v918 = vsel %vm845, %v917, %v876
      %v919 = vrot.slane %v876, 4
      %v920 = vsel %vm845, %v888, %v919
      %v922 = vunpack.c.l.s4 1934713408
      %v923 = vunpack.c.0.s8 %v922
      %v924 = vperm.slane %v918, %v923
      %v926 = vunpack.c.l.s4 1934713408
      %v927 = vunpack.c.0.s8 %v926
      %v928 = vperm.slane %v920, %v927
      %v929 = vrot.slane %v892, 4
      %v930 = vsel %vm845, %v929, %v880
      %v931 = vrot.slane %v880, 4
      %v932 = vsel %vm845, %v892, %v931
      %v934 = vunpack.c.l.s4 1934713408
      %v935 = vunpack.c.0.s8 %v934
      %v936 = vperm.slane %v930, %v935
      %v938 = vunpack.c.l.s4 1934713408
      %v939 = vunpack.c.0.s8 %v938
      %v940 = vperm.slane %v932, %v939
      %v941 = vrot.slane %v924, 4
      %v942 = vsel %vm845, %v941, %v900
      %v943 = vrot.slane %v900, 4
      %v944 = vsel %vm845, %v924, %v943
      %v945 = vrot.slane %v928, 4
      %v946 = vsel %vm845, %v945, %v904
      %v947 = vrot.slane %v904, 4
      %v948 = vsel %vm845, %v928, %v947
      %v949 = vrot.slane %v936, 4
      %v950 = vsel %vm845, %v949, %v912
      %v951 = vrot.slane %v912, 4
      %v952 = vsel %vm845, %v936, %v951
      %v953 = vrot.slane %v940, 4
      %v954 = vsel %vm845, %v953, %v916
      %v955 = vrot.slane %v916, 4
      %v956 = vsel %vm845, %v940, %v955
      %957 = vxpose.xlu0.b32.start [1/16] %v942, 128
      %958 = vxpose.xlu0.b32.cont [2/16] 0.0, 128
      %959 = vxpose.xlu0.b32.cont [3/16] 0.0, 128
      %960 = vxpose.xlu0.b32.cont [4/16] 0.0, 128
      %961 = vxpose.xlu0.b32.cont [5/16] 0.0, 128
      %962 = vxpose.xlu0.b32.cont [6/16] 0.0, 128
      %963 = vxpose.xlu0.b32.cont [7/16] 0.0, 128
      %964 = vxpose.xlu0.b32.cont [8/16] 0.0, 128
      %965 = vxpose.xlu0.b32.cont [9/16] 0.0, 128
      %966 = vxpose.xlu0.b32.cont [10/16] 0.0, 128
      %967 = vxpose.xlu0.b32.cont [11/16] 0.0, 128
      %968 = vxpose.xlu0.b32.cont [12/16] 0.0, 128
      %969 = vxpose.xlu0.b32.cont [13/16] 0.0, 128
      %970 = vxpose.xlu0.b32.cont [14/16] 0.0, 128
      %971 = vxpose.xlu0.b32.cont [15/16] 0.0, 128
      %972 = vxpose.xlu0.b32.end [16/16] 0.0, 128
      %v973 = vpop.trf.xlu0
      %v974 = vpop.trf.xlu0
      %v975 = vpop.trf.xlu0
      %v976 = vpop.trf.xlu0
      %v977 = vpop.trf.xlu0
      %v978 = vpop.trf.xlu0
      %v979 = vpop.trf.xlu0
      %v980 = vpop.trf.xlu0
      %v981 = vpop.trf.xlu0
      %v982 = vpop.trf.xlu0
      %v983 = vpop.trf.xlu0
      %v984 = vpop.trf.xlu0
      %v985 = vpop.trf.xlu0
      %v986 = vpop.trf.xlu0
      %v987 = vpop.trf.xlu0
      %v988 = vpop.trf.xlu0
      %989 = vxpose.xlu0.b32.start [1/16] %v944, 128
      %990 = vxpose.xlu0.b32.cont [2/16] 0.0, 128
      %991 = vxpose.xlu0.b32.cont [3/16] 0.0, 128
      %992 = vxpose.xlu0.b32.cont [4/16] 0.0, 128
      %993 = vxpose.xlu0.b32.cont [5/16] 0.0, 128
      %994 = vxpose.xlu0.b32.cont [6/16] 0.0, 128
      %995 = vxpose.xlu0.b32.cont [7/16] 0.0, 128
      %996 = vxpose.xlu0.b32.cont [8/16] 0.0, 128
      %997 = vxpose.xlu0.b32.cont [9/16] 0.0, 128
      %998 = vxpose.xlu0.b32.cont [10/16] 0.0, 128
      %999 = vxpose.xlu0.b32.cont [11/16] 0.0, 128
      %1000 = vxpose.xlu0.b32.cont [12/16] 0.0, 128
      %1001 = vxpose.xlu0.b32.cont [13/16] 0.0, 128
      %1002 = vxpose.xlu0.b32.cont [14/16] 0.0, 128
      %1003 = vxpose.xlu0.b32.cont [15/16] 0.0, 128
      %1004 = vxpose.xlu0.b32.end [16/16] 0.0, 128
      %v1005 = vpop.trf.xlu0
      %v1006 = vpop.trf.xlu0
      %v1007 = vpop.trf.xlu0
      %v1008 = vpop.trf.xlu0
      %v1009 = vpop.trf.xlu0
      %v1010 = vpop.trf.xlu0
      %v1011 = vpop.trf.xlu0
      %v1012 = vpop.trf.xlu0
      %v1013 = vpop.trf.xlu0
      %v1014 = vpop.trf.xlu0
      %v1015 = vpop.trf.xlu0
      %v1016 = vpop.trf.xlu0
      %v1017 = vpop.trf.xlu0
      %v1018 = vpop.trf.xlu0
      %v1019 = vpop.trf.xlu0
      %v1020 = vpop.trf.xlu0
      %1021 = vxpose.xlu0.b32.start [1/16] %v946, 128
      %1022 = vxpose.xlu0.b32.cont [2/16] 0.0, 128
      %1023 = vxpose.xlu0.b32.cont [3/16] 0.0, 128
      %1024 = vxpose.xlu0.b32.cont [4/16] 0.0, 128
      %1025 = vxpose.xlu0.b32.cont [5/16] 0.0, 128
      %1026 = vxpose.xlu0.b32.cont [6/16] 0.0, 128
      %1027 = vxpose.xlu0.b32.cont [7/16] 0.0, 128
      %1028 = vxpose.xlu0.b32.cont [8/16] 0.0, 128
      %1029 = vxpose.xlu0.b32.cont [9/16] 0.0, 128
      %1030 = vxpose.xlu0.b32.cont [10/16] 0.0, 128
      %1031 = vxpose.xlu0.b32.cont [11/16] 0.0, 128
      %1032 = vxpose.xlu0.b32.cont [12/16] 0.0, 128
      %1033 = vxpose.xlu0.b32.cont [13/16] 0.0, 128
      %1034 = vxpose.xlu0.b32.cont [14/16] 0.0, 128
      %1035 = vxpose.xlu0.b32.cont [15/16] 0.0, 128
      %1036 = vxpose.xlu0.b32.end [16/16] 0.0, 128
      %v1037 = vpop.trf.xlu0
      %v1038 = vpop.trf.xlu0
      %v1039 = vpop.trf.xlu0
      %v1040 = vpop.trf.xlu0
      %v1041 = vpop.trf.xlu0
      %v1042 = vpop.trf.xlu0
      %v1043 = vpop.trf.xlu0
      %v1044 = vpop.trf.xlu0
      %v1045 = vpop.trf.xlu0
      %v1046 = vpop.trf.xlu0
      %v1047 = vpop.trf.xlu0
      %v1048 = vpop.trf.xlu0
      %v1049 = vpop.trf.xlu0
      %v1050 = vpop.trf.xlu0
      %v1051 = vpop.trf.xlu0
      %v1052 = vpop.trf.xlu0
      %1053 = vxpose.xlu0.b32.start [1/16] %v948, 128
      %1054 = vxpose.xlu0.b32.cont [2/16] 0.0, 128
      %1055 = vxpose.xlu0.b32.cont [3/16] 0.0, 128
      %1056 = vxpose.xlu0.b32.cont [4/16] 0.0, 128
      %1057 = vxpose.xlu0.b32.cont [5/16] 0.0, 128
      %1058 = vxpose.xlu0.b32.cont [6/16] 0.0, 128
      %1059 = vxpose.xlu0.b32.cont [7/16] 0.0, 128
      %1060 = vxpose.xlu0.b32.cont [8/16] 0.0, 128
      %1061 = vxpose.xlu0.b32.cont [9/16] 0.0, 128
      %1062 = vxpose.xlu0.b32.cont [10/16] 0.0, 128
      %1063 = vxpose.xlu0.b32.cont [11/16] 0.0, 128
      %1064 = vxpose.xlu0.b32.cont [12/16] 0.0, 128
      %1065 = vxpose.xlu0.b32.cont [13/16] 0.0, 128
      %1066 = vxpose.xlu0.b32.cont [14/16] 0.0, 128
      %1067 = vxpose.xlu0.b32.cont [15/16] 0.0, 128
      %1068 = vxpose.xlu0.b32.end [16/16] 0.0, 128
      %v1069 = vpop.trf.xlu0
      %v1070 = vpop.trf.xlu0
      %v1071 = vpop.trf.xlu0
      %v1072 = vpop.trf.xlu0
      %v1073 = vpop.trf.xlu0
      %v1074 = vpop.trf.xlu0
      %v1075 = vpop.trf.xlu0
      %v1076 = vpop.trf.xlu0
      %v1077 = vpop.trf.xlu0
      %v1078 = vpop.trf.xlu0
      %v1079 = vpop.trf.xlu0
      %v1080 = vpop.trf.xlu0
      %v1081 = vpop.trf.xlu0
      %v1082 = vpop.trf.xlu0
      %v1083 = vpop.trf.xlu0
      %v1084 = vpop.trf.xlu0
      %1085 = vxpose.xlu0.b32.start [1/16] %v950, 128
      %1086 = vxpose.xlu0.b32.cont [2/16] 0.0, 128
      %1087 = vxpose.xlu0.b32.cont [3/16] 0.0, 128
      %1088 = vxpose.xlu0.b32.cont [4/16] 0.0, 128
      %1089 = vxpose.xlu0.b32.cont [5/16] 0.0, 128
      %1090 = vxpose.xlu0.b32.cont [6/16] 0.0, 128
      %1091 = vxpose.xlu0.b32.cont [7/16] 0.0, 128
      %1092 = vxpose.xlu0.b32.cont [8/16] 0.0, 128
      %1093 = vxpose.xlu0.b32.cont [9/16] 0.0, 128
      %1094 = vxpose.xlu0.b32.cont [10/16] 0.0, 128
      %1095 = vxpose.xlu0.b32.cont [11/16] 0.0, 128
      %1096 = vxpose.xlu0.b32.cont [12/16] 0.0, 128
      %1097 = vxpose.xlu0.b32.cont [13/16] 0.0, 128
      %1098 = vxpose.xlu0.b32.cont [14/16] 0.0, 128
      %1099 = vxpose.xlu0.b32.cont [15/16] 0.0, 128
      %1100 = vxpose.xlu0.b32.end [16/16] 0.0, 128
      %v1101 = vpop.trf.xlu0
      %v1102 = vpop.trf.xlu0
      %v1103 = vpop.trf.xlu0
      %v1104 = vpop.trf.xlu0
      %v1105 = vpop.trf.xlu0
      %v1106 = vpop.trf.xlu0
      %v1107 = vpop.trf.xlu0
      %v1108 = vpop.trf.xlu0
      %v1109 = vpop.trf.xlu0
      %v1110 = vpop.trf.xlu0
      %v1111 = vpop.trf.xlu0
      %v1112 = vpop.trf.xlu0
      %v1113 = vpop.trf.xlu0
      %v1114 = vpop.trf.xlu0
      %v1115 = vpop.trf.xlu0
      %v1116 = vpop.trf.xlu0
      %1117 = vxpose.xlu0.b32.start [1/16] %v952, 128
      %1118 = vxpose.xlu0.b32.cont [2/16] 0.0, 128
      %1119 = vxpose.xlu0.b32.cont [3/16] 0.0, 128
      %1120 = vxpose.xlu0.b32.cont [4/16] 0.0, 128
      %1121 = vxpose.xlu0.b32.cont [5/16] 0.0, 128
      %1122 = vxpose.xlu0.b32.cont [6/16] 0.0, 128
      %1123 = vxpose.xlu0.b32.cont [7/16] 0.0, 128
      %1124 = vxpose.xlu0.b32.cont [8/16] 0.0, 128
      %1125 = vxpose.xlu0.b32.cont [9/16] 0.0, 128
      %1126 = vxpose.xlu0.b32.cont [10/16] 0.0, 128
      %1127 = vxpose.xlu0.b32.cont [11/16] 0.0, 128
      %1128 = vxpose.xlu0.b32.cont [12/16] 0.0, 128
      %1129 = vxpose.xlu0.b32.cont [13/16] 0.0, 128
      %1130 = vxpose.xlu0.b32.cont [14/16] 0.0, 128
      %1131 = vxpose.xlu0.b32.cont [15/16] 0.0, 128
      %1132 = vxpose.xlu0.b32.end [16/16] 0.0, 128
      %v1133 = vpop.trf.xlu0
      %v1134 = vpop.trf.xlu0
      %v1135 = vpop.trf.xlu0
      %v1136 = vpop.trf.xlu0
      %v1137 = vpop.trf.xlu0
      %v1138 = vpop.trf.xlu0
      %v1139 = vpop.trf.xlu0
      %v1140 = vpop.trf.xlu0
      %v1141 = vpop.trf.xlu0
      %v1142 = vpop.trf.xlu0
      %v1143 = vpop.trf.xlu0
      %v1144 = vpop.trf.xlu0
      %v1145 = vpop.trf.xlu0
      %v1146 = vpop.trf.xlu0
      %v1147 = vpop.trf.xlu0
      %v1148 = vpop.trf.xlu0
      %1149 = vxpose.xlu0.b32.start [1/16] %v954, 128
      %1150 = vxpose.xlu0.b32.cont [2/16] 0.0, 128
      %1151 = vxpose.xlu0.b32.cont [3/16] 0.0, 128
      %1152 = vxpose.xlu0.b32.cont [4/16] 0.0, 128
      %1153 = vxpose.xlu0.b32.cont [5/16] 0.0, 128
      %1154 = vxpose.xlu0.b32.cont [6/16] 0.0, 128
      %1155 = vxpose.xlu0.b32.cont [7/16] 0.0, 128
      %1156 = vxpose.xlu0.b32.cont [8/16] 0.0, 128
      %1157 = vxpose.xlu0.b32.cont [9/16] 0.0, 128
      %1158 = vxpose.xlu0.b32.cont [10/16] 0.0, 128
      %1159 = vxpose.xlu0.b32.cont [11/16] 0.0, 128
      %1160 = vxpose.xlu0.b32.cont [12/16] 0.0, 128
      %1161 = vxpose.xlu0.b32.cont [13/16] 0.0, 128
      %1162 = vxpose.xlu0.b32.cont [14/16] 0.0, 128
      %1163 = vxpose.xlu0.b32.cont [15/16] 0.0, 128
      %1164 = vxpose.xlu0.b32.end [16/16] 0.0, 128
      %v1165 = vpop.trf.xlu0
      %v1166 = vpop.trf.xlu0
      %v1167 = vpop.trf.xlu0
      %v1168 = vpop.trf.xlu0
      %v1169 = vpop.trf.xlu0
      %v1170 = vpop.trf.xlu0
      %v1171 = vpop.trf.xlu0
      %v1172 = vpop.trf.xlu0
      %v1173 = vpop.trf.xlu0
      %v1174 = vpop.trf.xlu0
      %v1175 = vpop.trf.xlu0
      %v1176 = vpop.trf.xlu0
      %v1177 = vpop.trf.xlu0
      %v1178 = vpop.trf.xlu0
      %v1179 = vpop.trf.xlu0
      %v1180 = vpop.trf.xlu0
      %1181 = vxpose.xlu0.b32.start [1/16] %v956, 128
      %1182 = vxpose.xlu0.b32.cont [2/16] 0.0, 128
      %1183 = vxpose.xlu0.b32.cont [3/16] 0.0, 128
      %1184 = vxpose.xlu0.b32.cont [4/16] 0.0, 128
      %1185 = vxpose.xlu0.b32.cont [5/16] 0.0, 128
      %1186 = vxpose.xlu0.b32.cont [6/16] 0.0, 128
      %1187 = vxpose.xlu0.b32.cont [7/16] 0.0, 128
      %1188 = vxpose.xlu0.b32.cont [8/16] 0.0, 128
      %1189 = vxpose.xlu0.b32.cont [9/16] 0.0, 128
      %1190 = vxpose.xlu0.b32.cont [10/16] 0.0, 128
      %1191 = vxpose.xlu0.b32.cont [11/16] 0.0, 128
      %1192 = vxpose.xlu0.b32.cont [12/16] 0.0, 128
      %1193 = vxpose.xlu0.b32.cont [13/16] 0.0, 128
      %1194 = vxpose.xlu0.b32.cont [14/16] 0.0, 128
      %1195 = vxpose.xlu0.b32.cont [15/16] 0.0, 128
      %1196 = vxpose.xlu0.b32.end [16/16] 0.0, 128
      %v1197 = vpop.trf.xlu0
      %v1198 = vpop.trf.xlu0
      %v1199 = vpop.trf.xlu0
      %v1200 = vpop.trf.xlu0
      %v1201 = vpop.trf.xlu0
      %v1202 = vpop.trf.xlu0
      %v1203 = vpop.trf.xlu0
      %v1204 = vpop.trf.xlu0
      %v1205 = vpop.trf.xlu0
      %v1206 = vpop.trf.xlu0
      %v1207 = vpop.trf.xlu0
      %v1208 = vpop.trf.xlu0
      %v1209 = vpop.trf.xlu0
      %v1210 = vpop.trf.xlu0
      %v1211 = vpop.trf.xlu0
      %v1212 = vpop.trf.xlu0
      %v1213 = vrot.slane %v1037, 4
      %v1214 = vsel %vm845, %v1213, %v973
      %v1215 = vrot.slane %v973, 4
      %v1216 = vsel %vm845, %v1037, %v1215
      %v1218 = vunpack.c.l.s4 1983009808
      %v1219 = vunpack.c.0.s8 %v1218
      %v1220 = vperm.slane %v1214, %v1219
      %v1222 = vunpack.c.l.s4 1983009808
      %v1223 = vunpack.c.0.s8 %v1222
      %v1224 = vperm.slane %v1216, %v1223
      %v1225 = vrot.slane %v1069, 4
      %v1226 = vsel %vm845, %v1225, %v1005
      %v1227 = vrot.slane %v1005, 4
      %v1228 = vsel %vm845, %v1069, %v1227
      %v1230 = vunpack.c.l.s4 1983009808
      %v1231 = vunpack.c.0.s8 %v1230
      %v1232 = vperm.slane %v1226, %v1231
      %v1234 = vunpack.c.l.s4 1983009808
      %v1235 = vunpack.c.0.s8 %v1234
      %v1236 = vperm.slane %v1228, %v1235
      %v1237 = vrot.slane %v1165, 4
      %v1238 = vsel %vm845, %v1237, %v1101
      %v1239 = vrot.slane %v1101, 4
      %v1240 = vsel %vm845, %v1165, %v1239
      %v1242 = vunpack.c.l.s4 1983009808
      %v1243 = vunpack.c.0.s8 %v1242
      %v1244 = vperm.slane %v1238, %v1243
      %v1246 = vunpack.c.l.s4 1983009808
      %v1247 = vunpack.c.0.s8 %v1246
      %v1248 = vperm.slane %v1240, %v1247
      %v1249 = vrot.slane %v1197, 4
      %v1250 = vsel %vm845, %v1249, %v1133
      %v1251 = vrot.slane %v1133, 4
      %v1252 = vsel %vm845, %v1197, %v1251
      %v1254 = vunpack.c.l.s4 1983009808
      %v1255 = vunpack.c.0.s8 %v1254
      %v1256 = vperm.slane %v1250, %v1255
      %v1258 = vunpack.c.l.s4 1983009808
      %v1259 = vunpack.c.0.s8 %v1258
      %v1260 = vperm.slane %v1252, %v1259
      %v1261 = vrot.slane %v1232, 4
      %v1262 = vsel %vm845, %v1261, %v1220
      %v1263 = vrot.slane %v1220, 4
      %v1264 = vsel %vm845, %v1232, %v1263
      %v1266 = vunpack.c.l.s4 1934713408
      %v1267 = vunpack.c.0.s8 %v1266
      %v1268 = vperm.slane %v1262, %v1267
      %v1270 = vunpack.c.l.s4 1934713408
      %v1271 = vunpack.c.0.s8 %v1270
      %v1272 = vperm.slane %v1264, %v1271
      %v1273 = vrot.slane %v1236, 4
      %v1274 = vsel %vm845, %v1273, %v1224
      %v1275 = vrot.slane %v1224, 4
      %v1276 = vsel %vm845, %v1236, %v1275
      %v1278 = vunpack.c.l.s4 1934713408
      %v1279 = vunpack.c.0.s8 %v1278
      %v1280 = vperm.slane %v1274, %v1279
      %v1282 = vunpack.c.l.s4 1934713408
      %v1283 = vunpack.c.0.s8 %v1282
      %v1284 = vperm.slane %v1276, %v1283
      %v1285 = vrot.slane %v1256, 4
      %v1286 = vsel %vm845, %v1285, %v1244
      %v1287 = vrot.slane %v1244, 4
      %v1288 = vsel %vm845, %v1256, %v1287
      %v1290 = vunpack.c.l.s4 1934713408
      %v1291 = vunpack.c.0.s8 %v1290
      %v1292 = vperm.slane %v1286, %v1291
      %v1294 = vunpack.c.l.s4 1934713408
      %v1295 = vunpack.c.0.s8 %v1294
      %v1296 = vperm.slane %v1288, %v1295
      %v1297 = vrot.slane %v1260, 4
      %v1298 = vsel %vm845, %v1297, %v1248
      %v1299 = vrot.slane %v1248, 4
      %v1300 = vsel %vm845, %v1260, %v1299
      %v1302 = vunpack.c.l.s4 1934713408
      %v1303 = vunpack.c.0.s8 %v1302
      %v1304 = vperm.slane %v1298, %v1303
      %v1306 = vunpack.c.l.s4 1934713408
      %v1307 = vunpack.c.0.s8 %v1306
      %v1308 = vperm.slane %v1300, %v1307
      %v1309 = vrot.slane %v1292, 4
      %v1310 = vsel %vm845, %v1309, %v1268
      %v1311 = vrot.slane %v1268, 4
      %v1312 = vsel %vm845, %v1292, %v1311
      %v1313 = vrot.slane %v1296, 4
      %v1314 = vsel %vm845, %v1313, %v1272
      %v1315 = vrot.slane %v1272, 4
      %v1316 = vsel %vm845, %v1296, %v1315
      %v1317 = vrot.slane %v1304, 4
      %v1318 = vsel %vm845, %v1317, %v1280
      %v1319 = vrot.slane %v1280, 4
      %v1320 = vsel %vm845, %v1304, %v1319
      %v1321 = vrot.slane %v1308, 4
      %v1322 = vsel %vm845, %v1321, %v1284
      %v1323 = vrot.slane %v1284, 4
      %v1324 = vsel %vm845, %v1308, %v1323
      %vm1325 = vcmask 64512
      %v1327 = vsel %vm1325, %v452, 0
      %v1330 = vsel %vm1325, %v453, 0
      %v1333 = vsel %vm1325, %v454, 0
      %v1336 = vsel %vm1325, %v455, 0
      %v1339 = vsel %vm1325, %v456, 0
      %v1342 = vsel %vm1325, %v457, 0
      %v1345 = vsel %vm1325, %v458, 0
      %v1348 = vsel %vm1325, %v459, 0
      %v1351 = vsel %vm1325, %v460, 0
      %v1354 = vsel %vm1325, %v461, 0
      %v1357 = vsel %vm1325, %v462, 0
      %v1360 = vsel %vm1325, %v463, 0
      %v1363 = vsel %vm1325, %v464, 0
      %v1366 = vsel %vm1325, %v465, 0
      %v1369 = vsel %vm1325, %v466, 0
      %v1372 = vsel %vm1325, %v467, 0
      %1374 = vmatpush.msra.mxu0 0.0
      %1375 = vmatpush.msra.mxu0 0.0
      %1376 = vmatpush.msra.mxu0 0.0
      %1377 = vmatpush.msra.mxu0 0.0
      %1378 = vmatpush.msra.mxu0 0.0
      %1379 = vmatpush.msra.mxu0 0.0
      %1380 = vmatpush.msra.mxu0 0.0
      %1381 = vmatpush.msra.mxu0 0.0
      %1382 = vmatpush.msra.mxu0 0.0
      %1383 = vmatpush.msra.mxu0 0.0
      %1384 = vmatpush.msra.mxu0 0.0
      %1385 = vmatpush.msra.mxu0 0.0
      %1386 = vmatpush.msra.mxu0 0.0
      %1387 = vmatpush.msra.mxu0 0.0
      %1388 = vmatpush.msra.mxu0 0.0
      %1389 = vmatpush.msra.mxu0 %v1310
      %1390 = vmatmul.f32.gmra.mxu0 %v1327
      %v1391 = vpop.f32.mrf.mxu0
      %v1392 = vadd.f32 0.0, %v1391
      %1393 = vmatmul.f32.gmra.mxu0 %v1330
      %v1394 = vpop.f32.mrf.mxu0
      %v1395 = vadd.f32 0.0, %v1394
      %1396 = vmatmul.f32.gmra.mxu0 %v1333
      %v1397 = vpop.f32.mrf.mxu0
      %v1398 = vadd.f32 0.0, %v1397
      %1399 = vmatmul.f32.gmra.mxu0 %v1336
      %v1400 = vpop.f32.mrf.mxu0
      %v1401 = vadd.f32 0.0, %v1400
      %1402 = vmatmul.f32.gmra.mxu0 %v1339
      %v1403 = vpop.f32.mrf.mxu0
      %v1404 = vadd.f32 0.0, %v1403
      %1405 = vmatmul.f32.gmra.mxu0 %v1342
      %v1406 = vpop.f32.mrf.mxu0
      %v1407 = vadd.f32 0.0, %v1406
      %1408 = vmatmul.f32.gmra.mxu0 %v1345
      %v1409 = vpop.f32.mrf.mxu0
      %v1410 = vadd.f32 0.0, %v1409
      %1411 = vmatmul.f32.gmra.mxu0 %v1348
      %v1412 = vpop.f32.mrf.mxu0
      %v1413 = vadd.f32 0.0, %v1412
      %1414 = vmatmul.f32.gmra.mxu0 %v1351
      %v1415 = vpop.f32.mrf.mxu0
      %v1416 = vadd.f32 0.0, %v1415
      %1417 = vmatmul.f32.gmra.mxu0 %v1354
      %v1418 = vpop.f32.mrf.mxu0
      %v1419 = vadd.f32 0.0, %v1418
      %1420 = vmatmul.f32.gmra.mxu0 %v1357
      %v1421 = vpop.f32.mrf.mxu0
      %v1422 = vadd.f32 0.0, %v1421
      %1423 = vmatmul.f32.gmra.mxu0 %v1360
      %v1424 = vpop.f32.mrf.mxu0
      %v1425 = vadd.f32 0.0, %v1424
      %1426 = vmatmul.f32.gmra.mxu0 %v1363
      %v1427 = vpop.f32.mrf.mxu0
      %v1428 = vadd.f32 0.0, %v1427
      %1429 = vmatmul.f32.gmra.mxu0 %v1366
      %v1430 = vpop.f32.mrf.mxu0
      %v1431 = vadd.f32 0.0, %v1430
      %1432 = vmatmul.f32.gmra.mxu0 %v1369
      %v1433 = vpop.f32.mrf.mxu0
      %v1434 = vadd.f32 0.0, %v1433
      %1435 = vmatmul.f32.gmra.mxu0 %v1372
      %v1436 = vpop.f32.mrf.mxu0
      %v1437 = vadd.f32 0.0, %v1436
      %1438 = vdwg.mxu0
      %v1440 = vsel %vm1325, %v468, 0
      %v1443 = vsel %vm1325, %v469, 0
      %v1446 = vsel %vm1325, %v470, 0
      %v1449 = vsel %vm1325, %v471, 0
      %v1452 = vsel %vm1325, %v472, 0
      %v1455 = vsel %vm1325, %v473, 0
      %v1458 = vsel %vm1325, %v474, 0
      %v1461 = vsel %vm1325, %v475, 0
      %v1464 = vsel %vm1325, %v476, 0
      %v1467 = vsel %vm1325, %v477, 0
      %v1470 = vsel %vm1325, %v478, 0
      %v1473 = vsel %vm1325, %v479, 0
      %v1476 = vsel %vm1325, %v480, 0
      %v1479 = vsel %vm1325, %v481, 0
      %v1482 = vsel %vm1325, %v482, 0
      %v1485 = vsel %vm1325, %v483, 0
      %1487 = vmatpush.msra.mxu0 0.0
      %1488 = vmatpush.msra.mxu0 0.0
      %1489 = vmatpush.msra.mxu0 0.0
      %1490 = vmatpush.msra.mxu0 0.0
      %1491 = vmatpush.msra.mxu0 0.0
      %1492 = vmatpush.msra.mxu0 0.0
      %1493 = vmatpush.msra.mxu0 0.0
      %1494 = vmatpush.msra.mxu0 0.0
      %1495 = vmatpush.msra.mxu0 0.0
      %1496 = vmatpush.msra.mxu0 0.0
      %1497 = vmatpush.msra.mxu0 0.0
      %1498 = vmatpush.msra.mxu0 0.0
      %1499 = vmatpush.msra.mxu0 0.0
      %1500 = vmatpush.msra.mxu0 0.0
      %1501 = vmatpush.msra.mxu0 0.0
      %1502 = vmatpush.msra.mxu0 %v1312
      %1503 = vmatmul.f32.gmra.mxu0 %v1440
      %v1504 = vpop.f32.mrf.mxu0
      %v1505 = vadd.f32 0.0, %v1504
      %1506 = vmatmul.f32.gmra.mxu0 %v1443
      %v1507 = vpop.f32.mrf.mxu0
      %v1508 = vadd.f32 0.0, %v1507
      %1509 = vmatmul.f32.gmra.mxu0 %v1446
      %v1510 = vpop.f32.mrf.mxu0
      %v1511 = vadd.f32 0.0, %v1510
      %1512 = vmatmul.f32.gmra.mxu0 %v1449
      %v1513 = vpop.f32.mrf.mxu0
      %v1514 = vadd.f32 0.0, %v1513
      %1515 = vmatmul.f32.gmra.mxu0 %v1452
      %v1516 = vpop.f32.mrf.mxu0
      %v1517 = vadd.f32 0.0, %v1516
      %1518 = vmatmul.f32.gmra.mxu0 %v1455
      %v1519 = vpop.f32.mrf.mxu0
      %v1520 = vadd.f32 0.0, %v1519
      %1521 = vmatmul.f32.gmra.mxu0 %v1458
      %v1522 = vpop.f32.mrf.mxu0
      %v1523 = vadd.f32 0.0, %v1522
      %1524 = vmatmul.f32.gmra.mxu0 %v1461
      %v1525 = vpop.f32.mrf.mxu0
      %v1526 = vadd.f32 0.0, %v1525
      %1527 = vmatmul.f32.gmra.mxu0 %v1464
      %v1528 = vpop.f32.mrf.mxu0
      %v1529 = vadd.f32 0.0, %v1528
      %1530 = vmatmul.f32.gmra.mxu0 %v1467
      %v1531 = vpop.f32.mrf.mxu0
      %v1532 = vadd.f32 0.0, %v1531
      %1533 = vmatmul.f32.gmra.mxu0 %v1470
      %v1534 = vpop.f32.mrf.mxu0
      %v1535 = vadd.f32 0.0, %v1534
      %1536 = vmatmul.f32.gmra.mxu0 %v1473
      %v1537 = vpop.f32.mrf.mxu0
      %v1538 = vadd.f32 0.0, %v1537
      %1539 = vmatmul.f32.gmra.mxu0 %v1476
      %v1540 = vpop.f32.mrf.mxu0
      %v1541 = vadd.f32 0.0, %v1540
      %1542 = vmatmul.f32.gmra.mxu0 %v1479
      %v1543 = vpop.f32.mrf.mxu0
      %v1544 = vadd.f32 0.0, %v1543
      %1545 = vmatmul.f32.gmra.mxu0 %v1482
      %v1546 = vpop.f32.mrf.mxu0
      %v1547 = vadd.f32 0.0, %v1546
      %1548 = vmatmul.f32.gmra.mxu0 %v1485
      %v1549 = vpop.f32.mrf.mxu0
      %v1550 = vadd.f32 0.0, %v1549
      %1551 = vdwg.mxu0
      %v1553 = vsel %vm1325, %v484, 0
      %v1556 = vsel %vm1325, %v485, 0
      %v1559 = vsel %vm1325, %v486, 0
      %v1562 = vsel %vm1325, %v487, 0
      %v1565 = vsel %vm1325, %v488, 0
      %v1568 = vsel %vm1325, %v489, 0
      %v1571 = vsel %vm1325, %v490, 0
      %v1574 = vsel %vm1325, %v491, 0
      %v1577 = vsel %vm1325, %v492, 0
      %v1580 = vsel %vm1325, %v493, 0
      %v1583 = vsel %vm1325, %v494, 0
      %v1586 = vsel %vm1325, %v495, 0
      %v1589 = vsel %vm1325, %v496, 0
      %v1592 = vsel %vm1325, %v497, 0
      %v1595 = vsel %vm1325, %v498, 0
      %v1598 = vsel %vm1325, %v499, 0
      %1600 = vmatpush.msra.mxu0 0.0
      %1601 = vmatpush.msra.mxu0 0.0
      %1602 = vmatpush.msra.mxu0 0.0
      %1603 = vmatpush.msra.mxu0 0.0
      %1604 = vmatpush.msra.mxu0 0.0
      %1605 = vmatpush.msra.mxu0 0.0
      %1606 = vmatpush.msra.mxu0 0.0
      %1607 = vmatpush.msra.mxu0 0.0
      %1608 = vmatpush.msra.mxu0 0.0
      %1609 = vmatpush.msra.mxu0 0.0
      %1610 = vmatpush.msra.mxu0 0.0
      %1611 = vmatpush.msra.mxu0 0.0
      %1612 = vmatpush.msra.mxu0 0.0
      %1613 = vmatpush.msra.mxu0 0.0
      %1614 = vmatpush.msra.mxu0 0.0
      %1615 = vmatpush.msra.mxu0 %v1314
      %1616 = vmatmul.f32.gmra.mxu0 %v1553
      %v1617 = vpop.f32.mrf.mxu0
      %v1618 = vadd.f32 0.0, %v1617
      %1619 = vmatmul.f32.gmra.mxu0 %v1556
      %v1620 = vpop.f32.mrf.mxu0
      %v1621 = vadd.f32 0.0, %v1620
      %1622 = vmatmul.f32.gmra.mxu0 %v1559
      %v1623 = vpop.f32.mrf.mxu0
      %v1624 = vadd.f32 0.0, %v1623
      %1625 = vmatmul.f32.gmra.mxu0 %v1562
      %v1626 = vpop.f32.mrf.mxu0
      %v1627 = vadd.f32 0.0, %v1626
      %1628 = vmatmul.f32.gmra.mxu0 %v1565
      %v1629 = vpop.f32.mrf.mxu0
      %v1630 = vadd.f32 0.0, %v1629
      %1631 = vmatmul.f32.gmra.mxu0 %v1568
      %v1632 = vpop.f32.mrf.mxu0
      %v1633 = vadd.f32 0.0, %v1632
      %1634 = vmatmul.f32.gmra.mxu0 %v1571
      %v1635 = vpop.f32.mrf.mxu0
      %v1636 = vadd.f32 0.0, %v1635
      %1637 = vmatmul.f32.gmra.mxu0 %v1574
      %v1638 = vpop.f32.mrf.mxu0
      %v1639 = vadd.f32 0.0, %v1638
      %1640 = vmatmul.f32.gmra.mxu0 %v1577
      %v1641 = vpop.f32.mrf.mxu0
      %v1642 = vadd.f32 0.0, %v1641
      %1643 = vmatmul.f32.gmra.mxu0 %v1580
      %v1644 = vpop.f32.mrf.mxu0
      %v1645 = vadd.f32 0.0, %v1644
      %1646 = vmatmul.f32.gmra.mxu0 %v1583
      %v1647 = vpop.f32.mrf.mxu0
      %v1648 = vadd.f32 0.0, %v1647
      %1649 = vmatmul.f32.gmra.mxu0 %v1586
      %v1650 = vpop.f32.mrf.mxu0
      %v1651 = vadd.f32 0.0, %v1650
      %1652 = vmatmul.f32.gmra.mxu0 %v1589
      %v1653 = vpop.f32.mrf.mxu0
      %v1654 = vadd.f32 0.0, %v1653
      %1655 = vmatmul.f32.gmra.mxu0 %v1592
      %v1656 = vpop.f32.mrf.mxu0
      %v1657 = vadd.f32 0.0, %v1656
      %1658 = vmatmul.f32.gmra.mxu0 %v1595
      %v1659 = vpop.f32.mrf.mxu0
      %v1660 = vadd.f32 0.0, %v1659
      %1661 = vmatmul.f32.gmra.mxu0 %v1598
      %v1662 = vpop.f32.mrf.mxu0
      %v1663 = vadd.f32 0.0, %v1662
      %1664 = vdwg.mxu0
      %v1666 = vsel %vm1325, %v500, 0
      %v1669 = vsel %vm1325, %v501, 0
      %v1672 = vsel %vm1325, %v502, 0
      %v1675 = vsel %vm1325, %v503, 0
      %v1678 = vsel %vm1325, %v504, 0
      %v1681 = vsel %vm1325, %v505, 0
      %v1684 = vsel %vm1325, %v506, 0
      %v1687 = vsel %vm1325, %v507, 0
      %v1690 = vsel %vm1325, %v508, 0
      %v1693 = vsel %vm1325, %v509, 0
      %v1696 = vsel %vm1325, %v510, 0
      %v1699 = vsel %vm1325, %v511, 0
      %v1702 = vsel %vm1325, %v512, 0
      %v1705 = vsel %vm1325, %v513, 0
      %v1708 = vsel %vm1325, %v514, 0
      %v1711 = vsel %vm1325, %v515, 0
      %1713 = vmatpush.msra.mxu0 0.0
      %1714 = vmatpush.msra.mxu0 0.0
      %1715 = vmatpush.msra.mxu0 0.0
      %1716 = vmatpush.msra.mxu0 0.0
      %1717 = vmatpush.msra.mxu0 0.0
      %1718 = vmatpush.msra.mxu0 0.0
      %1719 = vmatpush.msra.mxu0 0.0
      %1720 = vmatpush.msra.mxu0 0.0
      %1721 = vmatpush.msra.mxu0 0.0
      %1722 = vmatpush.msra.mxu0 0.0
      %1723 = vmatpush.msra.mxu0 0.0
      %1724 = vmatpush.msra.mxu0 0.0
      %1725 = vmatpush.msra.mxu0 0.0
      %1726 = vmatpush.msra.mxu0 0.0
      %1727 = vmatpush.msra.mxu0 0.0
      %1728 = vmatpush.msra.mxu0 %v1316
      %1729 = vmatmul.f32.gmra.mxu0 %v1666
      %v1730 = vpop.f32.mrf.mxu0
      %v1731 = vadd.f32 0.0, %v1730
      %1732 = vmatmul.f32.gmra.mxu0 %v1669
      %v1733 = vpop.f32.mrf.mxu0
      %v1734 = vadd.f32 0.0, %v1733
      %1735 = vmatmul.f32.gmra.mxu0 %v1672
      %v1736 = vpop.f32.mrf.mxu0
      %v1737 = vadd.f32 0.0, %v1736
      %1738 = vmatmul.f32.gmra.mxu0 %v1675
      %v1739 = vpop.f32.mrf.mxu0
      %v1740 = vadd.f32 0.0, %v1739
      %1741 = vmatmul.f32.gmra.mxu0 %v1678
      %v1742 = vpop.f32.mrf.mxu0
      %v1743 = vadd.f32 0.0, %v1742
      %1744 = vmatmul.f32.gmra.mxu0 %v1681
      %v1745 = vpop.f32.mrf.mxu0
      %v1746 = vadd.f32 0.0, %v1745
      %1747 = vmatmul.f32.gmra.mxu0 %v1684
      %v1748 = vpop.f32.mrf.mxu0
      %v1749 = vadd.f32 0.0, %v1748
      %1750 = vmatmul.f32.gmra.mxu0 %v1687
      %v1751 = vpop.f32.mrf.mxu0
      %v1752 = vadd.f32 0.0, %v1751
      %1753 = vmatmul.f32.gmra.mxu0 %v1690
      %v1754 = vpop.f32.mrf.mxu0
      %v1755 = vadd.f32 0.0, %v1754
      %1756 = vmatmul.f32.gmra.mxu0 %v1693
      %v1757 = vpop.f32.mrf.mxu0
      %v1758 = vadd.f32 0.0, %v1757
      %1759 = vmatmul.f32.gmra.mxu0 %v1696
      %v1760 = vpop.f32.mrf.mxu0
      %v1761 = vadd.f32 0.0, %v1760
      %1762 = vmatmul.f32.gmra.mxu0 %v1699
      %v1763 = vpop.f32.mrf.mxu0
      %v1764 = vadd.f32 0.0, %v1763
      %1765 = vmatmul.f32.gmra.mxu0 %v1702
      %v1766 = vpop.f32.mrf.mxu0
      %v1767 = vadd.f32 0.0, %v1766
      %1768 = vmatmul.f32.gmra.mxu0 %v1705
      %v1769 = vpop.f32.mrf.mxu0
      %v1770 = vadd.f32 0.0, %v1769
      %1771 = vmatmul.f32.gmra.mxu0 %v1708
      %v1772 = vpop.f32.mrf.mxu0
      %v1773 = vadd.f32 0.0, %v1772
      %1774 = vmatmul.f32.gmra.mxu0 %v1711
      %v1775 = vpop.f32.mrf.mxu0
      %v1776 = vadd.f32 0.0, %v1775
      %1777 = vdwg.mxu0
      %v1779 = vsel %vm1325, %v516, 0
      %v1782 = vsel %vm1325, %v517, 0
      %v1785 = vsel %vm1325, %v518, 0
      %v1788 = vsel %vm1325, %v519, 0
      %v1791 = vsel %vm1325, %v520, 0
      %v1794 = vsel %vm1325, %v521, 0
      %v1797 = vsel %vm1325, %v522, 0
      %v1800 = vsel %vm1325, %v523, 0
      %v1803 = vsel %vm1325, %v524, 0
      %v1806 = vsel %vm1325, %v525, 0
      %v1809 = vsel %vm1325, %v526, 0
      %v1812 = vsel %vm1325, %v527, 0
      %v1815 = vsel %vm1325, %v528, 0
      %v1818 = vsel %vm1325, %v529, 0
      %v1821 = vsel %vm1325, %v530, 0
      %v1824 = vsel %vm1325, %v531, 0
      %1826 = vmatpush.msra.mxu0 0.0
      %1827 = vmatpush.msra.mxu0 0.0
      %1828 = vmatpush.msra.mxu0 0.0
      %1829 = vmatpush.msra.mxu0 0.0
      %1830 = vmatpush.msra.mxu0 0.0
      %1831 = vmatpush.msra.mxu0 0.0
      %1832 = vmatpush.msra.mxu0 0.0
      %1833 = vmatpush.msra.mxu0 0.0
      %1834 = vmatpush.msra.mxu0 0.0
      %1835 = vmatpush.msra.mxu0 0.0
      %1836 = vmatpush.msra.mxu0 0.0
      %1837 = vmatpush.msra.mxu0 0.0
      %1838 = vmatpush.msra.mxu0 0.0
      %1839 = vmatpush.msra.mxu0 0.0
      %1840 = vmatpush.msra.mxu0 0.0
      %1841 = vmatpush.msra.mxu0 %v1318
      %1842 = vmatmul.f32.gmra.mxu0 %v1779
      %v1843 = vpop.f32.mrf.mxu0
      %v1844 = vadd.f32 0.0, %v1843
      %1845 = vmatmul.f32.gmra.mxu0 %v1782
      %v1846 = vpop.f32.mrf.mxu0
      %v1847 = vadd.f32 0.0, %v1846
      %1848 = vmatmul.f32.gmra.mxu0 %v1785
      %v1849 = vpop.f32.mrf.mxu0
      %v1850 = vadd.f32 0.0, %v1849
      %1851 = vmatmul.f32.gmra.mxu0 %v1788
      %v1852 = vpop.f32.mrf.mxu0
      %v1853 = vadd.f32 0.0, %v1852
      %1854 = vmatmul.f32.gmra.mxu0 %v1791
      %v1855 = vpop.f32.mrf.mxu0
      %v1856 = vadd.f32 0.0, %v1855
      %1857 = vmatmul.f32.gmra.mxu0 %v1794
      %v1858 = vpop.f32.mrf.mxu0
      %v1859 = vadd.f32 0.0, %v1858
      %1860 = vmatmul.f32.gmra.mxu0 %v1797
      %v1861 = vpop.f32.mrf.mxu0
      %v1862 = vadd.f32 0.0, %v1861
      %1863 = vmatmul.f32.gmra.mxu0 %v1800
      %v1864 = vpop.f32.mrf.mxu0
      %v1865 = vadd.f32 0.0, %v1864
      %1866 = vmatmul.f32.gmra.mxu0 %v1803
      %v1867 = vpop.f32.mrf.mxu0
      %v1868 = vadd.f32 0.0, %v1867
      %1869 = vmatmul.f32.gmra.mxu0 %v1806
      %v1870 = vpop.f32.mrf.mxu0
      %v1871 = vadd.f32 0.0, %v1870
      %1872 = vmatmul.f32.gmra.mxu0 %v1809
      %v1873 = vpop.f32.mrf.mxu0
      %v1874 = vadd.f32 0.0, %v1873
      %1875 = vmatmul.f32.gmra.mxu0 %v1812
      %v1876 = vpop.f32.mrf.mxu0
      %v1877 = vadd.f32 0.0, %v1876
      %1878 = vmatmul.f32.gmra.mxu0 %v1815
      %v1879 = vpop.f32.mrf.mxu0
      %v1880 = vadd.f32 0.0, %v1879
      %1881 = vmatmul.f32.gmra.mxu0 %v1818
      %v1882 = vpop.f32.mrf.mxu0
      %v1883 = vadd.f32 0.0, %v1882
      %1884 = vmatmul.f32.gmra.mxu0 %v1821
      %v1885 = vpop.f32.mrf.mxu0
      %v1886 = vadd.f32 0.0, %v1885
      %1887 = vmatmul.f32.gmra.mxu0 %v1824
      %v1888 = vpop.f32.mrf.mxu0
      %v1889 = vadd.f32 0.0, %v1888
      %1890 = vdwg.mxu0
      %v1892 = vsel %vm1325, %v532, 0
      %v1895 = vsel %vm1325, %v533, 0
      %v1898 = vsel %vm1325, %v534, 0
      %v1901 = vsel %vm1325, %v535, 0
      %v1904 = vsel %vm1325, %v536, 0
      %v1907 = vsel %vm1325, %v537, 0
      %v1910 = vsel %vm1325, %v538, 0
      %v1913 = vsel %vm1325, %v539, 0
      %v1916 = vsel %vm1325, %v540, 0
      %v1919 = vsel %vm1325, %v541, 0
      %v1922 = vsel %vm1325, %v542, 0
      %v1925 = vsel %vm1325, %v543, 0
      %v1928 = vsel %vm1325, %v544, 0
      %v1931 = vsel %vm1325, %v545, 0
      %v1934 = vsel %vm1325, %v546, 0
      %v1937 = vsel %vm1325, %v547, 0
      %1939 = vmatpush.msra.mxu0 0.0
      %1940 = vmatpush.msra.mxu0 0.0
      %1941 = vmatpush.msra.mxu0 0.0
      %1942 = vmatpush.msra.mxu0 0.0
      %1943 = vmatpush.msra.mxu0 0.0
      %1944 = vmatpush.msra.mxu0 0.0
      %1945 = vmatpush.msra.mxu0 0.0
      %1946 = vmatpush.msra.mxu0 0.0
      %1947 = vmatpush.msra.mxu0 0.0
      %1948 = vmatpush.msra.mxu0 0.0
      %1949 = vmatpush.msra.mxu0 0.0
      %1950 = vmatpush.msra.mxu0 0.0
      %1951 = vmatpush.msra.mxu0 0.0
      %1952 = vmatpush.msra.mxu0 0.0
      %1953 = vmatpush.msra.mxu0 0.0
      %1954 = vmatpush.msra.mxu0 %v1320
      %1955 = vmatmul.f32.gmra.mxu0 %v1892
      %v1956 = vpop.f32.mrf.mxu0
      %v1957 = vadd.f32 0.0, %v1956
      %1958 = vmatmul.f32.gmra.mxu0 %v1895
      %v1959 = vpop.f32.mrf.mxu0
      %v1960 = vadd.f32 0.0, %v1959
      %1961 = vmatmul.f32.gmra.mxu0 %v1898
      %v1962 = vpop.f32.mrf.mxu0
      %v1963 = vadd.f32 0.0, %v1962
      %1964 = vmatmul.f32.gmra.mxu0 %v1901
      %v1965 = vpop.f32.mrf.mxu0
      %v1966 = vadd.f32 0.0, %v1965
      %1967 = vmatmul.f32.gmra.mxu0 %v1904
      %v1968 = vpop.f32.mrf.mxu0
      %v1969 = vadd.f32 0.0, %v1968
      %1970 = vmatmul.f32.gmra.mxu0 %v1907
      %v1971 = vpop.f32.mrf.mxu0
      %v1972 = vadd.f32 0.0, %v1971
      %1973 = vmatmul.f32.gmra.mxu0 %v1910
      %v1974 = vpop.f32.mrf.mxu0
      %v1975 = vadd.f32 0.0, %v1974
      %1976 = vmatmul.f32.gmra.mxu0 %v1913
      %v1977 = vpop.f32.mrf.mxu0
      %v1978 = vadd.f32 0.0, %v1977
      %1979 = vmatmul.f32.gmra.mxu0 %v1916
      %v1980 = vpop.f32.mrf.mxu0
      %v1981 = vadd.f32 0.0, %v1980
      %1982 = vmatmul.f32.gmra.mxu0 %v1919
      %v1983 = vpop.f32.mrf.mxu0
      %v1984 = vadd.f32 0.0, %v1983
      %1985 = vmatmul.f32.gmra.mxu0 %v1922
      %v1986 = vpop.f32.mrf.mxu0
      %v1987 = vadd.f32 0.0, %v1986
      %1988 = vmatmul.f32.gmra.mxu0 %v1925
      %v1989 = vpop.f32.mrf.mxu0
      %v1990 = vadd.f32 0.0, %v1989
      %1991 = vmatmul.f32.gmra.mxu0 %v1928
      %v1992 = vpop.f32.mrf.mxu0
      %v1993 = vadd.f32 0.0, %v1992
      %1994 = vmatmul.f32.gmra.mxu0 %v1931
      %v1995 = vpop.f32.mrf.mxu0
      %v1996 = vadd.f32 0.0, %v1995
      %1997 = vmatmul.f32.gmra.mxu0 %v1934
      %v1998 = vpop.f32.mrf.mxu0
      %v1999 = vadd.f32 0.0, %v1998
      %2000 = vmatmul.f32.gmra.mxu0 %v1937
      %v2001 = vpop.f32.mrf.mxu0
      %v2002 = vadd.f32 0.0, %v2001
      %2003 = vdwg.mxu0
      %v2005 = vsel %vm1325, %v548, 0
      %v2008 = vsel %vm1325, %v549, 0
      %v2011 = vsel %vm1325, %v550, 0
      %v2014 = vsel %vm1325, %v551, 0
      %v2017 = vsel %vm1325, %v552, 0
      %v2020 = vsel %vm1325, %v553, 0
      %v2023 = vsel %vm1325, %v554, 0
      %v2026 = vsel %vm1325, %v555, 0
      %v2029 = vsel %vm1325, %v556, 0
      %v2032 = vsel %vm1325, %v557, 0
      %v2035 = vsel %vm1325, %v558, 0
      %v2038 = vsel %vm1325, %v559, 0
      %v2041 = vsel %vm1325, %v560, 0
      %v2044 = vsel %vm1325, %v561, 0
      %v2047 = vsel %vm1325, %v562, 0
      %v2050 = vsel %vm1325, %v563, 0
      %2052 = vmatpush.msra.mxu0 0.0
      %2053 = vmatpush.msra.mxu0 0.0
      %2054 = vmatpush.msra.mxu0 0.0
      %2055 = vmatpush.msra.mxu0 0.0
      %2056 = vmatpush.msra.mxu0 0.0
      %2057 = vmatpush.msra.mxu0 0.0
      %2058 = vmatpush.msra.mxu0 0.0
      %2059 = vmatpush.msra.mxu0 0.0
      %2060 = vmatpush.msra.mxu0 0.0
      %2061 = vmatpush.msra.mxu0 0.0
      %2062 = vmatpush.msra.mxu0 0.0
      %2063 = vmatpush.msra.mxu0 0.0
      %2064 = vmatpush.msra.mxu0 0.0
      %2065 = vmatpush.msra.mxu0 0.0
      %2066 = vmatpush.msra.mxu0 0.0
      %2067 = vmatpush.msra.mxu0 %v1322
      %2068 = vmatmul.f32.gmra.mxu0 %v2005
      %v2069 = vpop.f32.mrf.mxu0
      %v2070 = vadd.f32 0.0, %v2069
      %2071 = vmatmul.f32.gmra.mxu0 %v2008
      %v2072 = vpop.f32.mrf.mxu0
      %v2073 = vadd.f32 0.0, %v2072
      %2074 = vmatmul.f32.gmra.mxu0 %v2011
      %v2075 = vpop.f32.mrf.mxu0
      %v2076 = vadd.f32 0.0, %v2075
      %2077 = vmatmul.f32.gmra.mxu0 %v2014
      %v2078 = vpop.f32.mrf.mxu0
      %v2079 = vadd.f32 0.0, %v2078
      %2080 = vmatmul.f32.gmra.mxu0 %v2017
      %v2081 = vpop.f32.mrf.mxu0
      %v2082 = vadd.f32 0.0, %v2081
      %2083 = vmatmul.f32.gmra.mxu0 %v2020
      %v2084 = vpop.f32.mrf.mxu0
      %v2085 = vadd.f32 0.0, %v2084
      %2086 = vmatmul.f32.gmra.mxu0 %v2023
      %v2087 = vpop.f32.mrf.mxu0
      %v2088 = vadd.f32 0.0, %v2087
      %2089 = vmatmul.f32.gmra.mxu0 %v2026
      %v2090 = vpop.f32.mrf.mxu0
      %v2091 = vadd.f32 0.0, %v2090
      %2092 = vmatmul.f32.gmra.mxu0 %v2029
      %v2093 = vpop.f32.mrf.mxu0
      %v2094 = vadd.f32 0.0, %v2093
      %2095 = vmatmul.f32.gmra.mxu0 %v2032
      %v2096 = vpop.f32.mrf.mxu0
      %v2097 = vadd.f32 0.0, %v2096
      %2098 = vmatmul.f32.gmra.mxu0 %v2035
      %v2099 = vpop.f32.mrf.mxu0
      %v2100 = vadd.f32 0.0, %v2099
      %2101 = vmatmul.f32.gmra.mxu0 %v2038
      %v2102 = vpop.f32.mrf.mxu0
      %v2103 = vadd.f32 0.0, %v2102
      %2104 = vmatmul.f32.gmra.mxu0 %v2041
      %v2105 = vpop.f32.mrf.mxu0
      %v2106 = vadd.f32 0.0, %v2105
      %2107 = vmatmul.f32.gmra.mxu0 %v2044
      %v2108 = vpop.f32.mrf.mxu0
      %v2109 = vadd.f32 0.0, %v2108
      %2110 = vmatmul.f32.gmra.mxu0 %v2047
      %v2111 = vpop.f32.mrf.mxu0
      %v2112 = vadd.f32 0.0, %v2111
      %2113 = vmatmul.f32.gmra.mxu0 %v2050
      %v2114 = vpop.f32.mrf.mxu0
      %v2115 = vadd.f32 0.0, %v2114
      %2116 = vdwg.mxu0
      %v2118 = vsel %vm1325, %v564, 0
      %v2121 = vsel %vm1325, %v565, 0
      %v2124 = vsel %vm1325, %v566, 0
      %v2127 = vsel %vm1325, %v567, 0
      %v2130 = vsel %vm1325, %v568, 0
      %v2133 = vsel %vm1325, %v569, 0
      %v2136 = vsel %vm1325, %v570, 0
      %v2139 = vsel %vm1325, %v571, 0
      %v2142 = vsel %vm1325, %v572, 0
      %v2145 = vsel %vm1325, %v573, 0
      %v2148 = vsel %vm1325, %v574, 0
      %v2151 = vsel %vm1325, %v575, 0
      %v2154 = vsel %vm1325, %v576, 0
      %v2157 = vsel %vm1325, %v577, 0
      %v2160 = vsel %vm1325, %v578, 0
      %v2163 = vsel %vm1325, %v579, 0
      %2165 = vmatpush.msra.mxu0 0.0
      %2166 = vmatpush.msra.mxu0 0.0
      %2167 = vmatpush.msra.mxu0 0.0
      %2168 = vmatpush.msra.mxu0 0.0
      %2169 = vmatpush.msra.mxu0 0.0
      %2170 = vmatpush.msra.mxu0 0.0
      %2171 = vmatpush.msra.mxu0 0.0
      %2172 = vmatpush.msra.mxu0 0.0
      %2173 = vmatpush.msra.mxu0 0.0
      %2174 = vmatpush.msra.mxu0 0.0
      %2175 = vmatpush.msra.mxu0 0.0
      %2176 = vmatpush.msra.mxu0 0.0
      %2177 = vmatpush.msra.mxu0 0.0
      %2178 = vmatpush.msra.mxu0 0.0
      %2179 = vmatpush.msra.mxu0 0.0
      %2180 = vmatpush.msra.mxu0 %v1324
      %2181 = vmatmul.f32.gmra.mxu0 %v2118
      %v2182 = vpop.f32.mrf.mxu0
      %v2183 = vadd.f32 0.0, %v2182
      %2184 = vmatmul.f32.gmra.mxu0 %v2121
      %v2185 = vpop.f32.mrf.mxu0
      %v2186 = vadd.f32 0.0, %v2185
      %2187 = vmatmul.f32.gmra.mxu0 %v2124
      %v2188 = vpop.f32.mrf.mxu0
      %v2189 = vadd.f32 0.0, %v2188
      %2190 = vmatmul.f32.gmra.mxu0 %v2127
      %v2191 = vpop.f32.mrf.mxu0
      %v2192 = vadd.f32 0.0, %v2191
      %2193 = vmatmul.f32.gmra.mxu0 %v2130
      %v2194 = vpop.f32.mrf.mxu0
      %v2195 = vadd.f32 0.0, %v2194
      %2196 = vmatmul.f32.gmra.mxu0 %v2133
      %v2197 = vpop.f32.mrf.mxu0
      %v2198 = vadd.f32 0.0, %v2197
      %2199 = vmatmul.f32.gmra.mxu0 %v2136
      %v2200 = vpop.f32.mrf.mxu0
      %v2201 = vadd.f32 0.0, %v2200
      %2202 = vmatmul.f32.gmra.mxu0 %v2139
      %v2203 = vpop.f32.mrf.mxu0
      %v2204 = vadd.f32 0.0, %v2203
      %2205 = vmatmul.f32.gmra.mxu0 %v2142
      %v2206 = vpop.f32.mrf.mxu0
      %v2207 = vadd.f32 0.0, %v2206
      %2208 = vmatmul.f32.gmra.mxu0 %v2145
      %v2209 = vpop.f32.mrf.mxu0
      %v2210 = vadd.f32 0.0, %v2209
      %2211 = vmatmul.f32.gmra.mxu0 %v2148
      %v2212 = vpop.f32.mrf.mxu0
      %v2213 = vadd.f32 0.0, %v2212
      %2214 = vmatmul.f32.gmra.mxu0 %v2151
      %v2215 = vpop.f32.mrf.mxu0
      %v2216 = vadd.f32 0.0, %v2215
      %2217 = vmatmul.f32.gmra.mxu0 %v2154
      %v2218 = vpop.f32.mrf.mxu0
      %v2219 = vadd.f32 0.0, %v2218
      %2220 = vmatmul.f32.gmra.mxu0 %v2157
      %v2221 = vpop.f32.mrf.mxu0
      %v2222 = vadd.f32 0.0, %v2221
      %2223 = vmatmul.f32.gmra.mxu0 %v2160
      %v2224 = vpop.f32.mrf.mxu0
      %v2225 = vadd.f32 0.0, %v2224
      %2226 = vmatmul.f32.gmra.mxu0 %v2163
      %v2227 = vpop.f32.mrf.mxu0
      %v2228 = vadd.f32 0.0, %v2227
      %2229 = vdwg.mxu0
      %2230 = vxpose.xlu0.b32.start [1/16] %v1392, 128
      %2231 = vxpose.xlu0.b32.cont [2/16] %v1395, 128
      %2232 = vxpose.xlu0.b32.cont [3/16] %v1398, 128
      %2233 = vxpose.xlu0.b32.cont [4/16] %v1401, 128
      %2234 = vxpose.xlu0.b32.cont [5/16] %v1404, 128
      %2235 = vxpose.xlu0.b32.cont [6/16] %v1407, 128
      %2236 = vxpose.xlu0.b32.cont [7/16] %v1410, 128
      %2237 = vxpose.xlu0.b32.cont [8/16] %v1413, 128
      %2238 = vxpose.xlu0.b32.cont [9/16] %v1416, 128
      %2239 = vxpose.xlu0.b32.cont [10/16] %v1419, 128
      %2240 = vxpose.xlu0.b32.cont [11/16] %v1422, 128
      %2241 = vxpose.xlu0.b32.cont [12/16] %v1425, 128
      %2242 = vxpose.xlu0.b32.cont [13/16] %v1428, 128
      %2243 = vxpose.xlu0.b32.cont [14/16] %v1431, 128
      %2244 = vxpose.xlu0.b32.cont [15/16] %v1434, 128
      %2245 = vxpose.xlu0.b32.end [16/16] %v1437, 128
      %v2246 = vpop.trf.xlu0
      %v2247 = vpop.trf.xlu0
      %v2248 = vpop.trf.xlu0
      %v2249 = vpop.trf.xlu0
      %v2250 = vpop.trf.xlu0
      %v2251 = vpop.trf.xlu0
      %v2252 = vpop.trf.xlu0
      %v2253 = vpop.trf.xlu0
      %v2254 = vpop.trf.xlu0
      %v2255 = vpop.trf.xlu0
      %v2256 = vpop.trf.xlu0
      %v2257 = vpop.trf.xlu0
      %v2258 = vpop.trf.xlu0
      %v2259 = vpop.trf.xlu0
      %v2260 = vpop.trf.xlu0
      %v2261 = vpop.trf.xlu0
      %2262 = vxpose.xlu0.b32.start [1/16] %v1505, 128
      %2263 = vxpose.xlu0.b32.cont [2/16] %v1508, 128
      %2264 = vxpose.xlu0.b32.cont [3/16] %v1511, 128
      %2265 = vxpose.xlu0.b32.cont [4/16] %v1514, 128
      %2266 = vxpose.xlu0.b32.cont [5/16] %v1517, 128
      %2267 = vxpose.xlu0.b32.cont [6/16] %v1520, 128
      %2268 = vxpose.xlu0.b32.cont [7/16] %v1523, 128
      %2269 = vxpose.xlu0.b32.cont [8/16] %v1526, 128
      %2270 = vxpose.xlu0.b32.cont [9/16] %v1529, 128
      %2271 = vxpose.xlu0.b32.cont [10/16] %v1532, 128
      %2272 = vxpose.xlu0.b32.cont [11/16] %v1535, 128
      %2273 = vxpose.xlu0.b32.cont [12/16] %v1538, 128
      %2274 = vxpose.xlu0.b32.cont [13/16] %v1541, 128
      %2275 = vxpose.xlu0.b32.cont [14/16] %v1544, 128
      %2276 = vxpose.xlu0.b32.cont [15/16] %v1547, 128
      %2277 = vxpose.xlu0.b32.end [16/16] %v1550, 128
      %v2278 = vpop.trf.xlu0
      %v2279 = vpop.trf.xlu0
      %v2280 = vpop.trf.xlu0
      %v2281 = vpop.trf.xlu0
      %v2282 = vpop.trf.xlu0
      %v2283 = vpop.trf.xlu0
      %v2284 = vpop.trf.xlu0
      %v2285 = vpop.trf.xlu0
      %v2286 = vpop.trf.xlu0
      %v2287 = vpop.trf.xlu0
      %v2288 = vpop.trf.xlu0
      %v2289 = vpop.trf.xlu0
      %v2290 = vpop.trf.xlu0
      %v2291 = vpop.trf.xlu0
      %v2292 = vpop.trf.xlu0
      %v2293 = vpop.trf.xlu0
      %2294 = vxpose.xlu0.b32.start [1/16] %v1618, 128
      %2295 = vxpose.xlu0.b32.cont [2/16] %v1621, 128
      %2296 = vxpose.xlu0.b32.cont [3/16] %v1624, 128
      %2297 = vxpose.xlu0.b32.cont [4/16] %v1627, 128
      %2298 = vxpose.xlu0.b32.cont [5/16] %v1630, 128
      %2299 = vxpose.xlu0.b32.cont [6/16] %v1633, 128
      %2300 = vxpose.xlu0.b32.cont [7/16] %v1636, 128
      %2301 = vxpose.xlu0.b32.cont [8/16] %v1639, 128
      %2302 = vxpose.xlu0.b32.cont [9/16] %v1642, 128
      %2303 = vxpose.xlu0.b32.cont [10/16] %v1645, 128
      %2304 = vxpose.xlu0.b32.cont [11/16] %v1648, 128
      %2305 = vxpose.xlu0.b32.cont [12/16] %v1651, 128
      %2306 = vxpose.xlu0.b32.cont [13/16] %v1654, 128
      %2307 = vxpose.xlu0.b32.cont [14/16] %v1657, 128
      %2308 = vxpose.xlu0.b32.cont [15/16] %v1660, 128
      %2309 = vxpose.xlu0.b32.end [16/16] %v1663, 128
      %v2310 = vpop.trf.xlu0
      %v2311 = vpop.trf.xlu0
      %v2312 = vpop.trf.xlu0
      %v2313 = vpop.trf.xlu0
      %v2314 = vpop.trf.xlu0
      %v2315 = vpop.trf.xlu0
      %v2316 = vpop.trf.xlu0
      %v2317 = vpop.trf.xlu0
      %v2318 = vpop.trf.xlu0
      %v2319 = vpop.trf.xlu0
      %v2320 = vpop.trf.xlu0
      %v2321 = vpop.trf.xlu0
      %v2322 = vpop.trf.xlu0
      %v2323 = vpop.trf.xlu0
      %v2324 = vpop.trf.xlu0
      %v2325 = vpop.trf.xlu0
      %2326 = vxpose.xlu0.b32.start [1/16] %v1731, 128
      %2327 = vxpose.xlu0.b32.cont [2/16] %v1734, 128
      %2328 = vxpose.xlu0.b32.cont [3/16] %v1737, 128
      %2329 = vxpose.xlu0.b32.cont [4/16] %v1740, 128
      %2330 = vxpose.xlu0.b32.cont [5/16] %v1743, 128
      %2331 = vxpose.xlu0.b32.cont [6/16] %v1746, 128
      %2332 = vxpose.xlu0.b32.cont [7/16] %v1749, 128
      %2333 = vxpose.xlu0.b32.cont [8/16] %v1752, 128
      %2334 = vxpose.xlu0.b32.cont [9/16] %v1755, 128
      %2335 = vxpose.xlu0.b32.cont [10/16] %v1758, 128
      %2336 = vxpose.xlu0.b32.cont [11/16] %v1761, 128
      %2337 = vxpose.xlu0.b32.cont [12/16] %v1764, 128
      %2338 = vxpose.xlu0.b32.cont [13/16] %v1767, 128
      %2339 = vxpose.xlu0.b32.cont [14/16] %v1770, 128
      %2340 = vxpose.xlu0.b32.cont [15/16] %v1773, 128
      %2341 = vxpose.xlu0.b32.end [16/16] %v1776, 128
      %v2342 = vpop.trf.xlu0
      %v2343 = vpop.trf.xlu0
      %v2344 = vpop.trf.xlu0
      %v2345 = vpop.trf.xlu0
      %v2346 = vpop.trf.xlu0
      %v2347 = vpop.trf.xlu0
      %v2348 = vpop.trf.xlu0
      %v2349 = vpop.trf.xlu0
      %v2350 = vpop.trf.xlu0
      %v2351 = vpop.trf.xlu0
      %v2352 = vpop.trf.xlu0
      %v2353 = vpop.trf.xlu0
      %v2354 = vpop.trf.xlu0
      %v2355 = vpop.trf.xlu0
      %v2356 = vpop.trf.xlu0
      %v2357 = vpop.trf.xlu0
      %2358 = vxpose.xlu0.b32.start [1/16] %v1844, 128
      %2359 = vxpose.xlu0.b32.cont [2/16] %v1847, 128
      %2360 = vxpose.xlu0.b32.cont [3/16] %v1850, 128
      %2361 = vxpose.xlu0.b32.cont [4/16] %v1853, 128
      %2362 = vxpose.xlu0.b32.cont [5/16] %v1856, 128
      %2363 = vxpose.xlu0.b32.cont [6/16] %v1859, 128
      %2364 = vxpose.xlu0.b32.cont [7/16] %v1862, 128
      %2365 = vxpose.xlu0.b32.cont [8/16] %v1865, 128
      %2366 = vxpose.xlu0.b32.cont [9/16] %v1868, 128
      %2367 = vxpose.xlu0.b32.cont [10/16] %v1871, 128
      %2368 = vxpose.xlu0.b32.cont [11/16] %v1874, 128
      %2369 = vxpose.xlu0.b32.cont [12/16] %v1877, 128
      %2370 = vxpose.xlu0.b32.cont [13/16] %v1880, 128
      %2371 = vxpose.xlu0.b32.cont [14/16] %v1883, 128
      %2372 = vxpose.xlu0.b32.cont [15/16] %v1886, 128
      %2373 = vxpose.xlu0.b32.end [16/16] %v1889, 128
      %v2374 = vpop.trf.xlu0
      %v2375 = vpop.trf.xlu0
      %v2376 = vpop.trf.xlu0
      %v2377 = vpop.trf.xlu0
      %v2378 = vpop.trf.xlu0
      %v2379 = vpop.trf.xlu0
      %v2380 = vpop.trf.xlu0
      %v2381 = vpop.trf.xlu0
      %v2382 = vpop.trf.xlu0
      %v2383 = vpop.trf.xlu0
      %v2384 = vpop.trf.xlu0
      %v2385 = vpop.trf.xlu0
      %v2386 = vpop.trf.xlu0
      %v2387 = vpop.trf.xlu0
      %v2388 = vpop.trf.xlu0
      %v2389 = vpop.trf.xlu0
      %2390 = vxpose.xlu0.b32.start [1/16] %v1957, 128
      %2391 = vxpose.xlu0.b32.cont [2/16] %v1960, 128
      %2392 = vxpose.xlu0.b32.cont [3/16] %v1963, 128
      %2393 = vxpose.xlu0.b32.cont [4/16] %v1966, 128
      %2394 = vxpose.xlu0.b32.cont [5/16] %v1969, 128
      %2395 = vxpose.xlu0.b32.cont [6/16] %v1972, 128
      %2396 = vxpose.xlu0.b32.cont [7/16] %v1975, 128
      %2397 = vxpose.xlu0.b32.cont [8/16] %v1978, 128
      %2398 = vxpose.xlu0.b32.cont [9/16] %v1981, 128
      %2399 = vxpose.xlu0.b32.cont [10/16] %v1984, 128
      %2400 = vxpose.xlu0.b32.cont [11/16] %v1987, 128
      %2401 = vxpose.xlu0.b32.cont [12/16] %v1990, 128
      %2402 = vxpose.xlu0.b32.cont [13/16] %v1993, 128
      %2403 = vxpose.xlu0.b32.cont [14/16] %v1996, 128
      %2404 = vxpose.xlu0.b32.cont [15/16] %v1999, 128
      %2405 = vxpose.xlu0.b32.end [16/16] %v2002, 128
      %v2406 = vpop.trf.xlu0
      %v2407 = vpop.trf.xlu0
      %v2408 = vpop.trf.xlu0
      %v2409 = vpop.trf.xlu0
      %v2410 = vpop.trf.xlu0
      %v2411 = vpop.trf.xlu0
      %v2412 = vpop.trf.xlu0
      %v2413 = vpop.trf.xlu0
      %v2414 = vpop.trf.xlu0
      %v2415 = vpop.trf.xlu0
      %v2416 = vpop.trf.xlu0
      %v2417 = vpop.trf.xlu0
      %v2418 = vpop.trf.xlu0
      %v2419 = vpop.trf.xlu0
      %v2420 = vpop.trf.xlu0
      %v2421 = vpop.trf.xlu0
      %2422 = vxpose.xlu0.b32.start [1/16] %v2070, 128
      %2423 = vxpose.xlu0.b32.cont [2/16] %v2073, 128
      %2424 = vxpose.xlu0.b32.cont [3/16] %v2076, 128
      %2425 = vxpose.xlu0.b32.cont [4/16] %v2079, 128
      %2426 = vxpose.xlu0.b32.cont [5/16] %v2082, 128
      %2427 = vxpose.xlu0.b32.cont [6/16] %v2085, 128
      %2428 = vxpose.xlu0.b32.cont [7/16] %v2088, 128
      %2429 = vxpose.xlu0.b32.cont [8/16] %v2091, 128
      %2430 = vxpose.xlu0.b32.cont [9/16] %v2094, 128
      %2431 = vxpose.xlu0.b32.cont [10/16] %v2097, 128
      %2432 = vxpose.xlu0.b32.cont [11/16] %v2100, 128
      %2433 = vxpose.xlu0.b32.cont [12/16] %v2103, 128
      %2434 = vxpose.xlu0.b32.cont [13/16] %v2106, 128
      %2435 = vxpose.xlu0.b32.cont [14/16] %v2109, 128
      %2436 = vxpose.xlu0.b32.cont [15/16] %v2112, 128
      %2437 = vxpose.xlu0.b32.end [16/16] %v2115, 128
      %v2438 = vpop.trf.xlu0
      %v2439 = vpop.trf.xlu0
      %v2440 = vpop.trf.xlu0
      %v2441 = vpop.trf.xlu0
      %v2442 = vpop.trf.xlu0
      %v2443 = vpop.trf.xlu0
      %v2444 = vpop.trf.xlu0
      %v2445 = vpop.trf.xlu0
      %v2446 = vpop.trf.xlu0
      %v2447 = vpop.trf.xlu0
      %v2448 = vpop.trf.xlu0
      %v2449 = vpop.trf.xlu0
      %v2450 = vpop.trf.xlu0
      %v2451 = vpop.trf.xlu0
      %v2452 = vpop.trf.xlu0
      %v2453 = vpop.trf.xlu0
      %2454 = vxpose.xlu0.b32.start [1/16] %v2183, 128
      %2455 = vxpose.xlu0.b32.cont [2/16] %v2186, 128
      %2456 = vxpose.xlu0.b32.cont [3/16] %v2189, 128
      %2457 = vxpose.xlu0.b32.cont [4/16] %v2192, 128
      %2458 = vxpose.xlu0.b32.cont [5/16] %v2195, 128
      %2459 = vxpose.xlu0.b32.cont [6/16] %v2198, 128
      %2460 = vxpose.xlu0.b32.cont [7/16] %v2201, 128
      %2461 = vxpose.xlu0.b32.cont [8/16] %v2204, 128
      %2462 = vxpose.xlu0.b32.cont [9/16] %v2207, 128
      %2463 = vxpose.xlu0.b32.cont [10/16] %v2210, 128
      %2464 = vxpose.xlu0.b32.cont [11/16] %v2213, 128
      %2465 = vxpose.xlu0.b32.cont [12/16] %v2216, 128
      %2466 = vxpose.xlu0.b32.cont [13/16] %v2219, 128
      %2467 = vxpose.xlu0.b32.cont [14/16] %v2222, 128
      %2468 = vxpose.xlu0.b32.cont [15/16] %v2225, 128
      %2469 = vxpose.xlu0.b32.end [16/16] %v2228, 128
      %v2470 = vpop.trf.xlu0
      %v2471 = vpop.trf.xlu0
      %v2472 = vpop.trf.xlu0
      %v2473 = vpop.trf.xlu0
      %v2474 = vpop.trf.xlu0
      %v2475 = vpop.trf.xlu0
      %v2476 = vpop.trf.xlu0
      %v2477 = vpop.trf.xlu0
      %v2478 = vpop.trf.xlu0
      %v2479 = vpop.trf.xlu0
      %v2480 = vpop.trf.xlu0
      %v2481 = vpop.trf.xlu0
      %v2482 = vpop.trf.xlu0
      %v2483 = vpop.trf.xlu0
      %v2484 = vpop.trf.xlu0
      %v2485 = vpop.trf.xlu0
      %v2486 = vrot.slane %v2310, 4
      %v2487 = vsel %vm845, %v2486, %v2246
      %v2488 = vrot.slane %v2246, 4
      %v2489 = vsel %vm845, %v2310, %v2488
      %v2491 = vunpack.c.l.s4 1983009808
      %v2492 = vunpack.c.0.s8 %v2491
      %v2493 = vperm.slane %v2487, %v2492
      %v2495 = vunpack.c.l.s4 1983009808
      %v2496 = vunpack.c.0.s8 %v2495
      %v2497 = vperm.slane %v2489, %v2496
      %v2498 = vrot.slane %v2342, 4
      %v2499 = vsel %vm845, %v2498, %v2278
      %v2500 = vrot.slane %v2278, 4
      %v2501 = vsel %vm845, %v2342, %v2500
      %v2503 = vunpack.c.l.s4 1983009808
      %v2504 = vunpack.c.0.s8 %v2503
      %v2505 = vperm.slane %v2499, %v2504
      %v2507 = vunpack.c.l.s4 1983009808
      %v2508 = vunpack.c.0.s8 %v2507
      %v2509 = vperm.slane %v2501, %v2508
      %v2510 = vrot.slane %v2438, 4
      %v2511 = vsel %vm845, %v2510, %v2374
      %v2512 = vrot.slane %v2374, 4
      %v2513 = vsel %vm845, %v2438, %v2512
      %v2515 = vunpack.c.l.s4 1983009808
      %v2516 = vunpack.c.0.s8 %v2515
      %v2517 = vperm.slane %v2511, %v2516
      %v2519 = vunpack.c.l.s4 1983009808
      %v2520 = vunpack.c.0.s8 %v2519
      %v2521 = vperm.slane %v2513, %v2520
      %v2522 = vrot.slane %v2470, 4
      %v2523 = vsel %vm845, %v2522, %v2406
      %v2524 = vrot.slane %v2406, 4
      %v2525 = vsel %vm845, %v2470, %v2524
      %v2527 = vunpack.c.l.s4 1983009808
      %v2528 = vunpack.c.0.s8 %v2527
      %v2529 = vperm.slane %v2523, %v2528
      %v2531 = vunpack.c.l.s4 1983009808
      %v2532 = vunpack.c.0.s8 %v2531
      %v2533 = vperm.slane %v2525, %v2532
      %v2534 = vrot.slane %v2505, 4
      %v2535 = vsel %vm845, %v2534, %v2493
      %v2536 = vrot.slane %v2493, 4
      %v2537 = vsel %vm845, %v2505, %v2536
      %v2539 = vunpack.c.l.s4 1934713408
      %v2540 = vunpack.c.0.s8 %v2539
      %v2541 = vperm.slane %v2535, %v2540
      %v2543 = vunpack.c.l.s4 1934713408
      %v2544 = vunpack.c.0.s8 %v2543
      %v2545 = vperm.slane %v2537, %v2544
      %v2546 = vrot.slane %v2509, 4
      %v2547 = vsel %vm845, %v2546, %v2497
      %v2548 = vrot.slane %v2497, 4
      %v2549 = vsel %vm845, %v2509, %v2548
      %v2551 = vunpack.c.l.s4 1934713408
      %v2552 = vunpack.c.0.s8 %v2551
      %v2553 = vperm.slane %v2547, %v2552
      %v2555 = vunpack.c.l.s4 1934713408
      %v2556 = vunpack.c.0.s8 %v2555
      %v2557 = vperm.slane %v2549, %v2556
      %v2558 = vrot.slane %v2529, 4
      %v2559 = vsel %vm845, %v2558, %v2517
      %v2560 = vrot.slane %v2517, 4
      %v2561 = vsel %vm845, %v2529, %v2560
      %v2563 = vunpack.c.l.s4 1934713408
      %v2564 = vunpack.c.0.s8 %v2563
      %v2565 = vperm.slane %v2559, %v2564
      %v2567 = vunpack.c.l.s4 1934713408
      %v2568 = vunpack.c.0.s8 %v2567
      %v2569 = vperm.slane %v2561, %v2568
      %v2570 = vrot.slane %v2533, 4
      %v2571 = vsel %vm845, %v2570, %v2521
      %v2572 = vrot.slane %v2521, 4
      %v2573 = vsel %vm845, %v2533, %v2572
      %v2575 = vunpack.c.l.s4 1934713408
      %v2576 = vunpack.c.0.s8 %v2575
      %v2577 = vperm.slane %v2571, %v2576
      %v2579 = vunpack.c.l.s4 1934713408
      %v2580 = vunpack.c.0.s8 %v2579
      %v2581 = vperm.slane %v2573, %v2580
      %v2582 = vrot.slane %v2565, 4
      %v2583 = vsel %vm845, %v2582, %v2541
      %v2584 = vrot.slane %v2541, 4
      %v2585 = vsel %vm845, %v2565, %v2584
      %v2586 = vrot.slane %v2569, 4
      %v2587 = vsel %vm845, %v2586, %v2545
      %v2588 = vrot.slane %v2545, 4
      %v2589 = vsel %vm845, %v2569, %v2588
      %v2590 = vrot.slane %v2577, 4
      %v2591 = vsel %vm845, %v2590, %v2553
      %v2592 = vrot.slane %v2553, 4
      %v2593 = vsel %vm845, %v2577, %v2592
      %v2594 = vrot.slane %v2581, 4
      %v2595 = vsel %vm845, %v2594, %v2557
      %v2596 = vrot.slane %v2557, 4
      %v2597 = vsel %vm845, %v2581, %v2596
      %2598 = vst [vmem:[#allocation3] sm:$0xff] %v2583
      %2599 = vst [vmem:[#allocation3 + $0x8] sm:$0xff] %v2585
      %2600 = vst [vmem:[#allocation3 + $0x10] sm:$0xff] %v2587
      %2601 = vst [vmem:[#allocation3 + $0x18] sm:$0xff] %v2589
      %2602 = vst [vmem:[#allocation3 + $0x20] sm:$0xff] %v2591
      %2603 = vst [vmem:[#allocation3 + $0x28] sm:$0xff] %v2593
      %2604 = vst [vmem:[#allocation3 + $0x30] sm:$0xff] %v2595
      %2605 = vst [vmem:[#allocation3 + $0x38] sm:$0xff] %v2597
      %v2606 = vlaneseq
      %v2607 = vand.u32 %v2606, 127
      %vm2608 = vcmp.ge.s32.totalorder %v2607, 1
      %v2609 = vsel %vm2608, 0.0, -1e+30
      %v2610 = vld [vmem:[%s311] sm:$0xff]
      %vm2611 = vcmp.gt.f32.partialorder %v2610, 0.5
      %v2612 = vsel %vm2611, 0.0, -1e+30
      %v2613 = vld [vmem:[%s319] sm:$0xff]
      %2614 = vset.pattern.permute.xlu0 0
      %2615 = vperm.xlu0 %2614, %v2613
      %v2616 = vpop.permute.xlu0 %2615
      %p2617 = scmp.eq.s32.totalorder %s21, 0
      // Predicated region
      $region41: #{tpu_custom_call.1} parent=39 // pred_check
        %p2618 = pneg %p2617
      $region42: #{tpu_custom_call.1} parent=39 // pred_check_branch
        %2620 = sbr.rel (%p2618) target = $region44
      $region43: #{tpu_custom_call.1} parent=39 // pred_region
        %vm2621 = vcmp.le.s32.totalorder %v2607, 1
        %v2622 = vld [vmem:[#allocation3] sm:$0xff]
        %v2623 = vsel %vm2621, %v2622, -1e+30
        %2624 = vst [vmem:[#allocation2] sm:$0xff] %v2623
      $region44: #{tpu_custom_call.1} parent=39 // pred_fallthru
        _
      %s2625 = smul.u32 %s21, 8
      %v2626 = vld [vmem:[#allocation2] sm:$0xff]
      %2627 = vrot.lane.b32.xlu0 %v2626, 1
      %v2628 = vpop.permute.xlu0 %2627
      %v2629 = vadd.f32 %v2628, %v2609
      %2630 = vrot.lane.b32.xlu0 %v2626, 2
      %v2631 = vpop.permute.xlu0 %2630
      %v2632 = vadd.f32 %v2631, %v2612
      %v2633 = vmax.f32 %v2626, %v2629
      %v2634 = vmax.f32 %v2633, %v2632
      %v2635 = vsub.f32 %v2626, %v2634
      %v2636 = vmul.f32 %v2635, 1.442695
      %v2637 = vpow.pop %v2636
      %v2638 = vsub.f32 %v2629, %v2634
      %v2639 = vmul.f32 %v2638, 1.442695
      %v2640 = vpow.pop %v2639
      %v2641 = vadd.f32 %v2637, %v2640
      %v2642 = vsub.f32 %v2632, %v2634
      %v2643 = vmul.f32 %v2642, 1.442695
      %v2644 = vpow.pop %v2643
      %v2645 = vadd.f32 %v2641, %v2644
      %v2646 = vlog2.pop %v2645
      %v2647 = vmul.f32 %v2646, 0.6931472
      %v2648 = vadd.f32 %v2634, %v2647
      %v2649 = vld [vmem:[#allocation3] sm:$0xff]
      %v2650 = vadd.f32 %v2648, %v2649
      %p2651 = scmp.ge.s32.totalorder %s2625, 1
      %v2652 = vstv %s2625
      %vm2653 = vcmp.lt.s32.totalorder %v2652, %v2616
      %s2654 = scalar_select %p2651, 1, 0
      %v2655 = vstv %s2654
      %vm2656 = vcmp.eq.s32.totalorder %v2655, 1
      %vm2657 = vmand %vm2656, %vm2653
      %v2658 = vsel %vm2657, %v2650, %v2626
      %2659 = vrot.lane.b32.xlu0 %v2658, 1
      %v2660 = vpop.permute.xlu0 %2659
      %v2661 = vadd.f32 %v2660, %v2609
      %2662 = vrot.lane.b32.xlu0 %v2658, 2
      %v2663 = vpop.permute.xlu0 %2662
      %v2664 = vadd.f32 %v2663, %v2612
      %v2665 = vmax.f32 %v2658, %v2661
      %v2666 = vmax.f32 %v2665, %v2664
      %v2667 = vsub.f32 %v2658, %v2666
      %v2668 = vmul.f32 %v2667, 1.442695
      %v2669 = vpow.pop %v2668
      %v2670 = vsub.f32 %v2661, %v2666
      %v2671 = vmul.f32 %v2670, 1.442695
      %v2672 = vpow.pop %v2671
      %v2673 = vadd.f32 %v2669, %v2672
      %v2674 = vsub.f32 %v2664, %v2666
      %v2675 = vmul.f32 %v2674, 1.442695
      %v2676 = vpow.pop %v2675
      %v2677 = vadd.f32 %v2673, %v2676
      %v2678 = vlog2.pop %v2677
      %v2679 = vmul.f32 %v2678, 0.6931472
      %v2680 = vadd.f32 %v2666, %v2679
      %s2681 = scalar_lea.vmem [#allocation3], 8
      %v2682 = vld [vmem:[%s2681] sm:$0xff]
      %v2683 = vadd.f32 %v2680, %v2682
      %s2684 = sadd.s32 %s2625, 1
      %p2685 = scmp.ge.s32.totalorder %s2684, 1
      %v2686 = vstv %s2684
      %vm2687 = vcmp.lt.s32.totalorder %v2686, %v2616
      %s2688 = scalar_select %p2685, 1, 0
      %v2689 = vstv %s2688
      %vm2690 = vcmp.eq.s32.totalorder %v2689, 1
      %vm2691 = vmand %vm2690, %vm2687
      %v2692 = vsel %vm2691, %v2683, %v2658
      %2693 = vrot.lane.b32.xlu0 %v2692, 1
      %v2694 = vpop.permute.xlu0 %2693
      %v2695 = vadd.f32 %v2694, %v2609
      %2696 = vrot.lane.b32.xlu0 %v2692, 2
      %v2697 = vpop.permute.xlu0 %2696
      %v2698 = vadd.f32 %v2697, %v2612
      %v2699 = vmax.f32 %v2692, %v2695
      %v2700 = vmax.f32 %v2699, %v2698
      %v2701 = vsub.f32 %v2692, %v2700
      %v2702 = vmul.f32 %v2701, 1.442695
      %v2703 = vpow.pop %v2702
      %v2704 = vsub.f32 %v2695, %v2700
      %v2705 = vmul.f32 %v2704, 1.442695
      %v2706 = vpow.pop %v2705
      %v2707 = vadd.f32 %v2703, %v2706
      %v2708 = vsub.f32 %v2698, %v2700
      %v2709 = vmul.f32 %v2708, 1.442695
      %v2710 = vpow.pop %v2709
      %v2711 = vadd.f32 %v2707, %v2710
      %v2712 = vlog2.pop %v2711
      %v2713 = vmul.f32 %v2712, 0.6931472
      %v2714 = vadd.f32 %v2700, %v2713
      %s2715 = scalar_lea.vmem [#allocation3], 16
      %v2716 = vld [vmem:[%s2715] sm:$0xff]
      %v2717 = vadd.f32 %v2714, %v2716
      %s2718 = sadd.s32 %s2625, 2
      %p2719 = scmp.ge.s32.totalorder %s2718, 1
      %v2720 = vstv %s2718
      %vm2721 = vcmp.lt.s32.totalorder %v2720, %v2616
      %s2722 = scalar_select %p2719, 1, 0
      %v2723 = vstv %s2722
      %vm2724 = vcmp.eq.s32.totalorder %v2723, 1
      %vm2725 = vmand %vm2724, %vm2721
      %v2726 = vsel %vm2725, %v2717, %v2692
      %2727 = vrot.lane.b32.xlu0 %v2726, 1
      %v2728 = vpop.permute.xlu0 %2727
      %v2729 = vadd.f32 %v2728, %v2609
      %2730 = vrot.lane.b32.xlu0 %v2726, 2
      %v2731 = vpop.permute.xlu0 %2730
      %v2732 = vadd.f32 %v2731, %v2612
      %v2733 = vmax.f32 %v2726, %v2729
      %v2734 = vmax.f32 %v2733, %v2732
      %v2735 = vsub.f32 %v2726, %v2734
      %v2736 = vmul.f32 %v2735, 1.442695
      %v2737 = vpow.pop %v2736
      %v2738 = vsub.f32 %v2729, %v2734
      %v2739 = vmul.f32 %v2738, 1.442695
      %v2740 = vpow.pop %v2739
      %v2741 = vadd.f32 %v2737, %v2740
      %v2742 = vsub.f32 %v2732, %v2734
      %v2743 = vmul.f32 %v2742, 1.442695
      %v2744 = vpow.pop %v2743
      %v2745 = vadd.f32 %v2741, %v2744
      %v2746 = vlog2.pop %v2745
      %v2747 = vmul.f32 %v2746, 0.6931472
      %v2748 = vadd.f32 %v2734, %v2747
      %s2749 = scalar_lea.vmem [#allocation3], 24
      %v2750 = vld [vmem:[%s2749] sm:$0xff]
      %v2751 = vadd.f32 %v2748, %v2750
      %s2752 = sadd.s32 %s2625, 3
      %p2753 = scmp.ge.s32.totalorder %s2752, 1
      %v2754 = vstv %s2752
      %vm2755 = vcmp.lt.s32.totalorder %v2754, %v2616
      %s2756 = scalar_select %p2753, 1, 0
      %v2757 = vstv %s2756
      %vm2758 = vcmp.eq.s32.totalorder %v2757, 1
      %vm2759 = vmand %vm2758, %vm2755
      %v2760 = vsel %vm2759, %v2751, %v2726
      %2761 = vrot.lane.b32.xlu0 %v2760, 1
      %v2762 = vpop.permute.xlu0 %2761
      %v2763 = vadd.f32 %v2762, %v2609
      %2764 = vrot.lane.b32.xlu0 %v2760, 2
      %v2765 = vpop.permute.xlu0 %2764
      %v2766 = vadd.f32 %v2765, %v2612
      %v2767 = vmax.f32 %v2760, %v2763
      %v2768 = vmax.f32 %v2767, %v2766
      %v2769 = vsub.f32 %v2760, %v2768
      %v2770 = vmul.f32 %v2769, 1.442695
      %v2771 = vpow.pop %v2770
      %v2772 = vsub.f32 %v2763, %v2768
      %v2773 = vmul.f32 %v2772, 1.442695
      %v2774 = vpow.pop %v2773
      %v2775 = vadd.f32 %v2771, %v2774
      %v2776 = vsub.f32 %v2766, %v2768
      %v2777 = vmul.f32 %v2776, 1.442695
      %v2778 = vpow.pop %v2777
      %v2779 = vadd.f32 %v2775, %v2778
      %v2780 = vlog2.pop %v2779
      %v2781 = vmul.f32 %v2780, 0.6931472
      %v2782 = vadd.f32 %v2768, %v2781
      %s2783 = scalar_lea.vmem [#allocation3], 32
      %v2784 = vld [vmem:[%s2783] sm:$0xff]
      %v2785 = vadd.f32 %v2782, %v2784
      %s2786 = sadd.s32 %s2625, 4
      %p2787 = scmp.ge.s32.totalorder %s2786, 1
      %v2788 = vstv %s2786
      %vm2789 = vcmp.lt.s32.totalorder %v2788, %v2616
      %s2790 = scalar_select %p2787, 1, 0
      %v2791 = vstv %s2790
      %vm2792 = vcmp.eq.s32.totalorder %v2791, 1
      %vm2793 = vmand %vm2792, %vm2789
      %v2794 = vsel %vm2793, %v2785, %v2760
      %2795 = vrot.lane.b32.xlu0 %v2794, 1
      %v2796 = vpop.permute.xlu0 %2795
      %v2797 = vadd.f32 %v2796, %v2609
      %2798 = vrot.lane.b32.xlu0 %v2794, 2
      %v2799 = vpop.permute.xlu0 %2798
      %v2800 = vadd.f32 %v2799, %v2612
      %v2801 = vmax.f32 %v2794, %v2797
      %v2802 = vmax.f32 %v2801, %v2800
      %v2803 = vsub.f32 %v2794, %v2802
      %v2804 = vmul.f32 %v2803, 1.442695
      %v2805 = vpow.pop %v2804
      %v2806 = vsub.f32 %v2797, %v2802
      %v2807 = vmul.f32 %v2806, 1.442695
      %v2808 = vpow.pop %v2807
      %v2809 = vadd.f32 %v2805, %v2808
      %v2810 = vsub.f32 %v2800, %v2802
      %v2811 = vmul.f32 %v2810, 1.442695
      %v2812 = vpow.pop %v2811
      %v2813 = vadd.f32 %v2809, %v2812
      %v2814 = vlog2.pop %v2813
      %v2815 = vmul.f32 %v2814, 0.6931472
      %v2816 = vadd.f32 %v2802, %v2815
      %s2817 = scalar_lea.vmem [#allocation3], 40
      %v2818 = vld [vmem:[%s2817] sm:$0xff]
      %v2819 = vadd.f32 %v2816, %v2818
      %s2820 = sadd.s32 %s2625, 5
      %p2821 = scmp.ge.s32.totalorder %s2820, 1
      %v2822 = vstv %s2820
      %vm2823 = vcmp.lt.s32.totalorder %v2822, %v2616
      %s2824 = scalar_select %p2821, 1, 0
      %v2825 = vstv %s2824
      %vm2826 = vcmp.eq.s32.totalorder %v2825, 1
      %vm2827 = vmand %vm2826, %vm2823
      %v2828 = vsel %vm2827, %v2819, %v2794
      %2829 = vrot.lane.b32.xlu0 %v2828, 1
      %v2830 = vpop.permute.xlu0 %2829
      %v2831 = vadd.f32 %v2830, %v2609
      %2832 = vrot.lane.b32.xlu0 %v2828, 2
      %v2833 = vpop.permute.xlu0 %2832
      %v2834 = vadd.f32 %v2833, %v2612
      %v2835 = vmax.f32 %v2828, %v2831
      %v2836 = vmax.f32 %v2835, %v2834
      %v2837 = vsub.f32 %v2828, %v2836
      %v2838 = vmul.f32 %v2837, 1.442695
      %v2839 = vpow.pop %v2838
      %v2840 = vsub.f32 %v2831, %v2836
      %v2841 = vmul.f32 %v2840, 1.442695
      %v2842 = vpow.pop %v2841
      %v2843 = vadd.f32 %v2839, %v2842
      %v2844 = vsub.f32 %v2834, %v2836
      %v2845 = vmul.f32 %v2844, 1.442695
      %v2846 = vpow.pop %v2845
      %v2847 = vadd.f32 %v2843, %v2846
      %v2848 = vlog2.pop %v2847
      %v2849 = vmul.f32 %v2848, 0.6931472
      %v2850 = vadd.f32 %v2836, %v2849
      %s2851 = scalar_lea.vmem [#allocation3], 48
      %v2852 = vld [vmem:[%s2851] sm:$0xff]
      %v2853 = vadd.f32 %v2850, %v2852
      %s2854 = sadd.s32 %s2625, 6
      %p2855 = scmp.ge.s32.totalorder %s2854, 1
      %v2856 = vstv %s2854
      %vm2857 = vcmp.lt.s32.totalorder %v2856, %v2616
      %s2858 = scalar_select %p2855, 1, 0
      %v2859 = vstv %s2858
      %vm2860 = vcmp.eq.s32.totalorder %v2859, 1
      %vm2861 = vmand %vm2860, %vm2857
      %v2862 = vsel %vm2861, %v2853, %v2828
      %2863 = vrot.lane.b32.xlu0 %v2862, 1
      %v2864 = vpop.permute.xlu0 %2863
      %v2865 = vadd.f32 %v2864, %v2609
      %2866 = vrot.lane.b32.xlu0 %v2862, 2
      %v2867 = vpop.permute.xlu0 %2866
      %v2868 = vadd.f32 %v2867, %v2612
      %v2869 = vmax.f32 %v2862, %v2865
      %v2870 = vmax.f32 %v2869, %v2868
      %v2871 = vsub.f32 %v2862, %v2870
      %v2872 = vmul.f32 %v2871, 1.442695
      %v2873 = vpow.pop %v2872
      %v2874 = vsub.f32 %v2865, %v2870
      %v2875 = vmul.f32 %v2874, 1.442695
      %v2876 = vpow.pop %v2875
      %v2877 = vadd.f32 %v2873, %v2876
      %v2878 = vsub.f32 %v2868, %v2870
      %v2879 = vmul.f32 %v2878, 1.442695
      %v2880 = vpow.pop %v2879
      %v2881 = vadd.f32 %v2877, %v2880
      %v2882 = vlog2.pop %v2881
      %v2883 = vmul.f32 %v2882, 0.6931472
      %v2884 = vadd.f32 %v2870, %v2883
      %s2885 = scalar_lea.vmem [#allocation3], 56
      %v2886 = vld [vmem:[%s2885] sm:$0xff]
      %v2887 = vadd.f32 %v2884, %v2886
      %s2888 = sadd.s32 %s2625, 7
      %p2889 = scmp.ge.s32.totalorder %s2888, 1
      %v2890 = vstv %s2888
      %vm2891 = vcmp.lt.s32.totalorder %v2890, %v2616
      %s2892 = scalar_select %p2889, 1, 0
      %v2893 = vstv %s2892
      %vm2894 = vcmp.eq.s32.totalorder %v2893, 1
      %vm2895 = vmand %vm2894, %vm2891
      %v2896 = vsel %vm2895, %v2887, %v2862
      %2897 = vst [vmem:[#allocation2] sm:$0xff] %v2896
      %p2898 = scmp.eq.s32.totalorder %s21, 1
      // Predicated region
      $region45: #{tpu_custom_call.1} parent=39 // pred_check
        %p2899 = pneg %p2898
      $region46: #{tpu_custom_call.1} parent=39 // pred_check_branch
        %2901 = sbr.rel (%p2899) target = $region48
      $region47: #{tpu_custom_call.1} parent=39 // pred_region
        %v2902 = vld [vmem:[%s315] sm:$0xff]
        %vm2903 = vcmp.gt.f32.partialorder %v2902, 0.5
        %v2904 = vld [vmem:[#allocation2] sm:$0xff]
        %v2905 = vsel %vm2903, %v2904, -1e+30
        %2906 = vmax.xlane.f32.xlu0 %v2905
        %v2907 = vpop.xlane.xlu0 %2906
        %v2908 = vsub.f32 %v2905, %v2907
        %v2909 = vmul.f32 %v2908, 1.442695
        %v2910 = vpow.pop %v2909
        %2911 = vadd.xlane.f32.xlu0 %v2910
        %v2912 = vpop.xlane.xlu0 %2911
        %v2913 = vlog2.pop %v2912
        %v2914 = vmul.f32 %v2913, 0.6931472
        %v2915 = vadd.f32 %v2907, %v2914
        %v2916 = vsub.f32 0.0, %v2915
        %vm2917 = vcmask 7168
        %2918 = vst.msk [vmem:[%s323] sm:$0xff] %vm2917, %v2916
      $region48: #{tpu_custom_call.1} parent=39 // pred_fallthru
        _
      %p2919 = scmp.lt.s32.totalorder %s20, 0
      %s2920 = scalar_select %p2919, %s20, 0
      %s2921 = smul.addr %s2920, 8
      %s2922 = scalar_lea.vmem %s5, %s2921
      // Predicated region
      $region49: #{tpu_custom_call.1} parent=39 // pred_check
        %p2923 = pneg %p178
      $region50: #{tpu_custom_call.1} parent=39 // pred_check_branch
        %2925 = sbr.rel (%p2923) target = $region52
      $region51: #{tpu_custom_call.1} parent=39 // pred_region
        _
      $region52: #{tpu_custom_call.1} parent=39 // pred_fallthru
        _
      // Predicated region
      $region53: #{tpu_custom_call.1} parent=39 // pred_check
        %p2926 = pneg %p178
      $region54: #{tpu_custom_call.1} parent=39 // pred_check_branch
        %2928 = sbr.rel (%p2926) target = $region56
      $region55: #{tpu_custom_call.1} parent=39 // pred_region
        %p2929 = scmp.lt.s32.totalorder %s20, 0
        %s2930 = scalar_select %p2929, %s20, 0
        %s2931 = smul.addr %s2930, 8
        %s2932 = scalar_lea.vmem %s5, %s2931
      $region56: #{tpu_custom_call.1} parent=39 // pred_fallthru
        _
    $region40: #{tpu_custom_call.1} parent=5 // pred_fallthru
      _
    %p2933 = scmp.le.s32.totalorder 2, %s11
    // Predicated region
    $region57: #{tpu_custom_call.1} parent=5 // pred_check
      %p2934 = pneg %p2933
    $region58: #{tpu_custom_call.1} parent=5 // pred_check_branch
      %2936 = sbr.rel (%p2934) target = $region60
    $region59: #{tpu_custom_call.1} parent=5 // pred_region
      %s2937 = ssub.s32 %s11, 2
    $region60: #{tpu_custom_call.1} parent=5 // pred_fallthru
      _
  $region6: #{tpu_custom_call.1} parent=0 // loop_footer
    %s15 = sadd.s32 1, %s11
  $region7: #{tpu_custom_call.1} parent=0 // loop_footer_branch
    %10 = sbr.rel target = $region3
  $region8: #{tpu_custom_call.1} parent=0 // loop_exit
    _

</llo_original>
